<compile_context>
chip_gen: v5e
topology: v5e:2x2
jax: 0.10.0
libtpu: 0.0.40
codegen_flags: <defaults>
</compile_context>

<pallas_src>
import functools
import math

import jax
import jax.numpy as jnp
import numpy as np
from jax import lax
from jax.experimental import pallas as pl
from jax.experimental.pallas import tpu as pltpu

NEG_SLOPE = 0.2                    # LeakyReLU(0.2)
SCALE = 1.0 / math.sqrt(2.0)       # 1 / sqrt(2)
PAD = 128                          # lane-aligned zero halo (>= W + 1 for any tap offset)


def _leaky_relu(x):
    return jnp.maximum(x, NEG_SLOPE * x)


def _disc_block_kernel(xp_ref, w1_ref, b1_ref, w2_ref, b2_ref, wr_ref, br_ref,
                       mask_ref, pool_ref, o_ref, hpad_ref, *, n_batch, img_w, hw):
    """Fused DiscriminatorBlock forward; whole batch in one invocation.

    xp_ref  : (Cin,  PAD + B*HW + PAD)  input, (b,h,w) flattened on lanes, zero halo
    w1_ref  : (9, Cout, Cin)            conv1 3x3 weights per tap (pre-scaled)
    b1_ref  : (Cout, 1)
    w2_ref  : (9, Cout, Cout)           conv2 3x3 weights per tap (pre-scaled)
    b2_ref  : (Cout, 1)
    wr_ref  : (Cout, Cin)               residual 1x1 conv weight (pre-scaled)
    br_ref  : (Cout, 1)
    mask_ref: (9, 1, B*HW)              per-tap validity masks (0 at row / image borders)
    pool_ref: (HW, HW//4)               2x2 average-pooling matrix (entries 0.25)
    o_ref   : (B, Cout, HW//4)
    hpad_ref: (Cout, PAD + B*HW + PAD)  VMEM scratch: zero-padded conv1 activation
    """
    bhw = n_batch * hw
    n_cout = o_ref.shape[1]
    taps = [dy * img_w + dx for dy in (-1, 0, 1) for dx in (-1, 0, 1)]

    # ---- conv1: 3x3, pad 1, as 9 shifted channel-mixing matmuls + bias + LeakyReLU ----
    acc1 = jnp.zeros((n_cout, bhw), jnp.float32)
    for t, d in enumerate(taps):
        xs = xp_ref[:, PAD + d:PAD + d + bhw] * mask_ref[t]          # (Cin, B*HW)
        acc1 = acc1 + jnp.dot(w1_ref[t], xs, preferred_element_type=jnp.float32)
    h1 = _leaky_relu(acc1 + b1_ref[...])                             # (Cout, B*HW)

    # Stage h1 into the zero-padded scratch so conv2 taps are plain static slices too.
    hpad_ref[:, :PAD] = jnp.zeros((n_cout, PAD), jnp.float32)
    hpad_ref[:, PAD + bhw:] = jnp.zeros((n_cout, PAD), jnp.float32)
    hpad_ref[:, PAD:PAD + bhw] = h1

    # ---- conv2: 3x3, pad 1 + bias + LeakyReLU ----
    acc2 = jnp.zeros((n_cout, bhw), jnp.float32)
    for t, d in enumerate(taps):
        hs = hpad_ref[:, PAD + d:PAD + d + bhw] * mask_ref[t]        # (Cout, B*HW)
        acc2 = acc2 + jnp.dot(w2_ref[t], hs, preferred_element_type=jnp.float32)
    h2 = _leaky_relu(acc2 + b2_ref[...])

    # ---- residual 1x1 conv (1x1 conv and average pooling commute, incl. bias) ----
    x_core = xp_ref[:, PAD:PAD + bhw]                                # (Cin, B*HW)
    y = h2 + jnp.dot(wr_ref[...], x_core, preferred_element_type=jnp.float32) + br_ref[...]

    # ---- shared 2x2 average pool (matmul) + final 1/sqrt(2) scale ----
    for b in range(n_batch):
        chunk = y[:, b * hw:(b + 1) * hw]                            # (Cout, HW)
        pooled = jnp.dot(chunk, pool_ref[...], preferred_element_type=jnp.float32)
        o_ref[b] = (SCALE * pooled).astype(o_ref.dtype)


def _tap_masks(n_batch, h, w):
    """(9, 1, B*HW) float mask: 1 where the 3x3 tap stays inside its own image."""
    m = np.zeros((9, h, w), np.float32)
    t = 0
    for dy in (-1, 0, 1):
        for dx in (-1, 0, 1):
            m[t, max(0, -dy):h - max(0, dy), max(0, -dx):w - max(0, dx)] = 1.0
            t += 1
    m = np.tile(m.reshape(9, 1, h * w), (1, 1, n_batch))
    return jnp.asarray(m)


def _pool_matrix(h, w):
    """(HW, HW/4) matrix implementing AvgPool2d(2, stride=2) on row-major flattened images."""
    h2, w2 = h // 2, w // 2
    p = np.zeros((h * w, h2 * w2), np.float32)
    for i in range(h):
        for j in range(w):
            p[i * w + j, (i // 2) * w2 + (j // 2)] = 0.25
    return jnp.asarray(p)


def discriminator_block_forward(x, params):
    """DiscriminatorBlock forward. x: (B, Cin, H, W) -> (B, Cout, H//2, W//2)."""
    w1, b1 = params["conv1_w"], params["conv1_b"]     # (Cout, Cin, 3, 3), (Cout,)
    w2, b2 = params["conv2_w"], params["conv2_b"]     # (Cout, Cout, 3, 3), (Cout,)
    wr, br = params["res_w"], params["res_b"]         # (Cout, Cin, 1, 1), (Cout,)

    b, cin, h, w = x.shape
    cout = w1.shape[0]
    assert h % 2 == 0 and w % 2 == 0
    hw = h * w
    hw4 = (h // 2) * (w // 2)
    bhw = b * hw

    # Equalized-LR scales (hoisted; O(params) work done once in XLA, not per pixel).
    c1 = 1.0 / math.sqrt(cin * 3 * 3)
    c2 = 1.0 / math.sqrt(cout * 3 * 3)
    cr = 1.0 / math.sqrt(cin * 1 * 1)

    # ---- layout plumbing only (transpose / reshape / pad, no tensor arithmetic) ----
    x2 = jnp.transpose(x.astype(jnp.float32), (1, 0, 2, 3)).reshape(cin, bhw)
    xp = jnp.pad(x2, ((0, 0), (PAD, PAD)))                                  # zero halo

    w1_taps = jnp.transpose(w1.astype(jnp.float32) * c1, (2, 3, 0, 1)).reshape(9, cout, cin)
    w2_taps = jnp.transpose(w2.astype(jnp.float32) * c2, (2, 3, 0, 1)).reshape(9, cout, cout)
    wr2 = (wr.astype(jnp.float32) * cr).reshape(cout, cin)
    b1c = b1.astype(jnp.float32).reshape(cout, 1)
    b2c = b2.astype(jnp.float32).reshape(cout, 1)
    brc = br.astype(jnp.float32).reshape(cout, 1)

    masks = _tap_masks(b, h, w)
    poolmat = _pool_matrix(h, w)

    out = pl.pallas_call(
        functools.partial(_disc_block_kernel, n_batch=b, img_w=w, hw=hw),
        out_shape=jax.ShapeDtypeStruct((b, cout, hw4), jnp.float32),
        scratch_shapes=[pltpu.VMEM((cout, PAD + bhw + PAD), jnp.float32)],
    )(xp, w1_taps, b1c, w2_taps, b2c, wr2, brc, masks, poolmat)

    return out.reshape(b, cout, h // 2, w // 2)


def _ref_forward(x, params):
    """Independent pure-JAX mirror of the (intended) PyTorch module."""
    w1, b1 = params["conv1_w"], params["conv1_b"]
    w2, b2 = params["conv2_w"], params["conv2_b"]
    wr, br = params["res_w"], params["res_b"]
    cin, cout = x.shape[1], w1.shape[0]
    c1 = 1.0 / math.sqrt(cin * 9)
    c2 = 1.0 / math.sqrt(cout * 9)
    cr = 1.0 / math.sqrt(cin)

    def conv(v, wgt, bias, pad):
        y = lax.conv_general_dilated(v, wgt, (1, 1), ((pad, pad), (pad, pad)),
                                     dimension_numbers=("NCHW", "OIHW", "NCHW"))
        return y + bias[None, :, None, None]

    def avgpool2(v):
        bb, cc, hh, ww = v.shape
        return v.reshape(bb, cc, hh // 2, 2, ww // 2, 2).mean(axis=(3, 5))

    def lrelu(v):
        return jnp.where(v >= 0, v, NEG_SLOPE * v)

    res = conv(avgpool2(x), wr * cr, br, 0)
    hmid = lrelu(conv(x, w1 * c1, b1, 1))
    hmid = lrelu(conv(hmid, w2 * c2, b2, 1))
    hmid = avgpool2(hmid)
    return SCALE * (hmid + res)


if __name__ == "__main__":
    key = jax.random.PRNGKey(0)
    k1, k2, k3, k4, k5, k6, k7 = jax.random.split(key, 7)

    B, C_IN, C_OUT, H, W = 2, 4, 8, 16, 16
    params = {
        "conv1_w": jax.random.normal(k1, (C_OUT, C_IN, 3, 3), jnp.float32),
        "conv1_b": jax.random.normal(k2, (C_OUT,), jnp.float32),
        "conv2_w": jax.random.normal(k3, (C_OUT, C_OUT, 3, 3), jnp.float32),
        "conv2_b": jax.random.normal(k4, (C_OUT,), jnp.float32),
        "res_w": jax.random.normal(k5, (C_OUT, C_IN, 1, 1), jnp.float32),
        "res_b": jax.random.normal(k6, (C_OUT,), jnp.float32),
    }
    x = jax.random.normal(k7, (B, C_IN, H, W), jnp.float32)

    out = discriminator_block_forward(x, params)
    jax.block_until_ready(out)
    assert out.shape == (B, C_OUT, H // 2, W // 2) and out.dtype == jnp.float32

    ref = _ref_forward(x, params)
    err = jnp.max(jnp.abs(out - ref))
    assert jnp.allclose(out, ref, atol=1e-4, rtol=1e-4), f"Pallas kernel mismatch (max err {err})"

    print("KERNEL_OK")
</pallas_src>

<mosaic_0001>
module attributes {stable_mosaic.version = 11 : i64} {
  func.func @_disc_block_kernel(%arg0: memref<4x768xf32, #tpu.memory_space<vmem>>, %arg1: memref<9x8x4xf32, #tpu.memory_space<vmem>>, %arg2: memref<8x1xf32, #tpu.memory_space<vmem>>, %arg3: memref<9x8x8xf32, #tpu.memory_space<vmem>>, %arg4: memref<8x1xf32, #tpu.memory_space<vmem>>, %arg5: memref<8x4xf32, #tpu.memory_space<vmem>>, %arg6: memref<8x1xf32, #tpu.memory_space<vmem>>, %arg7: memref<9x1x512xf32, #tpu.memory_space<vmem>>, %arg8: memref<256x64xf32, #tpu.memory_space<vmem>>, %arg9: memref<2x8x64xf32, #tpu.memory_space<vmem>>, %arg10: memref<8x768xf32, #tpu.memory_space<vmem>>) attributes {dimension_semantics = [], scalar_prefetch = 0 : i64, scratch_operands = 1 : i64, tpu.core_type = #tpu.core_type<tc>} {
    %cst = arith.constant 0.000000e+00 : f32
    %0 = vector.broadcast %cst : f32 to vector<8x512xf32>
    %c0 = arith.constant 0 : index
    %c111 = arith.constant 111 : index
    %1 = vector.load %arg0[%c0, %c111] : memref<4x768xf32, #tpu.memory_space<vmem>>, vector<4x512xf32>
    %c0_0 = arith.constant 0 : index
    %c0_1 = arith.constant 0 : index
    %c0_2 = arith.constant 0 : index
    %2 = vector.load %arg7[%c0_0, %c0_1, %c0_2] : memref<9x1x512xf32, #tpu.memory_space<vmem>>, vector<1x1x512xf32>
    %3 = vector.shape_cast %2 : vector<1x1x512xf32> to vector<1x512xf32>
    %4 = vector.broadcast %3 : vector<1x512xf32> to vector<4x512xf32>
    %5 = arith.mulf %1, %4 : vector<4x512xf32>
    %c0_3 = arith.constant 0 : index
    %c0_4 = arith.constant 0 : index
    %c0_5 = arith.constant 0 : index
    %6 = vector.load %arg1[%c0_3, %c0_4, %c0_5] : memref<9x8x4xf32, #tpu.memory_space<vmem>>, vector<1x8x4xf32>
    %7 = vector.shape_cast %6 : vector<1x8x4xf32> to vector<8x4xf32>
    %cst_6 = arith.constant dense<0.000000e+00> : vector<8x512xf32>
    %8 = tpu.matmul %7, %5, %cst_6 {dimension_numbers = #tpu.dot_dimension_numbers<[1], [0], [0], [1], [0, 0, 1, 1], [], []>} : vector<8x4xf32>, vector<4x512xf32>, vector<8x512xf32> -> vector<8x512xf32>
    %9 = arith.addf %0, %8 : vector<8x512xf32>
    %c0_7 = arith.constant 0 : index
    %c112 = arith.constant 112 : index
    %10 = vector.load %arg0[%c0_7, %c112] : memref<4x768xf32, #tpu.memory_space<vmem>>, vector<4x512xf32>
    %c1 = arith.constant 1 : index
    %c0_8 = arith.constant 0 : index
    %c0_9 = arith.constant 0 : index
    %11 = vector.load %arg7[%c1, %c0_8, %c0_9] : memref<9x1x512xf32, #tpu.memory_space<vmem>>, vector<1x1x512xf32>
    %12 = vector.shape_cast %11 : vector<1x1x512xf32> to vector<1x512xf32>
    %13 = vector.broadcast %12 : vector<1x512xf32> to vector<4x512xf32>
    %14 = arith.mulf %10, %13 : vector<4x512xf32>
    %c1_10 = arith.constant 1 : index
    %c0_11 = arith.constant 0 : index
    %c0_12 = arith.constant 0 : index
    %15 = vector.load %arg1[%c1_10, %c0_11, %c0_12] : memref<9x8x4xf32, #tpu.memory_space<vmem>>, vector<1x8x4xf32>
    %16 = vector.shape_cast %15 : vector<1x8x4xf32> to vector<8x4xf32>
    %cst_13 = arith.constant dense<0.000000e+00> : vector<8x512xf32>
    %17 = tpu.matmul %16, %14, %cst_13 {dimension_numbers = #tpu.dot_dimension_numbers<[1], [0], [0], [1], [0, 0, 1, 1], [], []>} : vector<8x4xf32>, vector<4x512xf32>, vector<8x512xf32> -> vector<8x512xf32>
    %18 = arith.addf %9, %17 : vector<8x512xf32>
    %c0_14 = arith.constant 0 : index
    %c113 = arith.constant 113 : index
    %19 = vector.load %arg0[%c0_14, %c113] : memref<4x768xf32, #tpu.memory_space<vmem>>, vector<4x512xf32>
    %c2 = arith.constant 2 : index
    %c0_15 = arith.constant 0 : index
    %c0_16 = arith.constant 0 : index
    %20 = vector.load %arg7[%c2, %c0_15, %c0_16] : memref<9x1x512xf32, #tpu.memory_space<vmem>>, vector<1x1x512xf32>
    %21 = vector.shape_cast %20 : vector<1x1x512xf32> to vector<1x512xf32>
    %22 = vector.broadcast %21 : vector<1x512xf32> to vector<4x512xf32>
    %23 = arith.mulf %19, %22 : vector<4x512xf32>
    %c2_17 = arith.constant 2 : index
    %c0_18 = arith.constant 0 : index
    %c0_19 = arith.constant 0 : index
    %24 = vector.load %arg1[%c2_17, %c0_18, %c0_19] : memref<9x8x4xf32, #tpu.memory_space<vmem>>, vector<1x8x4xf32>
    %25 = vector.shape_cast %24 : vector<1x8x4xf32> to vector<8x4xf32>
    %cst_20 = arith.constant dense<0.000000e+00> : vector<8x512xf32>
    %26 = tpu.matmul %25, %23, %cst_20 {dimension_numbers = #tpu.dot_dimension_numbers<[1], [0], [0], [1], [0, 0, 1, 1], [], []>} : vector<8x4xf32>, vector<4x512xf32>, vector<8x512xf32> -> vector<8x512xf32>
    %27 = arith.addf %18, %26 : vector<8x512xf32>
    %c0_21 = arith.constant 0 : index
    %c127 = arith.constant 127 : index
    %28 = vector.load %arg0[%c0_21, %c127] : memref<4x768xf32, #tpu.memory_space<vmem>>, vector<4x512xf32>
    %c3 = arith.constant 3 : index
    %c0_22 = arith.constant 0 : index
    %c0_23 = arith.constant 0 : index
    %29 = vector.load %arg7[%c3, %c0_22, %c0_23] : memref<9x1x512xf32, #tpu.memory_space<vmem>>, vector<1x1x512xf32>
    %30 = vector.shape_cast %29 : vector<1x1x512xf32> to vector<1x512xf32>
    %31 = vector.broadcast %30 : vector<1x512xf32> to vector<4x512xf32>
    %32 = arith.mulf %28, %31 : vector<4x512xf32>
    %c3_24 = arith.constant 3 : index
    %c0_25 = arith.constant 0 : index
    %c0_26 = arith.constant 0 : index
    %33 = vector.load %arg1[%c3_24, %c0_25, %c0_26] : memref<9x8x4xf32, #tpu.memory_space<vmem>>, vector<1x8x4xf32>
    %34 = vector.shape_cast %33 : vector<1x8x4xf32> to vector<8x4xf32>
    %cst_27 = arith.constant dense<0.000000e+00> : vector<8x512xf32>
    %35 = tpu.matmul %34, %32, %cst_27 {dimension_numbers = #tpu.dot_dimension_numbers<[1], [0], [0], [1], [0, 0, 1, 1], [], []>} : vector<8x4xf32>, vector<4x512xf32>, vector<8x512xf32> -> vector<8x512xf32>
    %36 = arith.addf %27, %35 : vector<8x512xf32>
    %c0_28 = arith.constant 0 : index
    %c128 = arith.constant 128 : index
    %37 = vector.load %arg0[%c0_28, %c128] : memref<4x768xf32, #tpu.memory_space<vmem>>, vector<4x512xf32>
    %c4 = arith.constant 4 : index
    %c0_29 = arith.constant 0 : index
    %c0_30 = arith.constant 0 : index
    %38 = vector.load %arg7[%c4, %c0_29, %c0_30] : memref<9x1x512xf32, #tpu.memory_space<vmem>>, vector<1x1x512xf32>
    %39 = vector.shape_cast %38 : vector<1x1x512xf32> to vector<1x512xf32>
    %40 = vector.broadcast %39 : vector<1x512xf32> to vector<4x512xf32>
    %41 = arith.mulf %37, %40 : vector<4x512xf32>
    %c4_31 = arith.constant 4 : index
    %c0_32 = arith.constant 0 : index
    %c0_33 = arith.constant 0 : index
    %42 = vector.load %arg1[%c4_31, %c0_32, %c0_33] : memref<9x8x4xf32, #tpu.memory_space<vmem>>, vector<1x8x4xf32>
    %43 = vector.shape_cast %42 : vector<1x8x4xf32> to vector<8x4xf32>
    %cst_34 = arith.constant dense<0.000000e+00> : vector<8x512xf32>
    %44 = tpu.matmul %43, %41, %cst_34 {dimension_numbers = #tpu.dot_dimension_numbers<[1], [0], [0], [1], [0, 0, 1, 1], [], []>} : vector<8x4xf32>, vector<4x512xf32>, vector<8x512xf32> -> vector<8x512xf32>
    %45 = arith.addf %36, %44 : vector<8x512xf32>
    %c0_35 = arith.constant 0 : index
    %c129 = arith.constant 129 : index
    %46 = vector.load %arg0[%c0_35, %c129] : memref<4x768xf32, #tpu.memory_space<vmem>>, vector<4x512xf32>
    %c5 = arith.constant 5 : index
    %c0_36 = arith.constant 0 : index
    %c0_37 = arith.constant 0 : index
    %47 = vector.load %arg7[%c5, %c0_36, %c0_37] : memref<9x1x512xf32, #tpu.memory_space<vmem>>, vector<1x1x512xf32>
    %48 = vector.shape_cast %47 : vector<1x1x512xf32> to vector<1x512xf32>
    %49 = vector.broadcast %48 : vector<1x512xf32> to vector<4x512xf32>
    %50 = arith.mulf %46, %49 : vector<4x512xf32>
    %c5_38 = arith.constant 5 : index
    %c0_39 = arith.constant 0 : index
    %c0_40 = arith.constant 0 : index
    %51 = vector.load %arg1[%c5_38, %c0_39, %c0_40] : memref<9x8x4xf32, #tpu.memory_space<vmem>>, vector<1x8x4xf32>
    %52 = vector.shape_cast %51 : vector<1x8x4xf32> to vector<8x4xf32>
    %cst_41 = arith.constant dense<0.000000e+00> : vector<8x512xf32>
    %53 = tpu.matmul %52, %50, %cst_41 {dimension_numbers = #tpu.dot_dimension_numbers<[1], [0], [0], [1], [0, 0, 1, 1], [], []>} : vector<8x4xf32>, vector<4x512xf32>, vector<8x512xf32> -> vector<8x512xf32>
    %54 = arith.addf %45, %53 : vector<8x512xf32>
    %c0_42 = arith.constant 0 : index
    %c143 = arith.constant 143 : index
    %55 = vector.load %arg0[%c0_42, %c143] : memref<4x768xf32, #tpu.memory_space<vmem>>, vector<4x512xf32>
    %c6 = arith.constant 6 : index
    %c0_43 = arith.constant 0 : index
    %c0_44 = arith.constant 0 : index
    %56 = vector.load %arg7[%c6, %c0_43, %c0_44] : memref<9x1x512xf32, #tpu.memory_space<vmem>>, vector<1x1x512xf32>
    %57 = vector.shape_cast %56 : vector<1x1x512xf32> to vector<1x512xf32>
    %58 = vector.broadcast %57 : vector<1x512xf32> to vector<4x512xf32>
    %59 = arith.mulf %55, %58 : vector<4x512xf32>
    %c6_45 = arith.constant 6 : index
    %c0_46 = arith.constant 0 : index
    %c0_47 = arith.constant 0 : index
    %60 = vector.load %arg1[%c6_45, %c0_46, %c0_47] : memref<9x8x4xf32, #tpu.memory_space<vmem>>, vector<1x8x4xf32>
    %61 = vector.shape_cast %60 : vector<1x8x4xf32> to vector<8x4xf32>
    %cst_48 = arith.constant dense<0.000000e+00> : vector<8x512xf32>
    %62 = tpu.matmul %61, %59, %cst_48 {dimension_numbers = #tpu.dot_dimension_numbers<[1], [0], [0], [1], [0, 0, 1, 1], [], []>} : vector<8x4xf32>, vector<4x512xf32>, vector<8x512xf32> -> vector<8x512xf32>
    %63 = arith.addf %54, %62 : vector<8x512xf32>
    %c0_49 = arith.constant 0 : index
    %c144 = arith.constant 144 : index
    %64 = vector.load %arg0[%c0_49, %c144] : memref<4x768xf32, #tpu.memory_space<vmem>>, vector<4x512xf32>
    %c7 = arith.constant 7 : index
    %c0_50 = arith.constant 0 : index
    %c0_51 = arith.constant 0 : index
    %65 = vector.load %arg7[%c7, %c0_50, %c0_51] : memref<9x1x512xf32, #tpu.memory_space<vmem>>, vector<1x1x512xf32>
    %66 = vector.shape_cast %65 : vector<1x1x512xf32> to vector<1x512xf32>
    %67 = vector.broadcast %66 : vector<1x512xf32> to vector<4x512xf32>
    %68 = arith.mulf %64, %67 : vector<4x512xf32>
    %c7_52 = arith.constant 7 : index
    %c0_53 = arith.constant 0 : index
    %c0_54 = arith.constant 0 : index
    %69 = vector.load %arg1[%c7_52, %c0_53, %c0_54] : memref<9x8x4xf32, #tpu.memory_space<vmem>>, vector<1x8x4xf32>
    %70 = vector.shape_cast %69 : vector<1x8x4xf32> to vector<8x4xf32>
    %cst_55 = arith.constant dense<0.000000e+00> : vector<8x512xf32>
    %71 = tpu.matmul %70, %68, %cst_55 {dimension_numbers = #tpu.dot_dimension_numbers<[1], [0], [0], [1], [0, 0, 1, 1], [], []>} : vector<8x4xf32>, vector<4x512xf32>, vector<8x512xf32> -> vector<8x512xf32>
    %72 = arith.addf %63, %71 : vector<8x512xf32>
    %c0_56 = arith.constant 0 : index
    %c145 = arith.constant 145 : index
    %73 = vector.load %arg0[%c0_56, %c145] : memref<4x768xf32, #tpu.memory_space<vmem>>, vector<4x512xf32>
    %c8 = arith.constant 8 : index
    %c0_57 = arith.constant 0 : index
    %c0_58 = arith.constant 0 : index
    %74 = vector.load %arg7[%c8, %c0_57, %c0_58] : memref<9x1x512xf32, #tpu.memory_space<vmem>>, vector<1x1x512xf32>
    %75 = vector.shape_cast %74 : vector<1x1x512xf32> to vector<1x512xf32>
    %76 = vector.broadcast %75 : vector<1x512xf32> to vector<4x512xf32>
    %77 = arith.mulf %73, %76 : vector<4x512xf32>
    %c8_59 = arith.constant 8 : index
    %c0_60 = arith.constant 0 : index
    %c0_61 = arith.constant 0 : index
    %78 = vector.load %arg1[%c8_59, %c0_60, %c0_61] : memref<9x8x4xf32, #tpu.memory_space<vmem>>, vector<1x8x4xf32>
    %79 = vector.shape_cast %78 : vector<1x8x4xf32> to vector<8x4xf32>
    %cst_62 = arith.constant dense<0.000000e+00> : vector<8x512xf32>
    %80 = tpu.matmul %79, %77, %cst_62 {dimension_numbers = #tpu.dot_dimension_numbers<[1], [0], [0], [1], [0, 0, 1, 1], [], []>} : vector<8x4xf32>, vector<4x512xf32>, vector<8x512xf32> -> vector<8x512xf32>
    %81 = arith.addf %72, %80 : vector<8x512xf32>
    %c0_63 = arith.constant 0 : index
    %c0_64 = arith.constant 0 : index
    %82 = vector.load %arg2[%c0_63, %c0_64] : memref<8x1xf32, #tpu.memory_space<vmem>>, vector<8x1xf32>
    %83 = vector.broadcast %82 : vector<8x1xf32> to vector<8x512xf32>
    %84 = arith.addf %81, %83 : vector<8x512xf32>
    %cst_65 = arith.constant 2.000000e-01 : f32
    %85 = vector.broadcast %cst_65 : f32 to vector<8x512xf32>
    %86 = arith.mulf %85, %84 : vector<8x512xf32>
    %87 = arith.maximumf %84, %86 : vector<8x512xf32>
    %cst_66 = arith.constant 0.000000e+00 : f32
    %88 = vector.broadcast %cst_66 : f32 to vector<8x128xf32>
    %c0_67 = arith.constant 0 : index
    %c0_68 = arith.constant 0 : index
    %89 = vector.load %arg10[%c0_67, %c0_68] : memref<8x768xf32, #tpu.memory_space<vmem>>, vector<8x128xf32>
    tpu.vector_store %arg10[%c0_67, %c0_68], %88 {strides = array<i32>} : memref<8x768xf32, #tpu.memory_space<vmem>>, vector<8x128xf32>,
    %cst_69 = arith.constant 0.000000e+00 : f32
    %90 = vector.broadcast %cst_69 : f32 to vector<8x128xf32>
    %c0_70 = arith.constant 0 : index
    %c640 = arith.constant 640 : index
    %91 = vector.load %arg10[%c0_70, %c640] : memref<8x768xf32, #tpu.memory_space<vmem>>, vector<8x128xf32>
    tpu.vector_store %arg10[%c0_70, %c640], %90 {strides = array<i32>} : memref<8x768xf32, #tpu.memory_space<vmem>>, vector<8x128xf32>,
    %c0_71 = arith.constant 0 : index
    %c128_72 = arith.constant 128 : index
    %92 = vector.load %arg10[%c0_71, %c128_72] : memref<8x768xf32, #tpu.memory_space<vmem>>, vector<8x512xf32>
    tpu.vector_store %arg10[%c0_71, %c128_72], %87 {strides = array<i32>} : memref<8x768xf32, #tpu.memory_space<vmem>>, vector<8x512xf32>,
    %cst_73 = arith.constant 0.000000e+00 : f32
    %93 = vector.broadcast %cst_73 : f32 to vector<8x512xf32>
    %c0_74 = arith.constant 0 : index
    %c111_75 = arith.constant 111 : index
    %94 = vector.load %arg10[%c0_74, %c111_75] : memref<8x768xf32, #tpu.memory_space<vmem>>, vector<8x512xf32>
    %c0_76 = arith.constant 0 : index
    %c0_77 = arith.constant 0 : index
    %c0_78 = arith.constant 0 : index
    %95 = vector.load %arg7[%c0_76, %c0_77, %c0_78] : memref<9x1x512xf32, #tpu.memory_space<vmem>>, vector<1x1x512xf32>
    %96 = vector.shape_cast %95 : vector<1x1x512xf32> to vector<1x512xf32>
    %97 = vector.broadcast %96 : vector<1x512xf32> to vector<8x512xf32>
    %98 = arith.mulf %94, %97 : vector<8x512xf32>
    %c0_79 = arith.constant 0 : index
    %c0_80 = arith.constant 0 : index
    %c0_81 = arith.constant 0 : index
    %99 = vector.load %arg3[%c0_79, %c0_80, %c0_81] : memref<9x8x8xf32, #tpu.memory_space<vmem>>, vector<1x8x8xf32>
    %100 = vector.shape_cast %99 : vector<1x8x8xf32> to vector<8x8xf32>
    %cst_82 = arith.constant dense<0.000000e+00> : vector<8x512xf32>
    %101 = tpu.matmul %100, %98, %cst_82 {dimension_numbers = #tpu.dot_dimension_numbers<[1], [0], [0], [1], [0, 0, 1, 1], [], []>} : vector<8x8xf32>, vector<8x512xf32>, vector<8x512xf32> -> vector<8x512xf32>
    %102 = arith.addf %93, %101 : vector<8x512xf32>
    %c0_83 = arith.constant 0 : index
    %c112_84 = arith.constant 112 : index
    %103 = vector.load %arg10[%c0_83, %c112_84] : memref<8x768xf32, #tpu.memory_space<vmem>>, vector<8x512xf32>
    %c1_85 = arith.constant 1 : index
    %c0_86 = arith.constant 0 : index
    %c0_87 = arith.constant 0 : index
    %104 = vector.load %arg7[%c1_85, %c0_86, %c0_87] : memref<9x1x512xf32, #tpu.memory_space<vmem>>, vector<1x1x512xf32>
    %105 = vector.shape_cast %104 : vector<1x1x512xf32> to vector<1x512xf32>
    %106 = vector.broadcast %105 : vector<1x512xf32> to vector<8x512xf32>
    %107 = arith.mulf %103, %106 : vector<8x512xf32>
    %c1_88 = arith.constant 1 : index
    %c0_89 = arith.constant 0 : index
    %c0_90 = arith.constant 0 : index
    %108 = vector.load %arg3[%c1_88, %c0_89, %c0_90] : memref<9x8x8xf32, #tpu.memory_space<vmem>>, vector<1x8x8xf32>
    %109 = vector.shape_cast %108 : vector<1x8x8xf32> to vector<8x8xf32>
    %cst_91 = arith.constant dense<0.000000e+00> : vector<8x512xf32>
    %110 = tpu.matmul %109, %107, %cst_91 {dimension_numbers = #tpu.dot_dimension_numbers<[1], [0], [0], [1], [0, 0, 1, 1], [], []>} : vector<8x8xf32>, vector<8x512xf32>, vector<8x512xf32> -> vector<8x512xf32>
    %111 = arith.addf %102, %110 : vector<8x512xf32>
    %c0_92 = arith.constant 0 : index
    %c113_93 = arith.constant 113 : index
    %112 = vector.load %arg10[%c0_92, %c113_93] : memref<8x768xf32, #tpu.memory_space<vmem>>, vector<8x512xf32>
    %c2_94 = arith.constant 2 : index
    %c0_95 = arith.constant 0 : index
    %c0_96 = arith.constant 0 : index
    %113 = vector.load %arg7[%c2_94, %c0_95, %c0_96] : memref<9x1x512xf32, #tpu.memory_space<vmem>>, vector<1x1x512xf32>
    %114 = vector.shape_cast %113 : vector<1x1x512xf32> to vector<1x512xf32>
    %115 = vector.broadcast %114 : vector<1x512xf32> to vector<8x512xf32>
    %116 = arith.mulf %112, %115 : vector<8x512xf32>
    %c2_97 = arith.constant 2 : index
    %c0_98 = arith.constant 0 : index
    %c0_99 = arith.constant 0 : index
    %117 = vector.load %arg3[%c2_97, %c0_98, %c0_99] : memref<9x8x8xf32, #tpu.memory_space<vmem>>, vector<1x8x8xf32>
    %118 = vector.shape_cast %117 : vector<1x8x8xf32> to vector<8x8xf32>
    %cst_100 = arith.constant dense<0.000000e+00> : vector<8x512xf32>
    %119 = tpu.matmul %118, %116, %cst_100 {dimension_numbers = #tpu.dot_dimension_numbers<[1], [0], [0], [1], [0, 0, 1, 1], [], []>} : vector<8x8xf32>, vector<8x512xf32>, vector<8x512xf32> -> vector<8x512xf32>
    %120 = arith.addf %111, %119 : vector<8x512xf32>
    %c0_101 = arith.constant 0 : index
    %c127_102 = arith.constant 127 : index
    %121 = vector.load %arg10[%c0_101, %c127_102] : memref<8x768xf32, #tpu.memory_space<vmem>>, vector<8x512xf32>
    %c3_103 = arith.constant 3 : index
    %c0_104 = arith.constant 0 : index
    %c0_105 = arith.constant 0 : index
    %122 = vector.load %arg7[%c3_103, %c0_104, %c0_105] : memref<9x1x512xf32, #tpu.memory_space<vmem>>, vector<1x1x512xf32>
    %123 = vector.shape_cast %122 : vector<1x1x512xf32> to vector<1x512xf32>
    %124 = vector.broadcast %123 : vector<1x512xf32> to vector<8x512xf32>
    %125 = arith.mulf %121, %124 : vector<8x512xf32>
    %c3_106 = arith.constant 3 : index
    %c0_107 = arith.constant 0 : index
    %c0_108 = arith.constant 0 : index
    %126 = vector.load %arg3[%c3_106, %c0_107, %c0_108] : memref<9x8x8xf32, #tpu.memory_space<vmem>>, vector<1x8x8xf32>
    %127 = vector.shape_cast %126 : vector<1x8x8xf32> to vector<8x8xf32>
    %cst_109 = arith.constant dense<0.000000e+00> : vector<8x512xf32>
    %128 = tpu.matmul %127, %125, %cst_109 {dimension_numbers = #tpu.dot_dimension_numbers<[1], [0], [0], [1], [0, 0, 1, 1], [], []>} : vector<8x8xf32>, vector<8x512xf32>, vector<8x512xf32> -> vector<8x512xf32>
    %129 = arith.addf %120, %128 : vector<8x512xf32>
    %c0_110 = arith.constant 0 : index
    %c128_111 = arith.constant 128 : index
    %130 = vector.load %arg10[%c0_110, %c128_111] : memref<8x768xf32, #tpu.memory_space<vmem>>, vector<8x512xf32>
    %c4_112 = arith.constant 4 : index
    %c0_113 = arith.constant 0 : index
    %c0_114 = arith.constant 0 : index
    %131 = vector.load %arg7[%c4_112, %c0_113, %c0_114] : memref<9x1x512xf32, #tpu.memory_space<vmem>>, vector<1x1x512xf32>
    %132 = vector.shape_cast %131 : vector<1x1x512xf32> to vector<1x512xf32>
    %133 = vector.broadcast %132 : vector<1x512xf32> to vector<8x512xf32>
    %134 = arith.mulf %130, %133 : vector<8x512xf32>
    %c4_115 = arith.constant 4 : index
    %c0_116 = arith.constant 0 : index
    %c0_117 = arith.constant 0 : index
    %135 = vector.load %arg3[%c4_115, %c0_116, %c0_117] : memref<9x8x8xf32, #tpu.memory_space<vmem>>, vector<1x8x8xf32>
    %136 = vector.shape_cast %135 : vector<1x8x8xf32> to vector<8x8xf32>
    %cst_118 = arith.constant dense<0.000000e+00> : vector<8x512xf32>
    %137 = tpu.matmul %136, %134, %cst_118 {dimension_numbers = #tpu.dot_dimension_numbers<[1], [0], [0], [1], [0, 0, 1, 1], [], []>} : vector<8x8xf32>, vector<8x512xf32>, vector<8x512xf32> -> vector<8x512xf32>
    %138 = arith.addf %129, %137 : vector<8x512xf32>
    %c0_119 = arith.constant 0 : index
    %c129_120 = arith.constant 129 : index
    %139 = vector.load %arg10[%c0_119, %c129_120] : memref<8x768xf32, #tpu.memory_space<vmem>>, vector<8x512xf32>
    %c5_121 = arith.constant 5 : index
    %c0_122 = arith.constant 0 : index
    %c0_123 = arith.constant 0 : index
    %140 = vector.load %arg7[%c5_121, %c0_122, %c0_123] : memref<9x1x512xf32, #tpu.memory_space<vmem>>, vector<1x1x512xf32>
    %141 = vector.shape_cast %140 : vector<1x1x512xf32> to vector<1x512xf32>
    %142 = vector.broadcast %141 : vector<1x512xf32> to vector<8x512xf32>
    %143 = arith.mulf %139, %142 : vector<8x512xf32>
    %c5_124 = arith.constant 5 : index
    %c0_125 = arith.constant 0 : index
    %c0_126 = arith.constant 0 : index
    %144 = vector.load %arg3[%c5_124, %c0_125, %c0_126] : memref<9x8x8xf32, #tpu.memory_space<vmem>>, vector<1x8x8xf32>
    %145 = vector.shape_cast %144 : vector<1x8x8xf32> to vector<8x8xf32>
    %cst_127 = arith.constant dense<0.000000e+00> : vector<8x512xf32>
    %146 = tpu.matmul %145, %143, %cst_127 {dimension_numbers = #tpu.dot_dimension_numbers<[1], [0], [0], [1], [0, 0, 1, 1], [], []>} : vector<8x8xf32>, vector<8x512xf32>, vector<8x512xf32> -> vector<8x512xf32>
    %147 = arith.addf %138, %146 : vector<8x512xf32>
    %c0_128 = arith.constant 0 : index
    %c143_129 = arith.constant 143 : index
    %148 = vector.load %arg10[%c0_128, %c143_129] : memref<8x768xf32, #tpu.memory_space<vmem>>, vector<8x512xf32>
    %c6_130 = arith.constant 6 : index
    %c0_131 = arith.constant 0 : index
    %c0_132 = arith.constant 0 : index
    %149 = vector.load %arg7[%c6_130, %c0_131, %c0_132] : memref<9x1x512xf32, #tpu.memory_space<vmem>>, vector<1x1x512xf32>
    %150 = vector.shape_cast %149 : vector<1x1x512xf32> to vector<1x512xf32>
    %151 = vector.broadcast %150 : vector<1x512xf32> to vector<8x512xf32>
    %152 = arith.mulf %148, %151 : vector<8x512xf32>
    %c6_133 = arith.constant 6 : index
    %c0_134 = arith.constant 0 : index
    %c0_135 = arith.constant 0 : index
    %153 = vector.load %arg3[%c6_133, %c0_134, %c0_135] : memref<9x8x8xf32, #tpu.memory_space<vmem>>, vector<1x8x8xf32>
    %154 = vector.shape_cast %153 : vector<1x8x8xf32> to vector<8x8xf32>
    %cst_136 = arith.constant dense<0.000000e+00> : vector<8x512xf32>
    %155 = tpu.matmul %154, %152, %cst_136 {dimension_numbers = #tpu.dot_dimension_numbers<[1], [0], [0], [1], [0, 0, 1, 1], [], []>} : vector<8x8xf32>, vector<8x512xf32>, vector<8x512xf32> -> vector<8x512xf32>
    %156 = arith.addf %147, %155 : vector<8x512xf32>
    %c0_137 = arith.constant 0 : index
    %c144_138 = arith.constant 144 : index
    %157 = vector.load %arg10[%c0_137, %c144_138] : memref<8x768xf32, #tpu.memory_space<vmem>>, vector<8x512xf32>
    %c7_139 = arith.constant 7 : index
    %c0_140 = arith.constant 0 : index
    %c0_141 = arith.constant 0 : index
    %158 = vector.load %arg7[%c7_139, %c0_140, %c0_141] : memref<9x1x512xf32, #tpu.memory_space<vmem>>, vector<1x1x512xf32>
    %159 = vector.shape_cast %158 : vector<1x1x512xf32> to vector<1x512xf32>
    %160 = vector.broadcast %159 : vector<1x512xf32> to vector<8x512xf32>
    %161 = arith.mulf %157, %160 : vector<8x512xf32>
    %c7_142 = arith.constant 7 : index
    %c0_143 = arith.constant 0 : index
    %c0_144 = arith.constant 0 : index
    %162 = vector.load %arg3[%c7_142, %c0_143, %c0_144] : memref<9x8x8xf32, #tpu.memory_space<vmem>>, vector<1x8x8xf32>
    %163 = vector.shape_cast %162 : vector<1x8x8xf32> to vector<8x8xf32>
    %cst_145 = arith.constant dense<0.000000e+00> : vector<8x512xf32>
    %164 = tpu.matmul %163, %161, %cst_145 {dimension_numbers = #tpu.dot_dimension_numbers<[1], [0], [0], [1], [0, 0, 1, 1], [], []>} : vector<8x8xf32>, vector<8x512xf32>, vector<8x512xf32> -> vector<8x512xf32>
    %165 = arith.addf %156, %164 : vector<8x512xf32>
    %c0_146 = arith.constant 0 : index
    %c145_147 = arith.constant 145 : index
    %166 = vector.load %arg10[%c0_146, %c145_147] : memref<8x768xf32, #tpu.memory_space<vmem>>, vector<8x512xf32>
    %c8_148 = arith.constant 8 : index
    %c0_149 = arith.constant 0 : index
    %c0_150 = arith.constant 0 : index
    %167 = vector.load %arg7[%c8_148, %c0_149, %c0_150] : memref<9x1x512xf32, #tpu.memory_space<vmem>>, vector<1x1x512xf32>
    %168 = vector.shape_cast %167 : vector<1x1x512xf32> to vector<1x512xf32>
    %169 = vector.broadcast %168 : vector<1x512xf32> to vector<8x512xf32>
    %170 = arith.mulf %166, %169 : vector<8x512xf32>
    %c8_151 = arith.constant 8 : index
    %c0_152 = arith.constant 0 : index
    %c0_153 = arith.constant 0 : index
    %171 = vector.load %arg3[%c8_151, %c0_152, %c0_153] : memref<9x8x8xf32, #tpu.memory_space<vmem>>, vector<1x8x8xf32>
    %172 = vector.shape_cast %171 : vector<1x8x8xf32> to vector<8x8xf32>
    %cst_154 = arith.constant dense<0.000000e+00> : vector<8x512xf32>
    %173 = tpu.matmul %172, %170, %cst_154 {dimension_numbers = #tpu.dot_dimension_numbers<[1], [0], [0], [1], [0, 0, 1, 1], [], []>} : vector<8x8xf32>, vector<8x512xf32>, vector<8x512xf32> -> vector<8x512xf32>
    %174 = arith.addf %165, %173 : vector<8x512xf32>
    %c0_155 = arith.constant 0 : index
    %c0_156 = arith.constant 0 : index
    %175 = vector.load %arg4[%c0_155, %c0_156] : memref<8x1xf32, #tpu.memory_space<vmem>>, vector<8x1xf32>
    %176 = vector.broadcast %175 : vector<8x1xf32> to vector<8x512xf32>
    %177 = arith.addf %174, %176 : vector<8x512xf32>
    %cst_157 = arith.constant 2.000000e-01 : f32
    %178 = vector.broadcast %cst_157 : f32 to vector<8x512xf32>
    %179 = arith.mulf %178, %177 : vector<8x512xf32>
    %180 = arith.maximumf %177, %179 : vector<8x512xf32>
    %c0_158 = arith.constant 0 : index
    %c128_159 = arith.constant 128 : index
    %181 = vector.load %arg0[%c0_158, %c128_159] : memref<4x768xf32, #tpu.memory_space<vmem>>, vector<4x512xf32>
    %c0_160 = arith.constant 0 : index
    %c0_161 = arith.constant 0 : index
    %182 = vector.load %arg5[%c0_160, %c0_161] : memref<8x4xf32, #tpu.memory_space<vmem>>, vector<8x4xf32>
    %cst_162 = arith.constant dense<0.000000e+00> : vector<8x512xf32>
    %183 = tpu.matmul %182, %181, %cst_162 {dimension_numbers = #tpu.dot_dimension_numbers<[1], [0], [0], [1], [0, 0, 1, 1], [], []>} : vector<8x4xf32>, vector<4x512xf32>, vector<8x512xf32> -> vector<8x512xf32>
    %184 = arith.addf %180, %183 : vector<8x512xf32>
    %c0_163 = arith.constant 0 : index
    %c0_164 = arith.constant 0 : index
    %185 = vector.load %arg6[%c0_163, %c0_164] : memref<8x1xf32, #tpu.memory_space<vmem>>, vector<8x1xf32>
    %186 = vector.broadcast %185 : vector<8x1xf32> to vector<8x512xf32>
    %187 = arith.addf %184, %186 : vector<8x512xf32>
    %188 = vector.extract_strided_slice %187 {offsets = [0, 0], sizes = [8, 256], strides = [1, 1]} : vector<8x512xf32> to vector<8x256xf32>
    %c0_165 = arith.constant 0 : index
    %c0_166 = arith.constant 0 : index
    %189 = vector.load %arg8[%c0_165, %c0_166] : memref<256x64xf32, #tpu.memory_space<vmem>>, vector<256x64xf32>
    %cst_167 = arith.constant dense<0.000000e+00> : vector<8x64xf32>
    %190 = tpu.matmul %188, %189, %cst_167 {dimension_numbers = #tpu.dot_dimension_numbers<[1], [0], [0], [1], [0, 0, 1, 1], [], []>} : vector<8x256xf32>, vector<256x64xf32>, vector<8x64xf32> -> vector<8x64xf32>
    %cst_168 = arith.constant 0.707106769 : f32
    %191 = vector.broadcast %cst_168 : f32 to vector<8x64xf32>
    %192 = arith.mulf %191, %190 : vector<8x64xf32>
    %c0_169 = arith.constant 0 : index
    %c0_170 = arith.constant 0 : index
    %c0_171 = arith.constant 0 : index
    %193 = vector.load %arg9[%c0_169, %c0_170, %c0_171] : memref<2x8x64xf32, #tpu.memory_space<vmem>>, vector<1x8x64xf32>
    %194 = vector.shape_cast %193 : vector<1x8x64xf32> to vector<8x64xf32>
    %195 = vector.shape_cast %192 : vector<8x64xf32> to vector<1x8x64xf32>
    tpu.vector_store %arg9[%c0_169, %c0_170, %c0_171], %195 {strides = array<i32>} : memref<2x8x64xf32, #tpu.memory_space<vmem>>, vector<1x8x64xf32>,
    %196 = vector.extract_strided_slice %187 {offsets = [0, 256], sizes = [8, 256], strides = [1, 1]} : vector<8x512xf32> to vector<8x256xf32>
    %c0_172 = arith.constant 0 : index
    %c0_173 = arith.constant 0 : index
    %197 = vector.load %arg8[%c0_172, %c0_173] : memref<256x64xf32, #tpu.memory_space<vmem>>, vector<256x64xf32>
    %cst_174 = arith.constant dense<0.000000e+00> : vector<8x64xf32>
    %198 = tpu.matmul %196, %197, %cst_174 {dimension_numbers = #tpu.dot_dimension_numbers<[1], [0], [0], [1], [0, 0, 1, 1], [], []>} : vector<8x256xf32>, vector<256x64xf32>, vector<8x64xf32> -> vector<8x64xf32>
    %cst_175 = arith.constant 0.707106769 : f32
    %199 = vector.broadcast %cst_175 : f32 to vector<8x64xf32>
    %200 = arith.mulf %199, %198 : vector<8x64xf32>
    %c1_176 = arith.constant 1 : index
    %c0_177 = arith.constant 0 : index
    %c0_178 = arith.constant 0 : index
    %201 = vector.load %arg9[%c1_176, %c0_177, %c0_178] : memref<2x8x64xf32, #tpu.memory_space<vmem>>, vector<1x8x64xf32>
    %202 = vector.shape_cast %201 : vector<1x8x64xf32> to vector<8x64xf32>
    %203 = vector.shape_cast %200 : vector<8x64xf32> to vector<1x8x64xf32>
    tpu.vector_store %arg9[%c1_176, %c0_177, %c0_178], %203 {strides = array<i32>} : memref<2x8x64xf32, #tpu.memory_space<vmem>>, vector<1x8x64xf32>,
    return
  }
}

</mosaic_0001>

<llo_original>
// kernel: tpu_custom_call.1
$region0: #{tpu_custom_call.1}
  #allocation0 [shape = 'u32[]', space=smem, size = 0x4, offset = 0x4, fixed_abs, tag = 'smem constant byte address 0x4 - core index']
  #allocation1 [shape = 'u32[72,128]{1,0:T(1,128)}', space=vmem, size = 0x9000, scoped, tag = 'internal scratch']
  #allocation2 [shape = 'f32[8,768]{1,0:T(8,128)}', space=vmem, size = 0x6000, scoped, tag = 'scratch operand']
  %s0 = inlined_call_operand.vmem [shape: f32[4,768], index: 0, kind: input, shape index: {}]
  %s1 = inlined_call_operand.vmem [shape: f32[9,8,4], index: 1, kind: input, shape index: {}]
  %s2 = inlined_call_operand.vmem [shape: f32[8,1], index: 2, kind: input, shape index: {}]
  %s3 = inlined_call_operand.vmem [shape: f32[9,8,8], index: 3, kind: input, shape index: {}]
  %s4 = inlined_call_operand.vmem [shape: f32[8,1], index: 4, kind: input, shape index: {}]
  %s5 = inlined_call_operand.vmem [shape: f32[8,4], index: 5, kind: input, shape index: {}]
  %s6 = inlined_call_operand.vmem [shape: f32[8,1], index: 6, kind: input, shape index: {}]
  %s7 = inlined_call_operand.vmem [shape: f32[9,1,512], index: 7, kind: input, shape index: {}]
  %s8 = inlined_call_operand.vmem [shape: f32[256,64], index: 8, kind: input, shape index: {}]
  %s9 = inlined_call_operand.hbm [shape: f32[2,8,64], index: 9, kind: output, shape index: {}]
  %s10 = sld [smem:[#allocation0]]
  $region46: #{tpu_custom_call.1} parent=0
    _
  %s12 = ssub.s32 1, %s10
  %s13 = scalar_select 0, %s12, %s10
  $region1: #{tpu_custom_call.1} parent=0
    #allocation3 [shape = 'u8[8192]{0}', space=vmem, size = 0x2000, scoped, tag = 'output window, operand 0, single buffered']
    #allocation4 [shape = 's32[1]{0}', space=sflag, size = 0x4, scoped, tag = 'scoped memory for tpu_custom_call.1']
    %14 = vsyncpa [#allocation4], 0
    // Predicated region
    $region2: #{tpu_custom_call.1} parent=1 // pred_check
      _
    $region3: #{tpu_custom_call.1} parent=1 // pred_check_branch
      %16 = sbr.rel (0) target = $region5
    $region4: #{tpu_custom_call.1} parent=1 // pred_region
      _
    $region5: #{tpu_custom_call.1} parent=1 // pred_fallthru
      _
    // Predicated region
    $region6: #{tpu_custom_call.1} parent=1 // pred_check
      _
    $region7: #{tpu_custom_call.1} parent=1 // pred_check_branch
      %18 = sbr.rel (0) target = $region9
    $region8: #{tpu_custom_call.1} parent=1 // pred_region
      _
    $region9: #{tpu_custom_call.1} parent=1 // pred_fallthru
      _
    // Predicated region
    $region10: #{tpu_custom_call.1} parent=1 // pred_check
      _
    $region11: #{tpu_custom_call.1} parent=1 // pred_check_branch
      %20 = sbr.rel (0) target = $region13
    $region12: #{tpu_custom_call.1} parent=1 // pred_region
      _
    $region13: #{tpu_custom_call.1} parent=1 // pred_fallthru
      _
    // Predicated region
    $region14: #{tpu_custom_call.1} parent=1 // pred_check
      _
    $region15: #{tpu_custom_call.1} parent=1 // pred_check_branch
      %22 = sbr.rel (0) target = $region17
    $region16: #{tpu_custom_call.1} parent=1 // pred_region
      _
    $region17: #{tpu_custom_call.1} parent=1 // pred_fallthru
      _
    // Predicated region
    $region18: #{tpu_custom_call.1} parent=1 // pred_check
      _
    $region19: #{tpu_custom_call.1} parent=1 // pred_check_branch
      %24 = sbr.rel (0) target = $region21
    $region20: #{tpu_custom_call.1} parent=1 // pred_region
      _
    $region21: #{tpu_custom_call.1} parent=1 // pred_fallthru
      _
    // Predicated region
    $region22: #{tpu_custom_call.1} parent=1 // pred_check
      _
    $region23: #{tpu_custom_call.1} parent=1 // pred_check_branch
      %26 = sbr.rel (0) target = $region25
    $region24: #{tpu_custom_call.1} parent=1 // pred_region
      _
    $region25: #{tpu_custom_call.1} parent=1 // pred_fallthru
      _
    // Predicated region
    $region26: #{tpu_custom_call.1} parent=1 // pred_check
      _
    $region27: #{tpu_custom_call.1} parent=1 // pred_check_branch
      %28 = sbr.rel (0) target = $region29
    $region28: #{tpu_custom_call.1} parent=1 // pred_region
      _
    $region29: #{tpu_custom_call.1} parent=1 // pred_fallthru
      _
    // Predicated region
    $region30: #{tpu_custom_call.1} parent=1 // pred_check
      _
    $region31: #{tpu_custom_call.1} parent=1 // pred_check_branch
      %30 = sbr.rel (0) target = $region33
    $region32: #{tpu_custom_call.1} parent=1 // pred_region
      _
    $region33: #{tpu_custom_call.1} parent=1 // pred_fallthru
      _
    // Predicated region
    $region34: #{tpu_custom_call.1} parent=1 // pred_check
      _
    $region35: #{tpu_custom_call.1} parent=1 // pred_check_branch
      %32 = sbr.rel (0) target = $region37
    $region36: #{tpu_custom_call.1} parent=1 // pred_region
      _
    $region37: #{tpu_custom_call.1} parent=1 // pred_fallthru
      _
    %v33 = vld [vmem:[%s0] sm:$0xff]
    %v34 = vld [vmem:[%s0 + $0x8] sm:$0xff]
    %v35 = vld [vmem:[%s0 + $0x10] sm:$0xf]
    %v36 = vld [vmem:[%s7] sm:$0xf]
    %v38 = vperm.slane %v36, 0
    %v39 = vperm.slane %v36, 1
    %v40 = vperm.slane %v36, 2
    %v41 = vperm.slane %v36, 3
    %v42 = vrot.slane %v39, 4
    %v43 = vrot.slane %v41, 4
    %vm44 = vcmask 1043456
    %v45 = vsel %vm44, %v38, %v42
    %v46 = vsel %vm44, %v40, %v43
    %47 = vrot.lane.b32.xlu0 %v45, 111
    %v48 = vpop.permute.xlu0 %47
    %49 = vrot.lane.b32.xlu0 %v46, 111
    %v50 = vpop.permute.xlu0 %49
    %v51 = vrot.slane %v48, 4
    %v52 = vrot.slane %v50, 4
    %vm53 = vcmask 908288
    %v54 = vsel %vm53, %v51, %v48
    %v55 = vsel %vm44, %v51, %v52
    %v56 = vsel %vm53, %v55, %v50
    %v60 = vmul.f32 %v33, %v54
    %v61 = vmul.f32 %v34, %v56
    %v62 = vmul.f32 %v35, %v52
    %v63 = vld [vmem:[%s1] sm:$0xff]
    %s64 = scalar_lea.vmem %s7, 4
    %v65 = vld [vmem:[%s64] sm:$0xf]
    %v67 = vperm.slane %v65, 0
    %v68 = vperm.slane %v65, 1
    %v69 = vperm.slane %v65, 2
    %v70 = vperm.slane %v65, 3
    %v71 = vrot.slane %v68, 4
    %v72 = vrot.slane %v70, 4
    %v73 = vsel %vm44, %v67, %v71
    %v74 = vsel %vm44, %v69, %v72
    %75 = vrot.lane.b32.xlu0 %v73, 112
    %v76 = vpop.permute.xlu0 %75
    %77 = vrot.lane.b32.xlu0 %v74, 112
    %v78 = vpop.permute.xlu0 %77
    %v79 = vrot.slane %v76, 4
    %v80 = vrot.slane %v78, 4
    %vm81 = vcmask 916480
    %v82 = vsel %vm81, %v79, %v76
    %v83 = vsel %vm44, %v79, %v80
    %v84 = vsel %vm81, %v83, %v78
    %v88 = vmul.f32 %v33, %v82
    %v89 = vmul.f32 %v34, %v84
    %v90 = vmul.f32 %v35, %v80
    %s91 = scalar_lea.vmem %s1, 8
    %v92 = vld [vmem:[%s91] sm:$0xff]
    %96 = vst [vmem:[#allocation1] ss:$2 sm:$0xff] %v88
    %s97 = scalar_lea.vmem [#allocation1], 16
    %98 = vst [vmem:[%s97] ss:$2 sm:$0xff] %v89
    %s99 = scalar_lea.vmem [#allocation1], 32
    %100 = vst [vmem:[%s99] ss:$2 sm:$0xff] %v90
    %v101 = vld.sshfl [vmem:[#allocation1] sm:$0xff pattern:$0x75316420]
    %v102 = vld.sshfl [vmem:[#allocation1 + $0x8] sm:$0xff pattern:$0x75316420]
    %v103 = vld.sshfl [vmem:[#allocation1 + $0x10] sm:$0xff pattern:$0x75316420]
    %v104 = vld.sshfl [vmem:[#allocation1 + $0x18] sm:$0xff pattern:$0x75316420]
    %v105 = vld.sshfl [vmem:[#allocation1 + $0x20] sm:$0xff pattern:$0x75316420]
    %106 = vrot.lane.b32.xlu0 %v101, 16
    %v107 = vpop.permute.xlu0 %106
    %108 = vrot.lane.b32.xlu0 %v102, 16
    %v109 = vpop.permute.xlu0 %108
    %110 = vrot.lane.b32.xlu0 %v103, 16
    %v111 = vpop.permute.xlu0 %110
    %112 = vrot.lane.b32.xlu0 %v104, 16
    %v113 = vpop.permute.xlu0 %112
    %114 = vrot.lane.b32.xlu0 %v105, 16
    %v115 = vpop.permute.xlu0 %114
    %vm116 = vcmask 130048
    %v117 = vsel %vm116, %v107, %v109
    %v118 = vsel %vm116, %v109, %v111
    %v119 = vsel %vm116, %v111, %v113
    %v120 = vsel %vm116, %v113, %v115
    %vm121 = vcmask 31744
    %v123 = vsel %vm121, %v92, 0
    %v125 = vsel %vm44, %v117, 0
    %v127 = vsel %vm44, %v118, 0
    %v129 = vsel %vm44, %v119, 0
    %v131 = vsel %vm44, %v120, 0
    %133 = vmatpush.msra.mxu0 0.0
    %134 = vmatpush.msra.mxu0 0.0
    %135 = vmatpush.msra.mxu0 0.0
    %136 = vmatpush.msra.mxu0 0.0
    %137 = vmatpush.msra.mxu0 0.0
    %138 = vmatpush.msra.mxu0 0.0
    %139 = vmatpush.msra.mxu0 0.0
    %140 = vmatpush.msra.mxu0 0.0
    %141 = vmatpush.msra.mxu0 0.0
    %142 = vmatpush.msra.mxu0 0.0
    %143 = vmatpush.msra.mxu0 0.0
    %144 = vmatpush.msra.mxu0 0.0
    %145 = vmatpush.msra.mxu0 0.0
    %146 = vmatpush.msra.mxu0 0.0
    %147 = vmatpush.msra.mxu0 0.0
    %148 = vmatpush.msra.mxu0 %v125
    %149 = vmatmul.f32.gmra.mxu0 %v123
    %v150 = vpop.f32.mrf.mxu0
    %v151 = vadd.f32 0.0, %v150
    %152 = vdwg.mxu0
    %153 = vmatpush.msra.mxu0 0.0
    %154 = vmatpush.msra.mxu0 0.0
    %155 = vmatpush.msra.mxu0 0.0
    %156 = vmatpush.msra.mxu0 0.0
    %157 = vmatpush.msra.mxu0 0.0
    %158 = vmatpush.msra.mxu0 0.0
    %159 = vmatpush.msra.mxu0 0.0
    %160 = vmatpush.msra.mxu0 0.0
    %161 = vmatpush.msra.mxu0 0.0
    %162 = vmatpush.msra.mxu0 0.0
    %163 = vmatpush.msra.mxu0 0.0
    %164 = vmatpush.msra.mxu0 0.0
    %165 = vmatpush.msra.mxu0 0.0
    %166 = vmatpush.msra.mxu0 0.0
    %167 = vmatpush.msra.mxu0 0.0
    %168 = vmatpush.msra.mxu0 %v127
    %169 = vmatmul.f32.gmra.mxu0 %v123
    %v170 = vpop.f32.mrf.mxu0
    %v171 = vadd.f32 0.0, %v170
    %172 = vdwg.mxu0
    %173 = vmatpush.msra.mxu0 0.0
    %174 = vmatpush.msra.mxu0 0.0
    %175 = vmatpush.msra.mxu0 0.0
    %176 = vmatpush.msra.mxu0 0.0
    %177 = vmatpush.msra.mxu0 0.0
    %178 = vmatpush.msra.mxu0 0.0
    %179 = vmatpush.msra.mxu0 0.0
    %180 = vmatpush.msra.mxu0 0.0
    %181 = vmatpush.msra.mxu0 0.0
    %182 = vmatpush.msra.mxu0 0.0
    %183 = vmatpush.msra.mxu0 0.0
    %184 = vmatpush.msra.mxu0 0.0
    %185 = vmatpush.msra.mxu0 0.0
    %186 = vmatpush.msra.mxu0 0.0
    %187 = vmatpush.msra.mxu0 0.0
    %188 = vmatpush.msra.mxu0 %v129
    %189 = vmatmul.f32.gmra.mxu0 %v123
    %v190 = vpop.f32.mrf.mxu0
    %v191 = vadd.f32 0.0, %v190
    %192 = vdwg.mxu0
    %193 = vmatpush.msra.mxu0 0.0
    %194 = vmatpush.msra.mxu0 0.0
    %195 = vmatpush.msra.mxu0 0.0
    %196 = vmatpush.msra.mxu0 0.0
    %197 = vmatpush.msra.mxu0 0.0
    %198 = vmatpush.msra.mxu0 0.0
    %199 = vmatpush.msra.mxu0 0.0
    %200 = vmatpush.msra.mxu0 0.0
    %201 = vmatpush.msra.mxu0 0.0
    %202 = vmatpush.msra.mxu0 0.0
    %203 = vmatpush.msra.mxu0 0.0
    %204 = vmatpush.msra.mxu0 0.0
    %205 = vmatpush.msra.mxu0 0.0
    %206 = vmatpush.msra.mxu0 0.0
    %207 = vmatpush.msra.mxu0 0.0
    %208 = vmatpush.msra.mxu0 %v131
    %209 = vmatmul.f32.gmra.mxu0 %v123
    %v210 = vpop.f32.mrf.mxu0
    %v211 = vadd.f32 0.0, %v210
    %212 = vdwg.mxu0
    %216 = vst [vmem:[#allocation1] ss:$2 sm:$0xff] %v60
    %s217 = scalar_lea.vmem [#allocation1], 16
    %218 = vst [vmem:[%s217] ss:$2 sm:$0xff] %v61
    %s219 = scalar_lea.vmem [#allocation1], 32
    %220 = vst [vmem:[%s219] ss:$2 sm:$0xff] %v62
    %v221 = vld.sshfl [vmem:[#allocation1] sm:$0xff pattern:$0x75316420]
    %v222 = vld.sshfl [vmem:[#allocation1 + $0x8] sm:$0xff pattern:$0x75316420]
    %v223 = vld.sshfl [vmem:[#allocation1 + $0x10] sm:$0xff pattern:$0x75316420]
    %v224 = vld.sshfl [vmem:[#allocation1 + $0x18] sm:$0xff pattern:$0x75316420]
    %v225 = vld.sshfl [vmem:[#allocation1 + $0x20] sm:$0xff pattern:$0x75316420]
    %226 = vrot.lane.b32.xlu0 %v221, 17
    %v227 = vpop.permute.xlu0 %226
    %228 = vrot.lane.b32.xlu0 %v222, 17
    %v229 = vpop.permute.xlu0 %228
    %230 = vrot.lane.b32.xlu0 %v223, 17
    %v231 = vpop.permute.xlu0 %230
    %232 = vrot.lane.b32.xlu0 %v224, 17
    %v233 = vpop.permute.xlu0 %232
    %234 = vrot.lane.b32.xlu0 %v225, 17
    %v235 = vpop.permute.xlu0 %234
    %vm236 = vcmask 138240
    %v237 = vsel %vm236, %v227, %v229
    %v238 = vsel %vm236, %v229, %v231
    %v239 = vsel %vm236, %v231, %v233
    %v240 = vsel %vm236, %v233, %v235
    %v242 = vsel %vm121, %v63, 0
    %v244 = vsel %vm44, %v237, 0
    %v246 = vsel %vm44, %v238, 0
    %v248 = vsel %vm44, %v239, 0
    %v250 = vsel %vm44, %v240, 0
    %252 = vmatpush.msra.mxu0 0.0
    %253 = vmatpush.msra.mxu0 0.0
    %254 = vmatpush.msra.mxu0 0.0
    %255 = vmatpush.msra.mxu0 0.0
    %256 = vmatpush.msra.mxu0 0.0
    %257 = vmatpush.msra.mxu0 0.0
    %258 = vmatpush.msra.mxu0 0.0
    %259 = vmatpush.msra.mxu0 0.0
    %260 = vmatpush.msra.mxu0 0.0
    %261 = vmatpush.msra.mxu0 0.0
    %262 = vmatpush.msra.mxu0 0.0
    %263 = vmatpush.msra.mxu0 0.0
    %264 = vmatpush.msra.mxu0 0.0
    %265 = vmatpush.msra.mxu0 0.0
    %266 = vmatpush.msra.mxu0 0.0
    %267 = vmatpush.msra.mxu0 %v244
    %268 = vmatmul.f32.gmra.mxu0 %v242
    %v269 = vpop.f32.mrf.mxu0
    %v270 = vadd.f32 %v151, %v269
    %271 = vdwg.mxu0
    %272 = vmatpush.msra.mxu0 0.0
    %273 = vmatpush.msra.mxu0 0.0
    %274 = vmatpush.msra.mxu0 0.0
    %275 = vmatpush.msra.mxu0 0.0
    %276 = vmatpush.msra.mxu0 0.0
    %277 = vmatpush.msra.mxu0 0.0
    %278 = vmatpush.msra.mxu0 0.0
    %279 = vmatpush.msra.mxu0 0.0
    %280 = vmatpush.msra.mxu0 0.0
    %281 = vmatpush.msra.mxu0 0.0
    %282 = vmatpush.msra.mxu0 0.0
    %283 = vmatpush.msra.mxu0 0.0
    %284 = vmatpush.msra.mxu0 0.0
    %285 = vmatpush.msra.mxu0 0.0
    %286 = vmatpush.msra.mxu0 0.0
    %287 = vmatpush.msra.mxu0 %v246
    %288 = vmatmul.f32.gmra.mxu0 %v242
    %v289 = vpop.f32.mrf.mxu0
    %v290 = vadd.f32 %v171, %v289
    %291 = vdwg.mxu0
    %292 = vmatpush.msra.mxu0 0.0
    %293 = vmatpush.msra.mxu0 0.0
    %294 = vmatpush.msra.mxu0 0.0
    %295 = vmatpush.msra.mxu0 0.0
    %296 = vmatpush.msra.mxu0 0.0
    %297 = vmatpush.msra.mxu0 0.0
    %298 = vmatpush.msra.mxu0 0.0
    %299 = vmatpush.msra.mxu0 0.0
    %300 = vmatpush.msra.mxu0 0.0
    %301 = vmatpush.msra.mxu0 0.0
    %302 = vmatpush.msra.mxu0 0.0
    %303 = vmatpush.msra.mxu0 0.0
    %304 = vmatpush.msra.mxu0 0.0
    %305 = vmatpush.msra.mxu0 0.0
    %306 = vmatpush.msra.mxu0 0.0
    %307 = vmatpush.msra.mxu0 %v248
    %308 = vmatmul.f32.gmra.mxu0 %v242
    %v309 = vpop.f32.mrf.mxu0
    %v310 = vadd.f32 %v191, %v309
    %311 = vdwg.mxu0
    %312 = vmatpush.msra.mxu0 0.0
    %313 = vmatpush.msra.mxu0 0.0
    %314 = vmatpush.msra.mxu0 0.0
    %315 = vmatpush.msra.mxu0 0.0
    %316 = vmatpush.msra.mxu0 0.0
    %317 = vmatpush.msra.mxu0 0.0
    %318 = vmatpush.msra.mxu0 0.0
    %319 = vmatpush.msra.mxu0 0.0
    %320 = vmatpush.msra.mxu0 0.0
    %321 = vmatpush.msra.mxu0 0.0
    %322 = vmatpush.msra.mxu0 0.0
    %323 = vmatpush.msra.mxu0 0.0
    %324 = vmatpush.msra.mxu0 0.0
    %325 = vmatpush.msra.mxu0 0.0
    %326 = vmatpush.msra.mxu0 0.0
    %327 = vmatpush.msra.mxu0 %v250
    %328 = vmatmul.f32.gmra.mxu0 %v242
    %v329 = vpop.f32.mrf.mxu0
    %v330 = vadd.f32 %v211, %v329
    %331 = vdwg.mxu0
    %v332 = vld [vmem:[%s0] sm:$0xff]
    %v333 = vld [vmem:[%s0 + $0x8] sm:$0xff]
    %v334 = vld [vmem:[%s0 + $0x10] sm:$0xf]
    %s335 = scalar_lea.vmem %s7, 8
    %v336 = vld [vmem:[%s335] sm:$0xf]
    %v338 = vperm.slane %v336, 0
    %v339 = vperm.slane %v336, 1
    %v340 = vperm.slane %v336, 2
    %v341 = vperm.slane %v336, 3
    %v342 = vrot.slane %v339, 4
    %v343 = vrot.slane %v341, 4
    %v344 = vsel %vm44, %v338, %v342
    %v345 = vsel %vm44, %v340, %v343
    %346 = vrot.lane.b32.xlu0 %v344, 113
    %v347 = vpop.permute.xlu0 %346
    %348 = vrot.lane.b32.xlu0 %v345, 113
    %v349 = vpop.permute.xlu0 %348
    %v350 = vrot.slane %v347, 4
    %v351 = vrot.slane %v349, 4
    %vm352 = vcmask 924672
    %v353 = vsel %vm352, %v350, %v347
    %v354 = vsel %vm44, %v350, %v351
    %v355 = vsel %vm352, %v354, %v349
    %v359 = vmul.f32 %v332, %v353
    %v360 = vmul.f32 %v333, %v355
    %v361 = vmul.f32 %v334, %v351
    %s362 = scalar_lea.vmem %s1, 16
    %v363 = vld [vmem:[%s362] sm:$0xff]
    %367 = vst [vmem:[#allocation1] ss:$2 sm:$0xff] %v359
    %s368 = scalar_lea.vmem [#allocation1], 16
    %369 = vst [vmem:[%s368] ss:$2 sm:$0xff] %v360
    %s370 = scalar_lea.vmem [#allocation1], 32
    %371 = vst [vmem:[%s370] ss:$2 sm:$0xff] %v361
    %v372 = vld.sshfl [vmem:[#allocation1] sm:$0xff pattern:$0x75316420]
    %v373 = vld.sshfl [vmem:[#allocation1 + $0x8] sm:$0xff pattern:$0x75316420]
    %v374 = vld.sshfl [vmem:[#allocation1 + $0x10] sm:$0xff pattern:$0x75316420]
    %v375 = vld.sshfl [vmem:[#allocation1 + $0x18] sm:$0xff pattern:$0x75316420]
    %v376 = vld.sshfl [vmem:[#allocation1 + $0x20] sm:$0xff pattern:$0x75316420]
    %377 = vrot.lane.b32.xlu0 %v372, 15
    %v378 = vpop.permute.xlu0 %377
    %379 = vrot.lane.b32.xlu0 %v373, 15
    %v380 = vpop.permute.xlu0 %379
    %381 = vrot.lane.b32.xlu0 %v374, 15
    %v382 = vpop.permute.xlu0 %381
    %383 = vrot.lane.b32.xlu0 %v375, 15
    %v384 = vpop.permute.xlu0 %383
    %385 = vrot.lane.b32.xlu0 %v376, 15
    %v386 = vpop.permute.xlu0 %385
    %vm387 = vcmask 121856
    %v388 = vsel %vm387, %v378, %v380
    %v389 = vsel %vm387, %v380, %v382
    %v390 = vsel %vm387, %v382, %v384
    %v391 = vsel %vm387, %v384, %v386
    %v393 = vsel %vm121, %v363, 0
    %v395 = vsel %vm44, %v388, 0
    %v397 = vsel %vm44, %v389, 0
    %v399 = vsel %vm44, %v390, 0
    %v401 = vsel %vm44, %v391, 0
    %403 = vmatpush.msra.mxu0 0.0
    %404 = vmatpush.msra.mxu0 0.0
    %405 = vmatpush.msra.mxu0 0.0
    %406 = vmatpush.msra.mxu0 0.0
    %407 = vmatpush.msra.mxu0 0.0
    %408 = vmatpush.msra.mxu0 0.0
    %409 = vmatpush.msra.mxu0 0.0
    %410 = vmatpush.msra.mxu0 0.0
    %411 = vmatpush.msra.mxu0 0.0
    %412 = vmatpush.msra.mxu0 0.0
    %413 = vmatpush.msra.mxu0 0.0
    %414 = vmatpush.msra.mxu0 0.0
    %415 = vmatpush.msra.mxu0 0.0
    %416 = vmatpush.msra.mxu0 0.0
    %417 = vmatpush.msra.mxu0 0.0
    %418 = vmatpush.msra.mxu0 %v395
    %419 = vmatmul.f32.gmra.mxu0 %v393
    %v420 = vpop.f32.mrf.mxu0
    %v421 = vadd.f32 0.0, %v420
    %422 = vdwg.mxu0
    %423 = vmatpush.msra.mxu0 0.0
    %424 = vmatpush.msra.mxu0 0.0
    %425 = vmatpush.msra.mxu0 0.0
    %426 = vmatpush.msra.mxu0 0.0
    %427 = vmatpush.msra.mxu0 0.0
    %428 = vmatpush.msra.mxu0 0.0
    %429 = vmatpush.msra.mxu0 0.0
    %430 = vmatpush.msra.mxu0 0.0
    %431 = vmatpush.msra.mxu0 0.0
    %432 = vmatpush.msra.mxu0 0.0
    %433 = vmatpush.msra.mxu0 0.0
    %434 = vmatpush.msra.mxu0 0.0
    %435 = vmatpush.msra.mxu0 0.0
    %436 = vmatpush.msra.mxu0 0.0
    %437 = vmatpush.msra.mxu0 0.0
    %438 = vmatpush.msra.mxu0 %v397
    %439 = vmatmul.f32.gmra.mxu0 %v393
    %v440 = vpop.f32.mrf.mxu0
    %v441 = vadd.f32 0.0, %v440
    %442 = vdwg.mxu0
    %443 = vmatpush.msra.mxu0 0.0
    %444 = vmatpush.msra.mxu0 0.0
    %445 = vmatpush.msra.mxu0 0.0
    %446 = vmatpush.msra.mxu0 0.0
    %447 = vmatpush.msra.mxu0 0.0
    %448 = vmatpush.msra.mxu0 0.0
    %449 = vmatpush.msra.mxu0 0.0
    %450 = vmatpush.msra.mxu0 0.0
    %451 = vmatpush.msra.mxu0 0.0
    %452 = vmatpush.msra.mxu0 0.0
    %453 = vmatpush.msra.mxu0 0.0
    %454 = vmatpush.msra.mxu0 0.0
    %455 = vmatpush.msra.mxu0 0.0
    %456 = vmatpush.msra.mxu0 0.0
    %457 = vmatpush.msra.mxu0 0.0
    %458 = vmatpush.msra.mxu0 %v399
    %459 = vmatmul.f32.gmra.mxu0 %v393
    %v460 = vpop.f32.mrf.mxu0
    %v461 = vadd.f32 0.0, %v460
    %462 = vdwg.mxu0
    %463 = vmatpush.msra.mxu0 0.0
    %464 = vmatpush.msra.mxu0 0.0
    %465 = vmatpush.msra.mxu0 0.0
    %466 = vmatpush.msra.mxu0 0.0
    %467 = vmatpush.msra.mxu0 0.0
    %468 = vmatpush.msra.mxu0 0.0
    %469 = vmatpush.msra.mxu0 0.0
    %470 = vmatpush.msra.mxu0 0.0
    %471 = vmatpush.msra.mxu0 0.0
    %472 = vmatpush.msra.mxu0 0.0
    %473 = vmatpush.msra.mxu0 0.0
    %474 = vmatpush.msra.mxu0 0.0
    %475 = vmatpush.msra.mxu0 0.0
    %476 = vmatpush.msra.mxu0 0.0
    %477 = vmatpush.msra.mxu0 0.0
    %478 = vmatpush.msra.mxu0 %v401
    %479 = vmatmul.f32.gmra.mxu0 %v393
    %v480 = vpop.f32.mrf.mxu0
    %v481 = vadd.f32 0.0, %v480
    %482 = vdwg.mxu0
    %v483 = vadd.f32 %v270, %v421
    %v484 = vadd.f32 %v290, %v441
    %v485 = vadd.f32 %v310, %v461
    %v486 = vadd.f32 %v330, %v481
    %v487 = vld [vmem:[%s0] sm:$0xff]
    %v488 = vld [vmem:[%s0 + $0x8] sm:$0xff]
    %v489 = vld [vmem:[%s0 + $0x10] sm:$0xf]
    %s490 = scalar_lea.vmem %s7, 12
    %v491 = vld [vmem:[%s490] sm:$0xf]
    %v493 = vperm.slane %v491, 0
    %v494 = vperm.slane %v491, 1
    %v495 = vperm.slane %v491, 2
    %v496 = vperm.slane %v491, 3
    %v497 = vrot.slane %v494, 4
    %v498 = vrot.slane %v496, 4
    %v499 = vsel %vm44, %v493, %v497
    %v500 = vsel %vm44, %v495, %v498
    %501 = vrot.lane.b32.xlu0 %v499, 127
    %v502 = vpop.permute.xlu0 %501
    %503 = vrot.lane.b32.xlu0 %v500, 127
    %v504 = vpop.permute.xlu0 %503
    %v505 = vrot.slane %v502, 4
    %v506 = vrot.slane %v504, 4
    %vm507 = vcmask 1039360
    %v508 = vsel %vm507, %v505, %v502
    %v509 = vsel %vm44, %v505, %v506
    %v510 = vsel %vm507, %v509, %v504
    %v514 = vmul.f32 %v487, %v508
    %v515 = vmul.f32 %v488, %v510
    %v516 = vmul.f32 %v489, %v506
    %s517 = scalar_lea.vmem %s1, 24
    %v518 = vld [vmem:[%s517] sm:$0xff]
    %522 = vst [vmem:[#allocation1] ss:$2 sm:$0xff] %v514
    %s523 = scalar_lea.vmem [#allocation1], 16
    %524 = vst [vmem:[%s523] ss:$2 sm:$0xff] %v515
    %s525 = scalar_lea.vmem [#allocation1], 32
    %526 = vst [vmem:[%s525] ss:$2 sm:$0xff] %v516
    %v527 = vld.sshfl [vmem:[#allocation1] sm:$0xff pattern:$0x75316420]
    %v528 = vld.sshfl [vmem:[#allocation1 + $0x8] sm:$0xff pattern:$0x75316420]
    %v529 = vld.sshfl [vmem:[#allocation1 + $0x10] sm:$0xff pattern:$0x75316420]
    %v530 = vld.sshfl [vmem:[#allocation1 + $0x18] sm:$0xff pattern:$0x75316420]
    %v531 = vld.sshfl [vmem:[#allocation1 + $0x20] sm:$0xff pattern:$0x75316420]
    %532 = vrot.lane.b32.xlu0 %v527, 1
    %v533 = vpop.permute.xlu0 %532
    %534 = vrot.lane.b32.xlu0 %v528, 1
    %v535 = vpop.permute.xlu0 %534
    %536 = vrot.lane.b32.xlu0 %v529, 1
    %v537 = vpop.permute.xlu0 %536
    %538 = vrot.lane.b32.xlu0 %v530, 1
    %v539 = vpop.permute.xlu0 %538
    %540 = vrot.lane.b32.xlu0 %v531, 1
    %v541 = vpop.permute.xlu0 %540
    %vm542 = vcmask 7168
    %v543 = vsel %vm542, %v533, %v535
    %v544 = vsel %vm542, %v535, %v537
    %v545 = vsel %vm542, %v537, %v539
    %v546 = vsel %vm542, %v539, %v541
    %v548 = vsel %vm121, %v518, 0
    %v550 = vsel %vm44, %v543, 0
    %v552 = vsel %vm44, %v544, 0
    %v554 = vsel %vm44, %v545, 0
    %v556 = vsel %vm44, %v546, 0
    %558 = vmatpush.msra.mxu0 0.0
    %559 = vmatpush.msra.mxu0 0.0
    %560 = vmatpush.msra.mxu0 0.0
    %561 = vmatpush.msra.mxu0 0.0
    %562 = vmatpush.msra.mxu0 0.0
    %563 = vmatpush.msra.mxu0 0.0
    %564 = vmatpush.msra.mxu0 0.0
    %565 = vmatpush.msra.mxu0 0.0
    %566 = vmatpush.msra.mxu0 0.0
    %567 = vmatpush.msra.mxu0 0.0
    %568 = vmatpush.msra.mxu0 0.0
    %569 = vmatpush.msra.mxu0 0.0
    %570 = vmatpush.msra.mxu0 0.0
    %571 = vmatpush.msra.mxu0 0.0
    %572 = vmatpush.msra.mxu0 0.0
    %573 = vmatpush.msra.mxu0 %v550
    %574 = vmatmul.f32.gmra.mxu0 %v548
    %v575 = vpop.f32.mrf.mxu0
    %v576 = vadd.f32 0.0, %v575
    %577 = vdwg.mxu0
    %578 = vmatpush.msra.mxu0 0.0
    %579 = vmatpush.msra.mxu0 0.0
    %580 = vmatpush.msra.mxu0 0.0
    %581 = vmatpush.msra.mxu0 0.0
    %582 = vmatpush.msra.mxu0 0.0
    %583 = vmatpush.msra.mxu0 0.0
    %584 = vmatpush.msra.mxu0 0.0
    %585 = vmatpush.msra.mxu0 0.0
    %586 = vmatpush.msra.mxu0 0.0
    %587 = vmatpush.msra.mxu0 0.0
    %588 = vmatpush.msra.mxu0 0.0
    %589 = vmatpush.msra.mxu0 0.0
    %590 = vmatpush.msra.mxu0 0.0
    %591 = vmatpush.msra.mxu0 0.0
    %592 = vmatpush.msra.mxu0 0.0
    %593 = vmatpush.msra.mxu0 %v552
    %594 = vmatmul.f32.gmra.mxu0 %v548
    %v595 = vpop.f32.mrf.mxu0
    %v596 = vadd.f32 0.0, %v595
    %597 = vdwg.mxu0
    %598 = vmatpush.msra.mxu0 0.0
    %599 = vmatpush.msra.mxu0 0.0
    %600 = vmatpush.msra.mxu0 0.0
    %601 = vmatpush.msra.mxu0 0.0
    %602 = vmatpush.msra.mxu0 0.0
    %603 = vmatpush.msra.mxu0 0.0
    %604 = vmatpush.msra.mxu0 0.0
    %605 = vmatpush.msra.mxu0 0.0
    %606 = vmatpush.msra.mxu0 0.0
    %607 = vmatpush.msra.mxu0 0.0
    %608 = vmatpush.msra.mxu0 0.0
    %609 = vmatpush.msra.mxu0 0.0
    %610 = vmatpush.msra.mxu0 0.0
    %611 = vmatpush.msra.mxu0 0.0
    %612 = vmatpush.msra.mxu0 0.0
    %613 = vmatpush.msra.mxu0 %v554
    %614 = vmatmul.f32.gmra.mxu0 %v548
    %v615 = vpop.f32.mrf.mxu0
    %v616 = vadd.f32 0.0, %v615
    %617 = vdwg.mxu0
    %618 = vmatpush.msra.mxu0 0.0
    %619 = vmatpush.msra.mxu0 0.0
    %620 = vmatpush.msra.mxu0 0.0
    %621 = vmatpush.msra.mxu0 0.0
    %622 = vmatpush.msra.mxu0 0.0
    %623 = vmatpush.msra.mxu0 0.0
    %624 = vmatpush.msra.mxu0 0.0
    %625 = vmatpush.msra.mxu0 0.0
    %626 = vmatpush.msra.mxu0 0.0
    %627 = vmatpush.msra.mxu0 0.0
    %628 = vmatpush.msra.mxu0 0.0
    %629 = vmatpush.msra.mxu0 0.0
    %630 = vmatpush.msra.mxu0 0.0
    %631 = vmatpush.msra.mxu0 0.0
    %632 = vmatpush.msra.mxu0 0.0
    %633 = vmatpush.msra.mxu0 %v556
    %634 = vmatmul.f32.gmra.mxu0 %v548
    %v635 = vpop.f32.mrf.mxu0
    %v636 = vadd.f32 0.0, %v635
    %637 = vdwg.mxu0
    %v638 = vadd.f32 %v483, %v576
    %v639 = vadd.f32 %v484, %v596
    %v640 = vadd.f32 %v485, %v616
    %v641 = vadd.f32 %v486, %v636
    %v642 = vld [vmem:[%s0 + $0x4] sm:$0xff]
    %v643 = vld [vmem:[%s0 + $0xc] sm:$0xff]
    %s644 = scalar_lea.vmem %s7, 16
    %v645 = vld [vmem:[%s644] sm:$0xf]
    %v647 = vperm.slane %v645, 0
    %v648 = vperm.slane %v645, 1
    %v649 = vperm.slane %v645, 2
    %v650 = vperm.slane %v645, 3
    %v651 = vrot.slane %v648, 4
    %v652 = vrot.slane %v650, 4
    %v653 = vsel %vm44, %v647, %v651
    %v654 = vsel %vm44, %v649, %v652
    %v657 = vmul.f32 %v642, %v653
    %v658 = vmul.f32 %v643, %v654
    %s659 = scalar_lea.vmem %s1, 32
    %v660 = vld [vmem:[%s659] sm:$0xff]
    %663 = vst [vmem:[#allocation1] ss:$2 sm:$0xff] %v657
    %s664 = scalar_lea.vmem [#allocation1], 16
    %665 = vst [vmem:[%s664] ss:$2 sm:$0xff] %v658
    %v666 = vld.sshfl [vmem:[#allocation1] sm:$0xff pattern:$0x75316420]
    %v667 = vld.sshfl [vmem:[#allocation1 + $0x8] sm:$0xff pattern:$0x75316420]
    %v668 = vld.sshfl [vmem:[#allocation1 + $0x10] sm:$0xff pattern:$0x75316420]
    %v669 = vld.sshfl [vmem:[#allocation1 + $0x18] sm:$0xff pattern:$0x75316420]
    %v671 = vsel %vm121, %v660, 0
    %v673 = vsel %vm44, %v666, 0
    %v675 = vsel %vm44, %v667, 0
    %v677 = vsel %vm44, %v668, 0
    %v679 = vsel %vm44, %v669, 0
    %681 = vmatpush.msra.mxu0 0.0
    %682 = vmatpush.msra.mxu0 0.0
    %683 = vmatpush.msra.mxu0 0.0
    %684 = vmatpush.msra.mxu0 0.0
    %685 = vmatpush.msra.mxu0 0.0
    %686 = vmatpush.msra.mxu0 0.0
    %687 = vmatpush.msra.mxu0 0.0
    %688 = vmatpush.msra.mxu0 0.0
    %689 = vmatpush.msra.mxu0 0.0
    %690 = vmatpush.msra.mxu0 0.0
    %691 = vmatpush.msra.mxu0 0.0
    %692 = vmatpush.msra.mxu0 0.0
    %693 = vmatpush.msra.mxu0 0.0
    %694 = vmatpush.msra.mxu0 0.0
    %695 = vmatpush.msra.mxu0 0.0
    %696 = vmatpush.msra.mxu0 %v673
    %697 = vmatmul.f32.gmra.mxu0 %v671
    %v698 = vpop.f32.mrf.mxu0
    %v699 = vadd.f32 0.0, %v698
    %700 = vdwg.mxu0
    %701 = vmatpush.msra.mxu0 0.0
    %702 = vmatpush.msra.mxu0 0.0
    %703 = vmatpush.msra.mxu0 0.0
    %704 = vmatpush.msra.mxu0 0.0
    %705 = vmatpush.msra.mxu0 0.0
    %706 = vmatpush.msra.mxu0 0.0
    %707 = vmatpush.msra.mxu0 0.0
    %708 = vmatpush.msra.mxu0 0.0
    %709 = vmatpush.msra.mxu0 0.0
    %710 = vmatpush.msra.mxu0 0.0
    %711 = vmatpush.msra.mxu0 0.0
    %712 = vmatpush.msra.mxu0 0.0
    %713 = vmatpush.msra.mxu0 0.0
    %714 = vmatpush.msra.mxu0 0.0
    %715 = vmatpush.msra.mxu0 0.0
    %716 = vmatpush.msra.mxu0 %v675
    %717 = vmatmul.f32.gmra.mxu0 %v671
    %v718 = vpop.f32.mrf.mxu0
    %v719 = vadd.f32 0.0, %v718
    %720 = vdwg.mxu0
    %721 = vmatpush.msra.mxu0 0.0
    %722 = vmatpush.msra.mxu0 0.0
    %723 = vmatpush.msra.mxu0 0.0
    %724 = vmatpush.msra.mxu0 0.0
    %725 = vmatpush.msra.mxu0 0.0
    %726 = vmatpush.msra.mxu0 0.0
    %727 = vmatpush.msra.mxu0 0.0
    %728 = vmatpush.msra.mxu0 0.0
    %729 = vmatpush.msra.mxu0 0.0
    %730 = vmatpush.msra.mxu0 0.0
    %731 = vmatpush.msra.mxu0 0.0
    %732 = vmatpush.msra.mxu0 0.0
    %733 = vmatpush.msra.mxu0 0.0
    %734 = vmatpush.msra.mxu0 0.0
    %735 = vmatpush.msra.mxu0 0.0
    %736 = vmatpush.msra.mxu0 %v677
    %737 = vmatmul.f32.gmra.mxu0 %v671
    %v738 = vpop.f32.mrf.mxu0
    %v739 = vadd.f32 0.0, %v738
    %740 = vdwg.mxu0
    %741 = vmatpush.msra.mxu0 0.0
    %742 = vmatpush.msra.mxu0 0.0
    %743 = vmatpush.msra.mxu0 0.0
    %744 = vmatpush.msra.mxu0 0.0
    %745 = vmatpush.msra.mxu0 0.0
    %746 = vmatpush.msra.mxu0 0.0
    %747 = vmatpush.msra.mxu0 0.0
    %748 = vmatpush.msra.mxu0 0.0
    %749 = vmatpush.msra.mxu0 0.0
    %750 = vmatpush.msra.mxu0 0.0
    %751 = vmatpush.msra.mxu0 0.0
    %752 = vmatpush.msra.mxu0 0.0
    %753 = vmatpush.msra.mxu0 0.0
    %754 = vmatpush.msra.mxu0 0.0
    %755 = vmatpush.msra.mxu0 0.0
    %756 = vmatpush.msra.mxu0 %v679
    %757 = vmatmul.f32.gmra.mxu0 %v671
    %v758 = vpop.f32.mrf.mxu0
    %v759 = vadd.f32 0.0, %v758
    %760 = vdwg.mxu0
    %v761 = vadd.f32 %v638, %v699
    %v762 = vadd.f32 %v639, %v719
    %v763 = vadd.f32 %v640, %v739
    %v764 = vadd.f32 %v641, %v759
    %v765 = vld [vmem:[%s0 + $0x4] sm:$0xff]
    %v766 = vld [vmem:[%s0 + $0xc] sm:$0xff]
    %v767 = vld [vmem:[%s0 + $0x14] sm:$0xf]
    %s768 = scalar_lea.vmem %s7, 20
    %v769 = vld [vmem:[%s768] sm:$0xf]
    %v771 = vperm.slane %v769, 0
    %v772 = vperm.slane %v769, 1
    %v773 = vperm.slane %v769, 2
    %v774 = vperm.slane %v769, 3
    %v775 = vrot.slane %v772, 4
    %v776 = vrot.slane %v774, 4
    %v777 = vsel %vm44, %v771, %v775
    %v778 = vsel %vm44, %v773, %v776
    %779 = vrot.lane.b32.xlu0 %v777, 1
    %v780 = vpop.permute.xlu0 %779
    %781 = vrot.lane.b32.xlu0 %v778, 1
    %v782 = vpop.permute.xlu0 %781
    %v783 = vrot.slane %v780, 4
    %v784 = vrot.slane %v782, 4
    %v785 = vsel %vm542, %v783, %v780
    %v786 = vsel %vm44, %v783, %v784
    %v787 = vsel %vm542, %v786, %v782
    %v791 = vmul.f32 %v765, %v785
    %v792 = vmul.f32 %v766, %v787
    %v793 = vmul.f32 %v767, %v784
    %s794 = scalar_lea.vmem %s1, 40
    %v795 = vld [vmem:[%s794] sm:$0xff]
    %799 = vst [vmem:[#allocation1] ss:$2 sm:$0xff] %v791
    %s800 = scalar_lea.vmem [#allocation1], 16
    %801 = vst [vmem:[%s800] ss:$2 sm:$0xff] %v792
    %s802 = scalar_lea.vmem [#allocation1], 32
    %803 = vst [vmem:[%s802] ss:$2 sm:$0xff] %v793
    %v804 = vld.sshfl [vmem:[#allocation1] sm:$0xff pattern:$0x75316420]
    %v805 = vld.sshfl [vmem:[#allocation1 + $0x8] sm:$0xff pattern:$0x75316420]
    %v806 = vld.sshfl [vmem:[#allocation1 + $0x10] sm:$0xff pattern:$0x75316420]
    %v807 = vld.sshfl [vmem:[#allocation1 + $0x18] sm:$0xff pattern:$0x75316420]
    %v808 = vld.sshfl [vmem:[#allocation1 + $0x20] sm:$0xff pattern:$0x75316420]
    %809 = vrot.lane.b32.xlu0 %v804, 127
    %v810 = vpop.permute.xlu0 %809
    %811 = vrot.lane.b32.xlu0 %v805, 127
    %v812 = vpop.permute.xlu0 %811
    %813 = vrot.lane.b32.xlu0 %v806, 127
    %v814 = vpop.permute.xlu0 %813
    %815 = vrot.lane.b32.xlu0 %v807, 127
    %v816 = vpop.permute.xlu0 %815
    %817 = vrot.lane.b32.xlu0 %v808, 127
    %v818 = vpop.permute.xlu0 %817
    %v819 = vsel %vm507, %v810, %v812
    %v820 = vsel %vm507, %v812, %v814
    %v821 = vsel %vm507, %v814, %v816
    %v822 = vsel %vm507, %v816, %v818
    %v824 = vsel %vm121, %v795, 0
    %v826 = vsel %vm44, %v819, 0
    %v828 = vsel %vm44, %v820, 0
    %v830 = vsel %vm44, %v821, 0
    %v832 = vsel %vm44, %v822, 0
    %834 = vmatpush.msra.mxu0 0.0
    %835 = vmatpush.msra.mxu0 0.0
    %836 = vmatpush.msra.mxu0 0.0
    %837 = vmatpush.msra.mxu0 0.0
    %838 = vmatpush.msra.mxu0 0.0
    %839 = vmatpush.msra.mxu0 0.0
    %840 = vmatpush.msra.mxu0 0.0
    %841 = vmatpush.msra.mxu0 0.0
    %842 = vmatpush.msra.mxu0 0.0
    %843 = vmatpush.msra.mxu0 0.0
    %844 = vmatpush.msra.mxu0 0.0
    %845 = vmatpush.msra.mxu0 0.0
    %846 = vmatpush.msra.mxu0 0.0
    %847 = vmatpush.msra.mxu0 0.0
    %848 = vmatpush.msra.mxu0 0.0
    %849 = vmatpush.msra.mxu0 %v826
    %850 = vmatmul.f32.gmra.mxu0 %v824
    %v851 = vpop.f32.mrf.mxu0
    %v852 = vadd.f32 0.0, %v851
    %853 = vdwg.mxu0
    %854 = vmatpush.msra.mxu0 0.0
    %855 = vmatpush.msra.mxu0 0.0
    %856 = vmatpush.msra.mxu0 0.0
    %857 = vmatpush.msra.mxu0 0.0
    %858 = vmatpush.msra.mxu0 0.0
    %859 = vmatpush.msra.mxu0 0.0
    %860 = vmatpush.msra.mxu0 0.0
    %861 = vmatpush.msra.mxu0 0.0
    %862 = vmatpush.msra.mxu0 0.0
    %863 = vmatpush.msra.mxu0 0.0
    %864 = vmatpush.msra.mxu0 0.0
    %865 = vmatpush.msra.mxu0 0.0
    %866 = vmatpush.msra.mxu0 0.0
    %867 = vmatpush.msra.mxu0 0.0
    %868 = vmatpush.msra.mxu0 0.0
    %869 = vmatpush.msra.mxu0 %v828
    %870 = vmatmul.f32.gmra.mxu0 %v824
    %v871 = vpop.f32.mrf.mxu0
    %v872 = vadd.f32 0.0, %v871
    %873 = vdwg.mxu0
    %874 = vmatpush.msra.mxu0 0.0
    %875 = vmatpush.msra.mxu0 0.0
    %876 = vmatpush.msra.mxu0 0.0
    %877 = vmatpush.msra.mxu0 0.0
    %878 = vmatpush.msra.mxu0 0.0
    %879 = vmatpush.msra.mxu0 0.0
    %880 = vmatpush.msra.mxu0 0.0
    %881 = vmatpush.msra.mxu0 0.0
    %882 = vmatpush.msra.mxu0 0.0
    %883 = vmatpush.msra.mxu0 0.0
    %884 = vmatpush.msra.mxu0 0.0
    %885 = vmatpush.msra.mxu0 0.0
    %886 = vmatpush.msra.mxu0 0.0
    %887 = vmatpush.msra.mxu0 0.0
    %888 = vmatpush.msra.mxu0 0.0
    %889 = vmatpush.msra.mxu0 %v830
    %890 = vmatmul.f32.gmra.mxu0 %v824
    %v891 = vpop.f32.mrf.mxu0
    %v892 = vadd.f32 0.0, %v891
    %893 = vdwg.mxu0
    %894 = vmatpush.msra.mxu0 0.0
    %895 = vmatpush.msra.mxu0 0.0
    %896 = vmatpush.msra.mxu0 0.0
    %897 = vmatpush.msra.mxu0 0.0
    %898 = vmatpush.msra.mxu0 0.0
    %899 = vmatpush.msra.mxu0 0.0
    %900 = vmatpush.msra.mxu0 0.0
    %901 = vmatpush.msra.mxu0 0.0
    %902 = vmatpush.msra.mxu0 0.0
    %903 = vmatpush.msra.mxu0 0.0
    %904 = vmatpush.msra.mxu0 0.0
    %905 = vmatpush.msra.mxu0 0.0
    %906 = vmatpush.msra.mxu0 0.0
    %907 = vmatpush.msra.mxu0 0.0
    %908 = vmatpush.msra.mxu0 0.0
    %909 = vmatpush.msra.mxu0 %v832
    %910 = vmatmul.f32.gmra.mxu0 %v824
    %v911 = vpop.f32.mrf.mxu0
    %v912 = vadd.f32 0.0, %v911
    %913 = vdwg.mxu0
    %v914 = vadd.f32 %v761, %v852
    %v915 = vadd.f32 %v762, %v872
    %v916 = vadd.f32 %v763, %v892
    %v917 = vadd.f32 %v764, %v912
    %v918 = vld [vmem:[%s0 + $0x4] sm:$0xff]
    %v919 = vld [vmem:[%s0 + $0xc] sm:$0xff]
    %v920 = vld [vmem:[%s0 + $0x14] sm:$0xf]
    %s921 = scalar_lea.vmem %s7, 24
    %v922 = vld [vmem:[%s921] sm:$0xf]
    %v924 = vperm.slane %v922, 0
    %v925 = vperm.slane %v922, 1
    %v926 = vperm.slane %v922, 2
    %v927 = vperm.slane %v922, 3
    %v928 = vrot.slane %v925, 4
    %v929 = vrot.slane %v927, 4
    %v930 = vsel %vm44, %v924, %v928
    %v931 = vsel %vm44, %v926, %v929
    %932 = vrot.lane.b32.xlu0 %v930, 15
    %v933 = vpop.permute.xlu0 %932
    %934 = vrot.lane.b32.xlu0 %v931, 15
    %v935 = vpop.permute.xlu0 %934
    %v936 = vrot.slane %v933, 4
    %v937 = vrot.slane %v935, 4
    %v938 = vsel %vm387, %v936, %v933
    %v939 = vsel %vm44, %v936, %v937
    %v940 = vsel %vm387, %v939, %v935
    %v944 = vmul.f32 %v918, %v938
    %v945 = vmul.f32 %v919, %v940
    %v946 = vmul.f32 %v920, %v937
    %s947 = scalar_lea.vmem %s1, 48
    %v948 = vld [vmem:[%s947] sm:$0xff]
    %952 = vst [vmem:[#allocation1] ss:$2 sm:$0xff] %v944
    %s953 = scalar_lea.vmem [#allocation1], 16
    %954 = vst [vmem:[%s953] ss:$2 sm:$0xff] %v945
    %s955 = scalar_lea.vmem [#allocation1], 32
    %956 = vst [vmem:[%s955] ss:$2 sm:$0xff] %v946
    %v957 = vld.sshfl [vmem:[#allocation1] sm:$0xff pattern:$0x75316420]
    %v958 = vld.sshfl [vmem:[#allocation1 + $0x8] sm:$0xff pattern:$0x75316420]
    %v959 = vld.sshfl [vmem:[#allocation1 + $0x10] sm:$0xff pattern:$0x75316420]
    %v960 = vld.sshfl [vmem:[#allocation1 + $0x18] sm:$0xff pattern:$0x75316420]
    %v961 = vld.sshfl [vmem:[#allocation1 + $0x20] sm:$0xff pattern:$0x75316420]
    %962 = vrot.lane.b32.xlu0 %v957, 113
    %v963 = vpop.permute.xlu0 %962
    %964 = vrot.lane.b32.xlu0 %v958, 113
    %v965 = vpop.permute.xlu0 %964
    %966 = vrot.lane.b32.xlu0 %v959, 113
    %v967 = vpop.permute.xlu0 %966
    %968 = vrot.lane.b32.xlu0 %v960, 113
    %v969 = vpop.permute.xlu0 %968
    %970 = vrot.lane.b32.xlu0 %v961, 113
    %v971 = vpop.permute.xlu0 %970
    %v972 = vsel %vm352, %v963, %v965
    %v973 = vsel %vm352, %v965, %v967
    %v974 = vsel %vm352, %v967, %v969
    %v975 = vsel %vm352, %v969, %v971
    %v977 = vsel %vm121, %v948, 0
    %v979 = vsel %vm44, %v972, 0
    %v981 = vsel %vm44, %v973, 0
    %v983 = vsel %vm44, %v974, 0
    %v985 = vsel %vm44, %v975, 0
    %987 = vmatpush.msra.mxu0 0.0
    %988 = vmatpush.msra.mxu0 0.0
    %989 = vmatpush.msra.mxu0 0.0
    %990 = vmatpush.msra.mxu0 0.0
    %991 = vmatpush.msra.mxu0 0.0
    %992 = vmatpush.msra.mxu0 0.0
    %993 = vmatpush.msra.mxu0 0.0
    %994 = vmatpush.msra.mxu0 0.0
    %995 = vmatpush.msra.mxu0 0.0
    %996 = vmatpush.msra.mxu0 0.0
    %997 = vmatpush.msra.mxu0 0.0
    %998 = vmatpush.msra.mxu0 0.0
    %999 = vmatpush.msra.mxu0 0.0
    %1000 = vmatpush.msra.mxu0 0.0
    %1001 = vmatpush.msra.mxu0 0.0
    %1002 = vmatpush.msra.mxu0 %v979
    %1003 = vmatmul.f32.gmra.mxu0 %v977
    %v1004 = vpop.f32.mrf.mxu0
    %v1005 = vadd.f32 0.0, %v1004
    %1006 = vdwg.mxu0
    %1007 = vmatpush.msra.mxu0 0.0
    %1008 = vmatpush.msra.mxu0 0.0
    %1009 = vmatpush.msra.mxu0 0.0
    %1010 = vmatpush.msra.mxu0 0.0
    %1011 = vmatpush.msra.mxu0 0.0
    %1012 = vmatpush.msra.mxu0 0.0
    %1013 = vmatpush.msra.mxu0 0.0
    %1014 = vmatpush.msra.mxu0 0.0
    %1015 = vmatpush.msra.mxu0 0.0
    %1016 = vmatpush.msra.mxu0 0.0
    %1017 = vmatpush.msra.mxu0 0.0
    %1018 = vmatpush.msra.mxu0 0.0
    %1019 = vmatpush.msra.mxu0 0.0
    %1020 = vmatpush.msra.mxu0 0.0
    %1021 = vmatpush.msra.mxu0 0.0
    %1022 = vmatpush.msra.mxu0 %v981
    %1023 = vmatmul.f32.gmra.mxu0 %v977
    %v1024 = vpop.f32.mrf.mxu0
    %v1025 = vadd.f32 0.0, %v1024
    %1026 = vdwg.mxu0
    %1027 = vmatpush.msra.mxu0 0.0
    %1028 = vmatpush.msra.mxu0 0.0
    %1029 = vmatpush.msra.mxu0 0.0
    %1030 = vmatpush.msra.mxu0 0.0
    %1031 = vmatpush.msra.mxu0 0.0
    %1032 = vmatpush.msra.mxu0 0.0
    %1033 = vmatpush.msra.mxu0 0.0
    %1034 = vmatpush.msra.mxu0 0.0
    %1035 = vmatpush.msra.mxu0 0.0
    %1036 = vmatpush.msra.mxu0 0.0
    %1037 = vmatpush.msra.mxu0 0.0
    %1038 = vmatpush.msra.mxu0 0.0
    %1039 = vmatpush.msra.mxu0 0.0
    %1040 = vmatpush.msra.mxu0 0.0
    %1041 = vmatpush.msra.mxu0 0.0
    %1042 = vmatpush.msra.mxu0 %v983
    %1043 = vmatmul.f32.gmra.mxu0 %v977
    %v1044 = vpop.f32.mrf.mxu0
    %v1045 = vadd.f32 0.0, %v1044
    %1046 = vdwg.mxu0
    %1047 = vmatpush.msra.mxu0 0.0
    %1048 = vmatpush.msra.mxu0 0.0
    %1049 = vmatpush.msra.mxu0 0.0
    %1050 = vmatpush.msra.mxu0 0.0
    %1051 = vmatpush.msra.mxu0 0.0
    %1052 = vmatpush.msra.mxu0 0.0
    %1053 = vmatpush.msra.mxu0 0.0
    %1054 = vmatpush.msra.mxu0 0.0
    %1055 = vmatpush.msra.mxu0 0.0
    %1056 = vmatpush.msra.mxu0 0.0
    %1057 = vmatpush.msra.mxu0 0.0
    %1058 = vmatpush.msra.mxu0 0.0
    %1059 = vmatpush.msra.mxu0 0.0
    %1060 = vmatpush.msra.mxu0 0.0
    %1061 = vmatpush.msra.mxu0 0.0
    %1062 = vmatpush.msra.mxu0 %v985
    %1063 = vmatmul.f32.gmra.mxu0 %v977
    %v1064 = vpop.f32.mrf.mxu0
    %v1065 = vadd.f32 0.0, %v1064
    %1066 = vdwg.mxu0
    %v1067 = vadd.f32 %v914, %v1005
    %v1068 = vadd.f32 %v915, %v1025
    %v1069 = vadd.f32 %v916, %v1045
    %v1070 = vadd.f32 %v917, %v1065
    %v1071 = vld [vmem:[%s0 + $0x4] sm:$0xff]
    %v1072 = vld [vmem:[%s0 + $0xc] sm:$0xff]
    %v1073 = vld [vmem:[%s0 + $0x14] sm:$0xf]
    %s1074 = scalar_lea.vmem %s7, 28
    %v1075 = vld [vmem:[%s1074] sm:$0xf]
    %v1077 = vperm.slane %v1075, 0
    %v1078 = vperm.slane %v1075, 1
    %v1079 = vperm.slane %v1075, 2
    %v1080 = vperm.slane %v1075, 3
    %v1081 = vrot.slane %v1078, 4
    %v1082 = vrot.slane %v1080, 4
    %v1083 = vsel %vm44, %v1077, %v1081
    %v1084 = vsel %vm44, %v1079, %v1082
    %1085 = vrot.lane.b32.xlu0 %v1083, 16
    %v1086 = vpop.permute.xlu0 %1085
    %1087 = vrot.lane.b32.xlu0 %v1084, 16
    %v1088 = vpop.permute.xlu0 %1087
    %v1089 = vrot.slane %v1086, 4
    %v1090 = vrot.slane %v1088, 4
    %v1091 = vsel %vm116, %v1089, %v1086
    %v1092 = vsel %vm44, %v1089, %v1090
    %v1093 = vsel %vm116, %v1092, %v1088
    %v1097 = vmul.f32 %v1071, %v1091
    %v1098 = vmul.f32 %v1072, %v1093
    %v1099 = vmul.f32 %v1073, %v1090
    %s1100 = scalar_lea.vmem %s1, 56
    %v1101 = vld [vmem:[%s1100] sm:$0xff]
    %1105 = vst [vmem:[#allocation1] ss:$2 sm:$0xff] %v1097
    %s1106 = scalar_lea.vmem [#allocation1], 16
    %1107 = vst [vmem:[%s1106] ss:$2 sm:$0xff] %v1098
    %s1108 = scalar_lea.vmem [#allocation1], 32
    %1109 = vst [vmem:[%s1108] ss:$2 sm:$0xff] %v1099
    %v1110 = vld.sshfl [vmem:[#allocation1] sm:$0xff pattern:$0x75316420]
    %v1111 = vld.sshfl [vmem:[#allocation1 + $0x8] sm:$0xff pattern:$0x75316420]
    %v1112 = vld.sshfl [vmem:[#allocation1 + $0x10] sm:$0xff pattern:$0x75316420]
    %v1113 = vld.sshfl [vmem:[#allocation1 + $0x18] sm:$0xff pattern:$0x75316420]
    %v1114 = vld.sshfl [vmem:[#allocation1 + $0x20] sm:$0xff pattern:$0x75316420]
    %1115 = vrot.lane.b32.xlu0 %v1110, 112
    %v1116 = vpop.permute.xlu0 %1115
    %1117 = vrot.lane.b32.xlu0 %v1111, 112
    %v1118 = vpop.permute.xlu0 %1117
    %1119 = vrot.lane.b32.xlu0 %v1112, 112
    %v1120 = vpop.permute.xlu0 %1119
    %1121 = vrot.lane.b32.xlu0 %v1113, 112
    %v1122 = vpop.permute.xlu0 %1121
    %1123 = vrot.lane.b32.xlu0 %v1114, 112
    %v1124 = vpop.permute.xlu0 %1123
    %v1125 = vsel %vm81, %v1116, %v1118
    %v1126 = vsel %vm81, %v1118, %v1120
    %v1127 = vsel %vm81, %v1120, %v1122
    %v1128 = vsel %vm81, %v1122, %v1124
    %v1130 = vsel %vm121, %v1101, 0
    %v1132 = vsel %vm44, %v1125, 0
    %v1134 = vsel %vm44, %v1126, 0
    %v1136 = vsel %vm44, %v1127, 0
    %v1138 = vsel %vm44, %v1128, 0
    %1140 = vmatpush.msra.mxu0 0.0
    %1141 = vmatpush.msra.mxu0 0.0
    %1142 = vmatpush.msra.mxu0 0.0
    %1143 = vmatpush.msra.mxu0 0.0
    %1144 = vmatpush.msra.mxu0 0.0
    %1145 = vmatpush.msra.mxu0 0.0
    %1146 = vmatpush.msra.mxu0 0.0
    %1147 = vmatpush.msra.mxu0 0.0
    %1148 = vmatpush.msra.mxu0 0.0
    %1149 = vmatpush.msra.mxu0 0.0
    %1150 = vmatpush.msra.mxu0 0.0
    %1151 = vmatpush.msra.mxu0 0.0
    %1152 = vmatpush.msra.mxu0 0.0
    %1153 = vmatpush.msra.mxu0 0.0
    %1154 = vmatpush.msra.mxu0 0.0
    %1155 = vmatpush.msra.mxu0 %v1132
    %1156 = vmatmul.f32.gmra.mxu0 %v1130
    %v1157 = vpop.f32.mrf.mxu0
    %v1158 = vadd.f32 0.0, %v1157
    %1159 = vdwg.mxu0
    %1160 = vmatpush.msra.mxu0 0.0
    %1161 = vmatpush.msra.mxu0 0.0
    %1162 = vmatpush.msra.mxu0 0.0
    %1163 = vmatpush.msra.mxu0 0.0
    %1164 = vmatpush.msra.mxu0 0.0
    %1165 = vmatpush.msra.mxu0 0.0
    %1166 = vmatpush.msra.mxu0 0.0
    %1167 = vmatpush.msra.mxu0 0.0
    %1168 = vmatpush.msra.mxu0 0.0
    %1169 = vmatpush.msra.mxu0 0.0
    %1170 = vmatpush.msra.mxu0 0.0
    %1171 = vmatpush.msra.mxu0 0.0
    %1172 = vmatpush.msra.mxu0 0.0
    %1173 = vmatpush.msra.mxu0 0.0
    %1174 = vmatpush.msra.mxu0 0.0
    %1175 = vmatpush.msra.mxu0 %v1134
    %1176 = vmatmul.f32.gmra.mxu0 %v1130
    %v1177 = vpop.f32.mrf.mxu0
    %v1178 = vadd.f32 0.0, %v1177
    %1179 = vdwg.mxu0
    %1180 = vmatpush.msra.mxu0 0.0
    %1181 = vmatpush.msra.mxu0 0.0
    %1182 = vmatpush.msra.mxu0 0.0
    %1183 = vmatpush.msra.mxu0 0.0
    %1184 = vmatpush.msra.mxu0 0.0
    %1185 = vmatpush.msra.mxu0 0.0
    %1186 = vmatpush.msra.mxu0 0.0
    %1187 = vmatpush.msra.mxu0 0.0
    %1188 = vmatpush.msra.mxu0 0.0
    %1189 = vmatpush.msra.mxu0 0.0
    %1190 = vmatpush.msra.mxu0 0.0
    %1191 = vmatpush.msra.mxu0 0.0
    %1192 = vmatpush.msra.mxu0 0.0
    %1193 = vmatpush.msra.mxu0 0.0
    %1194 = vmatpush.msra.mxu0 0.0
    %1195 = vmatpush.msra.mxu0 %v1136
    %1196 = vmatmul.f32.gmra.mxu0 %v1130
    %v1197 = vpop.f32.mrf.mxu0
    %v1198 = vadd.f32 0.0, %v1197
    %1199 = vdwg.mxu0
    %1200 = vmatpush.msra.mxu0 0.0
    %1201 = vmatpush.msra.mxu0 0.0
    %1202 = vmatpush.msra.mxu0 0.0
    %1203 = vmatpush.msra.mxu0 0.0
    %1204 = vmatpush.msra.mxu0 0.0
    %1205 = vmatpush.msra.mxu0 0.0
    %1206 = vmatpush.msra.mxu0 0.0
    %1207 = vmatpush.msra.mxu0 0.0
    %1208 = vmatpush.msra.mxu0 0.0
    %1209 = vmatpush.msra.mxu0 0.0
    %1210 = vmatpush.msra.mxu0 0.0
    %1211 = vmatpush.msra.mxu0 0.0
    %1212 = vmatpush.msra.mxu0 0.0
    %1213 = vmatpush.msra.mxu0 0.0
    %1214 = vmatpush.msra.mxu0 0.0
    %1215 = vmatpush.msra.mxu0 %v1138
    %1216 = vmatmul.f32.gmra.mxu0 %v1130
    %v1217 = vpop.f32.mrf.mxu0
    %v1218 = vadd.f32 0.0, %v1217
    %1219 = vdwg.mxu0
    %v1220 = vadd.f32 %v1067, %v1158
    %v1221 = vadd.f32 %v1068, %v1178
    %v1222 = vadd.f32 %v1069, %v1198
    %v1223 = vadd.f32 %v1070, %v1218
    %v1224 = vld [vmem:[%s0 + $0x4] sm:$0xff]
    %v1225 = vld [vmem:[%s0 + $0xc] sm:$0xff]
    %v1226 = vld [vmem:[%s0 + $0x14] sm:$0xf]
    %s1227 = scalar_lea.vmem %s7, 32
    %v1228 = vld [vmem:[%s1227] sm:$0xf]
    %v1230 = vperm.slane %v1228, 0
    %v1231 = vperm.slane %v1228, 1
    %v1232 = vperm.slane %v1228, 2
    %v1233 = vperm.slane %v1228, 3
    %v1234 = vrot.slane %v1231, 4
    %v1235 = vrot.slane %v1233, 4
    %v1236 = vsel %vm44, %v1230, %v1234
    %v1237 = vsel %vm44, %v1232, %v1235
    %1238 = vrot.lane.b32.xlu0 %v1236, 17
    %v1239 = vpop.permute.xlu0 %1238
    %1240 = vrot.lane.b32.xlu0 %v1237, 17
    %v1241 = vpop.permute.xlu0 %1240
    %v1242 = vrot.slane %v1239, 4
    %v1243 = vrot.slane %v1241, 4
    %v1244 = vsel %vm236, %v1242, %v1239
    %v1245 = vsel %vm44, %v1242, %v1243
    %v1246 = vsel %vm236, %v1245, %v1241
    %v1250 = vmul.f32 %v1224, %v1244
    %v1251 = vmul.f32 %v1225, %v1246
    %v1252 = vmul.f32 %v1226, %v1243
    %s1253 = scalar_lea.vmem %s1, 64
    %v1254 = vld [vmem:[%s1253] sm:$0xff]
    %1258 = vst [vmem:[#allocation1] ss:$2 sm:$0xff] %v1250
    %s1259 = scalar_lea.vmem [#allocation1], 16
    %1260 = vst [vmem:[%s1259] ss:$2 sm:$0xff] %v1251
    %s1261 = scalar_lea.vmem [#allocation1], 32
    %1262 = vst [vmem:[%s1261] ss:$2 sm:$0xff] %v1252
    %v1263 = vld.sshfl [vmem:[#allocation1] sm:$0xff pattern:$0x75316420]
    %v1264 = vld.sshfl [vmem:[#allocation1 + $0x8] sm:$0xff pattern:$0x75316420]
    %v1265 = vld.sshfl [vmem:[#allocation1 + $0x10] sm:$0xff pattern:$0x75316420]
    %v1266 = vld.sshfl [vmem:[#allocation1 + $0x18] sm:$0xff pattern:$0x75316420]
    %v1267 = vld.sshfl [vmem:[#allocation1 + $0x20] sm:$0xff pattern:$0x75316420]
    %1268 = vrot.lane.b32.xlu0 %v1263, 111
    %v1269 = vpop.permute.xlu0 %1268
    %1270 = vrot.lane.b32.xlu0 %v1264, 111
    %v1271 = vpop.permute.xlu0 %1270
    %1272 = vrot.lane.b32.xlu0 %v1265, 111
    %v1273 = vpop.permute.xlu0 %1272
    %1274 = vrot.lane.b32.xlu0 %v1266, 111
    %v1275 = vpop.permute.xlu0 %1274
    %1276 = vrot.lane.b32.xlu0 %v1267, 111
    %v1277 = vpop.permute.xlu0 %1276
    %v1278 = vsel %vm53, %v1269, %v1271
    %v1279 = vsel %vm53, %v1271, %v1273
    %v1280 = vsel %vm53, %v1273, %v1275
    %v1281 = vsel %vm53, %v1275, %v1277
    %v1283 = vsel %vm121, %v1254, 0
    %v1285 = vsel %vm44, %v1278, 0
    %v1287 = vsel %vm44, %v1279, 0
    %v1289 = vsel %vm44, %v1280, 0
    %v1291 = vsel %vm44, %v1281, 0
    %1293 = vmatpush.msra.mxu0 0.0
    %1294 = vmatpush.msra.mxu0 0.0
    %1295 = vmatpush.msra.mxu0 0.0
    %1296 = vmatpush.msra.mxu0 0.0
    %1297 = vmatpush.msra.mxu0 0.0
    %1298 = vmatpush.msra.mxu0 0.0
    %1299 = vmatpush.msra.mxu0 0.0
    %1300 = vmatpush.msra.mxu0 0.0
    %1301 = vmatpush.msra.mxu0 0.0
    %1302 = vmatpush.msra.mxu0 0.0
    %1303 = vmatpush.msra.mxu0 0.0
    %1304 = vmatpush.msra.mxu0 0.0
    %1305 = vmatpush.msra.mxu0 0.0
    %1306 = vmatpush.msra.mxu0 0.0
    %1307 = vmatpush.msra.mxu0 0.0
    %1308 = vmatpush.msra.mxu0 %v1285
    %1309 = vmatmul.f32.gmra.mxu0 %v1283
    %v1310 = vpop.f32.mrf.mxu0
    %v1311 = vadd.f32 0.0, %v1310
    %1312 = vdwg.mxu0
    %1313 = vmatpush.msra.mxu0 0.0
    %1314 = vmatpush.msra.mxu0 0.0
    %1315 = vmatpush.msra.mxu0 0.0
    %1316 = vmatpush.msra.mxu0 0.0
    %1317 = vmatpush.msra.mxu0 0.0
    %1318 = vmatpush.msra.mxu0 0.0
    %1319 = vmatpush.msra.mxu0 0.0
    %1320 = vmatpush.msra.mxu0 0.0
    %1321 = vmatpush.msra.mxu0 0.0
    %1322 = vmatpush.msra.mxu0 0.0
    %1323 = vmatpush.msra.mxu0 0.0
    %1324 = vmatpush.msra.mxu0 0.0
    %1325 = vmatpush.msra.mxu0 0.0
    %1326 = vmatpush.msra.mxu0 0.0
    %1327 = vmatpush.msra.mxu0 0.0
    %1328 = vmatpush.msra.mxu0 %v1287
    %1329 = vmatmul.f32.gmra.mxu0 %v1283
    %v1330 = vpop.f32.mrf.mxu0
    %v1331 = vadd.f32 0.0, %v1330
    %1332 = vdwg.mxu0
    %1333 = vmatpush.msra.mxu0 0.0
    %1334 = vmatpush.msra.mxu0 0.0
    %1335 = vmatpush.msra.mxu0 0.0
    %1336 = vmatpush.msra.mxu0 0.0
    %1337 = vmatpush.msra.mxu0 0.0
    %1338 = vmatpush.msra.mxu0 0.0
    %1339 = vmatpush.msra.mxu0 0.0
    %1340 = vmatpush.msra.mxu0 0.0
    %1341 = vmatpush.msra.mxu0 0.0
    %1342 = vmatpush.msra.mxu0 0.0
    %1343 = vmatpush.msra.mxu0 0.0
    %1344 = vmatpush.msra.mxu0 0.0
    %1345 = vmatpush.msra.mxu0 0.0
    %1346 = vmatpush.msra.mxu0 0.0
    %1347 = vmatpush.msra.mxu0 0.0
    %1348 = vmatpush.msra.mxu0 %v1289
    %1349 = vmatmul.f32.gmra.mxu0 %v1283
    %v1350 = vpop.f32.mrf.mxu0
    %v1351 = vadd.f32 0.0, %v1350
    %1352 = vdwg.mxu0
    %1353 = vmatpush.msra.mxu0 0.0
    %1354 = vmatpush.msra.mxu0 0.0
    %1355 = vmatpush.msra.mxu0 0.0
    %1356 = vmatpush.msra.mxu0 0.0
    %1357 = vmatpush.msra.mxu0 0.0
    %1358 = vmatpush.msra.mxu0 0.0
    %1359 = vmatpush.msra.mxu0 0.0
    %1360 = vmatpush.msra.mxu0 0.0
    %1361 = vmatpush.msra.mxu0 0.0
    %1362 = vmatpush.msra.mxu0 0.0
    %1363 = vmatpush.msra.mxu0 0.0
    %1364 = vmatpush.msra.mxu0 0.0
    %1365 = vmatpush.msra.mxu0 0.0
    %1366 = vmatpush.msra.mxu0 0.0
    %1367 = vmatpush.msra.mxu0 0.0
    %1368 = vmatpush.msra.mxu0 %v1291
    %1369 = vmatmul.f32.gmra.mxu0 %v1283
    %v1370 = vpop.f32.mrf.mxu0
    %v1371 = vadd.f32 0.0, %v1370
    %1372 = vdwg.mxu0
    %v1373 = vadd.f32 %v1220, %v1311
    %v1374 = vadd.f32 %v1221, %v1331
    %v1375 = vadd.f32 %v1222, %v1351
    %v1376 = vadd.f32 %v1223, %v1371
    %v1377 = vld [vmem:[%s2] sm:$0xff]
    %1379 = vset.pattern.permute.xlu0 0
    %1380 = vperm.xlu0 %1379, %v1377
    %v1381 = vpop.permute.xlu0 %1380
    %v1383 = vadd.f32 %v1373, %v1381
    %v1384 = vadd.f32 %v1374, %v1381
    %v1385 = vadd.f32 %v1375, %v1381
    %v1386 = vadd.f32 %v1376, %v1381
    %v1387 = vmul.f32 %v1383, 0.2
    %v1388 = vmul.f32 %v1384, 0.2
    %v1389 = vmul.f32 %v1385, 0.2
    %v1390 = vmul.f32 %v1386, 0.2
    %v1391 = vmax.f32 %v1383, %v1387
    %v1392 = vmax.f32 %v1384, %v1388
    %v1393 = vmax.f32 %v1385, %v1389
    %v1394 = vmax.f32 %v1386, %v1390
    %1395 = vst [vmem:[#allocation2] sm:$0xff] 0.0
    %1396 = vst [vmem:[#allocation2 + $0x28] sm:$0xff] 0.0
    %1397 = vst [vmem:[#allocation2 + $0x8] sm:$0xff] %v1391
    %1398 = vst [vmem:[#allocation2 + $0x10] sm:$0xff] %v1392
    %1399 = vst [vmem:[#allocation2 + $0x18] sm:$0xff] %v1393
    %1400 = vst [vmem:[#allocation2 + $0x20] sm:$0xff] %v1394
    %v1401 = vld [vmem:[#allocation2] sm:$0xff]
    %v1402 = vld [vmem:[#allocation2 + $0x8] sm:$0xff]
    %v1403 = vld [vmem:[#allocation2 + $0x10] sm:$0xff]
    %v1404 = vld [vmem:[#allocation2 + $0x18] sm:$0xff]
    %v1405 = vld [vmem:[#allocation2 + $0x20] sm:$0xff]
    %v1406 = vld [vmem:[%s7] sm:$0xf]
    %v1408 = vperm.slane %v1406, 0
    %v1409 = vperm.slane %v1406, 1
    %v1410 = vperm.slane %v1406, 2
    %v1411 = vperm.slane %v1406, 3
    %1412 = vrot.lane.b32.xlu0 %v1408, 111
    %v1413 = vpop.permute.xlu0 %1412
    %1414 = vrot.lane.b32.xlu0 %v1409, 111
    %v1415 = vpop.permute.xlu0 %1414
    %1416 = vrot.lane.b32.xlu0 %v1410, 111
    %v1417 = vpop.permute.xlu0 %1416
    %1418 = vrot.lane.b32.xlu0 %v1411, 111
    %v1419 = vpop.permute.xlu0 %1418
    %v1420 = vsel %vm53, %v1413, %v1415
    %v1421 = vsel %vm53, %v1415, %v1417
    %v1422 = vsel %vm53, %v1417, %v1419
    %v1428 = vmul.f32 %v1401, %v1413
    %v1429 = vmul.f32 %v1402, %v1420
    %v1430 = vmul.f32 %v1403, %v1421
    %v1431 = vmul.f32 %v1404, %v1422
    %v1432 = vmul.f32 %v1405, %v1419
    %v1433 = vld [vmem:[%s3] sm:$0xff]
    %v1434 = vld [vmem:[%s64] sm:$0xf]
    %v1436 = vperm.slane %v1434, 0
    %v1437 = vperm.slane %v1434, 1
    %v1438 = vperm.slane %v1434, 2
    %v1439 = vperm.slane %v1434, 3
    %1440 = vrot.lane.b32.xlu0 %v1436, 112
    %v1441 = vpop.permute.xlu0 %1440
    %1442 = vrot.lane.b32.xlu0 %v1437, 112
    %v1443 = vpop.permute.xlu0 %1442
    %1444 = vrot.lane.b32.xlu0 %v1438, 112
    %v1445 = vpop.permute.xlu0 %1444
    %1446 = vrot.lane.b32.xlu0 %v1439, 112
    %v1447 = vpop.permute.xlu0 %1446
    %v1448 = vsel %vm81, %v1441, %v1443
    %v1449 = vsel %vm81, %v1443, %v1445
    %v1450 = vsel %vm81, %v1445, %v1447
    %v1456 = vmul.f32 %v1401, %v1441
    %v1457 = vmul.f32 %v1402, %v1448
    %v1458 = vmul.f32 %v1403, %v1449
    %v1459 = vmul.f32 %v1404, %v1450
    %v1460 = vmul.f32 %v1405, %v1447
    %s1461 = scalar_lea.vmem %s3, 8
    %v1462 = vld [vmem:[%s1461] sm:$0xff]
    %1468 = vrot.lane.b32.xlu0 %v1456, 16
    %v1469 = vpop.permute.xlu0 %1468
    %1470 = vrot.lane.b32.xlu0 %v1457, 16
    %v1471 = vpop.permute.xlu0 %1470
    %1472 = vrot.lane.b32.xlu0 %v1458, 16
    %v1473 = vpop.permute.xlu0 %1472
    %1474 = vrot.lane.b32.xlu0 %v1459, 16
    %v1475 = vpop.permute.xlu0 %1474
    %1476 = vrot.lane.b32.xlu0 %v1460, 16
    %v1477 = vpop.permute.xlu0 %1476
    %v1478 = vsel %vm116, %v1469, %v1471
    %v1479 = vsel %vm116, %v1471, %v1473
    %v1480 = vsel %vm116, %v1473, %v1475
    %v1481 = vsel %vm116, %v1475, %v1477
    %vm1486 = vcmask 64512
    %v1488 = vsel %vm1486, %v1462, 0
    %1490 = vmatpush.msra.mxu0 0.0
    %1491 = vmatpush.msra.mxu0 0.0
    %1492 = vmatpush.msra.mxu0 0.0
    %1493 = vmatpush.msra.mxu0 0.0
    %1494 = vmatpush.msra.mxu0 0.0
    %1495 = vmatpush.msra.mxu0 0.0
    %1496 = vmatpush.msra.mxu0 0.0
    %1497 = vmatpush.msra.mxu0 0.0
    %1498 = vmatpush.msra.mxu0 0.0
    %1499 = vmatpush.msra.mxu0 0.0
    %1500 = vmatpush.msra.mxu0 0.0
    %1501 = vmatpush.msra.mxu0 0.0
    %1502 = vmatpush.msra.mxu0 0.0
    %1503 = vmatpush.msra.mxu0 0.0
    %1504 = vmatpush.msra.mxu0 0.0
    %1505 = vmatpush.msra.mxu0 %v1478
    %1506 = vmatmul.f32.gmra.mxu0 %v1488
    %v1507 = vpop.f32.mrf.mxu0
    %v1508 = vadd.f32 0.0, %v1507
    %1509 = vdwg.mxu0
    %1510 = vmatpush.msra.mxu0 0.0
    %1511 = vmatpush.msra.mxu0 0.0
    %1512 = vmatpush.msra.mxu0 0.0
    %1513 = vmatpush.msra.mxu0 0.0
    %1514 = vmatpush.msra.mxu0 0.0
    %1515 = vmatpush.msra.mxu0 0.0
    %1516 = vmatpush.msra.mxu0 0.0
    %1517 = vmatpush.msra.mxu0 0.0
    %1518 = vmatpush.msra.mxu0 0.0
    %1519 = vmatpush.msra.mxu0 0.0
    %1520 = vmatpush.msra.mxu0 0.0
    %1521 = vmatpush.msra.mxu0 0.0
    %1522 = vmatpush.msra.mxu0 0.0
    %1523 = vmatpush.msra.mxu0 0.0
    %1524 = vmatpush.msra.mxu0 0.0
    %1525 = vmatpush.msra.mxu0 %v1479
    %1526 = vmatmul.f32.gmra.mxu0 %v1488
    %v1527 = vpop.f32.mrf.mxu0
    %v1528 = vadd.f32 0.0, %v1527
    %1529 = vdwg.mxu0
    %1530 = vmatpush.msra.mxu0 0.0
    %1531 = vmatpush.msra.mxu0 0.0
    %1532 = vmatpush.msra.mxu0 0.0
    %1533 = vmatpush.msra.mxu0 0.0
    %1534 = vmatpush.msra.mxu0 0.0
    %1535 = vmatpush.msra.mxu0 0.0
    %1536 = vmatpush.msra.mxu0 0.0
    %1537 = vmatpush.msra.mxu0 0.0
    %1538 = vmatpush.msra.mxu0 0.0
    %1539 = vmatpush.msra.mxu0 0.0
    %1540 = vmatpush.msra.mxu0 0.0
    %1541 = vmatpush.msra.mxu0 0.0
    %1542 = vmatpush.msra.mxu0 0.0
    %1543 = vmatpush.msra.mxu0 0.0
    %1544 = vmatpush.msra.mxu0 0.0
    %1545 = vmatpush.msra.mxu0 %v1480
    %1546 = vmatmul.f32.gmra.mxu0 %v1488
    %v1547 = vpop.f32.mrf.mxu0
    %v1548 = vadd.f32 0.0, %v1547
    %1549 = vdwg.mxu0
    %1550 = vmatpush.msra.mxu0 0.0
    %1551 = vmatpush.msra.mxu0 0.0
    %1552 = vmatpush.msra.mxu0 0.0
    %1553 = vmatpush.msra.mxu0 0.0
    %1554 = vmatpush.msra.mxu0 0.0
    %1555 = vmatpush.msra.mxu0 0.0
    %1556 = vmatpush.msra.mxu0 0.0
    %1557 = vmatpush.msra.mxu0 0.0
    %1558 = vmatpush.msra.mxu0 0.0
    %1559 = vmatpush.msra.mxu0 0.0
    %1560 = vmatpush.msra.mxu0 0.0
    %1561 = vmatpush.msra.mxu0 0.0
    %1562 = vmatpush.msra.mxu0 0.0
    %1563 = vmatpush.msra.mxu0 0.0
    %1564 = vmatpush.msra.mxu0 0.0
    %1565 = vmatpush.msra.mxu0 %v1481
    %1566 = vmatmul.f32.gmra.mxu0 %v1488
    %v1567 = vpop.f32.mrf.mxu0
    %v1568 = vadd.f32 0.0, %v1567
    %1569 = vdwg.mxu0
    %1575 = vrot.lane.b32.xlu0 %v1428, 17
    %v1576 = vpop.permute.xlu0 %1575
    %1577 = vrot.lane.b32.xlu0 %v1429, 17
    %v1578 = vpop.permute.xlu0 %1577
    %1579 = vrot.lane.b32.xlu0 %v1430, 17
    %v1580 = vpop.permute.xlu0 %1579
    %1581 = vrot.lane.b32.xlu0 %v1431, 17
    %v1582 = vpop.permute.xlu0 %1581
    %1583 = vrot.lane.b32.xlu0 %v1432, 17
    %v1584 = vpop.permute.xlu0 %1583
    %v1585 = vsel %vm236, %v1576, %v1578
    %v1586 = vsel %vm236, %v1578, %v1580
    %v1587 = vsel %vm236, %v1580, %v1582
    %v1588 = vsel %vm236, %v1582, %v1584
    %v1594 = vsel %vm1486, %v1433, 0
    %1596 = vmatpush.msra.mxu0 0.0
    %1597 = vmatpush.msra.mxu0 0.0
    %1598 = vmatpush.msra.mxu0 0.0
    %1599 = vmatpush.msra.mxu0 0.0
    %1600 = vmatpush.msra.mxu0 0.0
    %1601 = vmatpush.msra.mxu0 0.0
    %1602 = vmatpush.msra.mxu0 0.0
    %1603 = vmatpush.msra.mxu0 0.0
    %1604 = vmatpush.msra.mxu0 0.0
    %1605 = vmatpush.msra.mxu0 0.0
    %1606 = vmatpush.msra.mxu0 0.0
    %1607 = vmatpush.msra.mxu0 0.0
    %1608 = vmatpush.msra.mxu0 0.0
    %1609 = vmatpush.msra.mxu0 0.0
    %1610 = vmatpush.msra.mxu0 0.0
    %1611 = vmatpush.msra.mxu0 %v1585
    %1612 = vmatmul.f32.gmra.mxu0 %v1594
    %v1613 = vpop.f32.mrf.mxu0
    %v1614 = vadd.f32 %v1508, %v1613
    %1615 = vdwg.mxu0
    %1616 = vmatpush.msra.mxu0 0.0
    %1617 = vmatpush.msra.mxu0 0.0
    %1618 = vmatpush.msra.mxu0 0.0
    %1619 = vmatpush.msra.mxu0 0.0
    %1620 = vmatpush.msra.mxu0 0.0
    %1621 = vmatpush.msra.mxu0 0.0
    %1622 = vmatpush.msra.mxu0 0.0
    %1623 = vmatpush.msra.mxu0 0.0
    %1624 = vmatpush.msra.mxu0 0.0
    %1625 = vmatpush.msra.mxu0 0.0
    %1626 = vmatpush.msra.mxu0 0.0
    %1627 = vmatpush.msra.mxu0 0.0
    %1628 = vmatpush.msra.mxu0 0.0
    %1629 = vmatpush.msra.mxu0 0.0
    %1630 = vmatpush.msra.mxu0 0.0
    %1631 = vmatpush.msra.mxu0 %v1586
    %1632 = vmatmul.f32.gmra.mxu0 %v1594
    %v1633 = vpop.f32.mrf.mxu0
    %v1634 = vadd.f32 %v1528, %v1633
    %1635 = vdwg.mxu0
    %1636 = vmatpush.msra.mxu0 0.0
    %1637 = vmatpush.msra.mxu0 0.0
    %1638 = vmatpush.msra.mxu0 0.0
    %1639 = vmatpush.msra.mxu0 0.0
    %1640 = vmatpush.msra.mxu0 0.0
    %1641 = vmatpush.msra.mxu0 0.0
    %1642 = vmatpush.msra.mxu0 0.0
    %1643 = vmatpush.msra.mxu0 0.0
    %1644 = vmatpush.msra.mxu0 0.0
    %1645 = vmatpush.msra.mxu0 0.0
    %1646 = vmatpush.msra.mxu0 0.0
    %1647 = vmatpush.msra.mxu0 0.0
    %1648 = vmatpush.msra.mxu0 0.0
    %1649 = vmatpush.msra.mxu0 0.0
    %1650 = vmatpush.msra.mxu0 0.0
    %1651 = vmatpush.msra.mxu0 %v1587
    %1652 = vmatmul.f32.gmra.mxu0 %v1594
    %v1653 = vpop.f32.mrf.mxu0
    %v1654 = vadd.f32 %v1548, %v1653
    %1655 = vdwg.mxu0
    %1656 = vmatpush.msra.mxu0 0.0
    %1657 = vmatpush.msra.mxu0 0.0
    %1658 = vmatpush.msra.mxu0 0.0
    %1659 = vmatpush.msra.mxu0 0.0
    %1660 = vmatpush.msra.mxu0 0.0
    %1661 = vmatpush.msra.mxu0 0.0
    %1662 = vmatpush.msra.mxu0 0.0
    %1663 = vmatpush.msra.mxu0 0.0
    %1664 = vmatpush.msra.mxu0 0.0
    %1665 = vmatpush.msra.mxu0 0.0
    %1666 = vmatpush.msra.mxu0 0.0
    %1667 = vmatpush.msra.mxu0 0.0
    %1668 = vmatpush.msra.mxu0 0.0
    %1669 = vmatpush.msra.mxu0 0.0
    %1670 = vmatpush.msra.mxu0 0.0
    %1671 = vmatpush.msra.mxu0 %v1588
    %1672 = vmatmul.f32.gmra.mxu0 %v1594
    %v1673 = vpop.f32.mrf.mxu0
    %v1674 = vadd.f32 %v1568, %v1673
    %1675 = vdwg.mxu0
    %v1676 = vld [vmem:[%s335] sm:$0xf]
    %v1678 = vperm.slane %v1676, 0
    %v1679 = vperm.slane %v1676, 1
    %v1680 = vperm.slane %v1676, 2
    %v1681 = vperm.slane %v1676, 3
    %1682 = vrot.lane.b32.xlu0 %v1678, 113
    %v1683 = vpop.permute.xlu0 %1682
    %1684 = vrot.lane.b32.xlu0 %v1679, 113
    %v1685 = vpop.permute.xlu0 %1684
    %1686 = vrot.lane.b32.xlu0 %v1680, 113
    %v1687 = vpop.permute.xlu0 %1686
    %1688 = vrot.lane.b32.xlu0 %v1681, 113
    %v1689 = vpop.permute.xlu0 %1688
    %v1690 = vsel %vm352, %v1683, %v1685
    %v1691 = vsel %vm352, %v1685, %v1687
    %v1692 = vsel %vm352, %v1687, %v1689
    %v1698 = vmul.f32 %v1401, %v1683
    %v1699 = vmul.f32 %v1402, %v1690
    %v1700 = vmul.f32 %v1403, %v1691
    %v1701 = vmul.f32 %v1404, %v1692
    %v1702 = vmul.f32 %v1405, %v1689
    %s1703 = scalar_lea.vmem %s3, 16
    %v1704 = vld [vmem:[%s1703] sm:$0xff]
    %1710 = vrot.lane.b32.xlu0 %v1698, 15
    %v1711 = vpop.permute.xlu0 %1710
    %1712 = vrot.lane.b32.xlu0 %v1699, 15
    %v1713 = vpop.permute.xlu0 %1712
    %1714 = vrot.lane.b32.xlu0 %v1700, 15
    %v1715 = vpop.permute.xlu0 %1714
    %1716 = vrot.lane.b32.xlu0 %v1701, 15
    %v1717 = vpop.permute.xlu0 %1716
    %1718 = vrot.lane.b32.xlu0 %v1702, 15
    %v1719 = vpop.permute.xlu0 %1718
    %v1720 = vsel %vm387, %v1711, %v1713
    %v1721 = vsel %vm387, %v1713, %v1715
    %v1722 = vsel %vm387, %v1715, %v1717
    %v1723 = vsel %vm387, %v1717, %v1719
    %v1729 = vsel %vm1486, %v1704, 0
    %1731 = vmatpush.msra.mxu0 0.0
    %1732 = vmatpush.msra.mxu0 0.0
    %1733 = vmatpush.msra.mxu0 0.0
    %1734 = vmatpush.msra.mxu0 0.0
    %1735 = vmatpush.msra.mxu0 0.0
    %1736 = vmatpush.msra.mxu0 0.0
    %1737 = vmatpush.msra.mxu0 0.0
    %1738 = vmatpush.msra.mxu0 0.0
    %1739 = vmatpush.msra.mxu0 0.0
    %1740 = vmatpush.msra.mxu0 0.0
    %1741 = vmatpush.msra.mxu0 0.0
    %1742 = vmatpush.msra.mxu0 0.0
    %1743 = vmatpush.msra.mxu0 0.0
    %1744 = vmatpush.msra.mxu0 0.0
    %1745 = vmatpush.msra.mxu0 0.0
    %1746 = vmatpush.msra.mxu0 %v1720
    %1747 = vmatmul.f32.gmra.mxu0 %v1729
    %v1748 = vpop.f32.mrf.mxu0
    %v1749 = vadd.f32 0.0, %v1748
    %1750 = vdwg.mxu0
    %1751 = vmatpush.msra.mxu0 0.0
    %1752 = vmatpush.msra.mxu0 0.0
    %1753 = vmatpush.msra.mxu0 0.0
    %1754 = vmatpush.msra.mxu0 0.0
    %1755 = vmatpush.msra.mxu0 0.0
    %1756 = vmatpush.msra.mxu0 0.0
    %1757 = vmatpush.msra.mxu0 0.0
    %1758 = vmatpush.msra.mxu0 0.0
    %1759 = vmatpush.msra.mxu0 0.0
    %1760 = vmatpush.msra.mxu0 0.0
    %1761 = vmatpush.msra.mxu0 0.0
    %1762 = vmatpush.msra.mxu0 0.0
    %1763 = vmatpush.msra.mxu0 0.0
    %1764 = vmatpush.msra.mxu0 0.0
    %1765 = vmatpush.msra.mxu0 0.0
    %1766 = vmatpush.msra.mxu0 %v1721
    %1767 = vmatmul.f32.gmra.mxu0 %v1729
    %v1768 = vpop.f32.mrf.mxu0
    %v1769 = vadd.f32 0.0, %v1768
    %1770 = vdwg.mxu0
    %1771 = vmatpush.msra.mxu0 0.0
    %1772 = vmatpush.msra.mxu0 0.0
    %1773 = vmatpush.msra.mxu0 0.0
    %1774 = vmatpush.msra.mxu0 0.0
    %1775 = vmatpush.msra.mxu0 0.0
    %1776 = vmatpush.msra.mxu0 0.0
    %1777 = vmatpush.msra.mxu0 0.0
    %1778 = vmatpush.msra.mxu0 0.0
    %1779 = vmatpush.msra.mxu0 0.0
    %1780 = vmatpush.msra.mxu0 0.0
    %1781 = vmatpush.msra.mxu0 0.0
    %1782 = vmatpush.msra.mxu0 0.0
    %1783 = vmatpush.msra.mxu0 0.0
    %1784 = vmatpush.msra.mxu0 0.0
    %1785 = vmatpush.msra.mxu0 0.0
    %1786 = vmatpush.msra.mxu0 %v1722
    %1787 = vmatmul.f32.gmra.mxu0 %v1729
    %v1788 = vpop.f32.mrf.mxu0
    %v1789 = vadd.f32 0.0, %v1788
    %1790 = vdwg.mxu0
    %1791 = vmatpush.msra.mxu0 0.0
    %1792 = vmatpush.msra.mxu0 0.0
    %1793 = vmatpush.msra.mxu0 0.0
    %1794 = vmatpush.msra.mxu0 0.0
    %1795 = vmatpush.msra.mxu0 0.0
    %1796 = vmatpush.msra.mxu0 0.0
    %1797 = vmatpush.msra.mxu0 0.0
    %1798 = vmatpush.msra.mxu0 0.0
    %1799 = vmatpush.msra.mxu0 0.0
    %1800 = vmatpush.msra.mxu0 0.0
    %1801 = vmatpush.msra.mxu0 0.0
    %1802 = vmatpush.msra.mxu0 0.0
    %1803 = vmatpush.msra.mxu0 0.0
    %1804 = vmatpush.msra.mxu0 0.0
    %1805 = vmatpush.msra.mxu0 0.0
    %1806 = vmatpush.msra.mxu0 %v1723
    %1807 = vmatmul.f32.gmra.mxu0 %v1729
    %v1808 = vpop.f32.mrf.mxu0
    %v1809 = vadd.f32 0.0, %v1808
    %1810 = vdwg.mxu0
    %v1811 = vadd.f32 %v1614, %v1749
    %v1812 = vadd.f32 %v1634, %v1769
    %v1813 = vadd.f32 %v1654, %v1789
    %v1814 = vadd.f32 %v1674, %v1809
    %v1815 = vld [vmem:[%s490] sm:$0xf]
    %v1817 = vperm.slane %v1815, 0
    %v1818 = vperm.slane %v1815, 1
    %v1819 = vperm.slane %v1815, 2
    %v1820 = vperm.slane %v1815, 3
    %1821 = vrot.lane.b32.xlu0 %v1817, 127
    %v1822 = vpop.permute.xlu0 %1821
    %1823 = vrot.lane.b32.xlu0 %v1818, 127
    %v1824 = vpop.permute.xlu0 %1823
    %1825 = vrot.lane.b32.xlu0 %v1819, 127
    %v1826 = vpop.permute.xlu0 %1825
    %1827 = vrot.lane.b32.xlu0 %v1820, 127
    %v1828 = vpop.permute.xlu0 %1827
    %v1829 = vsel %vm507, %v1822, %v1824
    %v1830 = vsel %vm507, %v1824, %v1826
    %v1831 = vsel %vm507, %v1826, %v1828
    %v1837 = vmul.f32 %v1401, %v1822
    %v1838 = vmul.f32 %v1402, %v1829
    %v1839 = vmul.f32 %v1403, %v1830
    %v1840 = vmul.f32 %v1404, %v1831
    %v1841 = vmul.f32 %v1405, %v1828
    %s1842 = scalar_lea.vmem %s3, 24
    %v1843 = vld [vmem:[%s1842] sm:$0xff]
    %1849 = vrot.lane.b32.xlu0 %v1837, 1
    %v1850 = vpop.permute.xlu0 %1849
    %1851 = vrot.lane.b32.xlu0 %v1838, 1
    %v1852 = vpop.permute.xlu0 %1851
    %1853 = vrot.lane.b32.xlu0 %v1839, 1
    %v1854 = vpop.permute.xlu0 %1853
    %1855 = vrot.lane.b32.xlu0 %v1840, 1
    %v1856 = vpop.permute.xlu0 %1855
    %1857 = vrot.lane.b32.xlu0 %v1841, 1
    %v1858 = vpop.permute.xlu0 %1857
    %v1859 = vsel %vm542, %v1850, %v1852
    %v1860 = vsel %vm542, %v1852, %v1854
    %v1861 = vsel %vm542, %v1854, %v1856
    %v1862 = vsel %vm542, %v1856, %v1858
    %v1868 = vsel %vm1486, %v1843, 0
    %1870 = vmatpush.msra.mxu0 0.0
    %1871 = vmatpush.msra.mxu0 0.0
    %1872 = vmatpush.msra.mxu0 0.0
    %1873 = vmatpush.msra.mxu0 0.0
    %1874 = vmatpush.msra.mxu0 0.0
    %1875 = vmatpush.msra.mxu0 0.0
    %1876 = vmatpush.msra.mxu0 0.0
    %1877 = vmatpush.msra.mxu0 0.0
    %1878 = vmatpush.msra.mxu0 0.0
    %1879 = vmatpush.msra.mxu0 0.0
    %1880 = vmatpush.msra.mxu0 0.0
    %1881 = vmatpush.msra.mxu0 0.0
    %1882 = vmatpush.msra.mxu0 0.0
    %1883 = vmatpush.msra.mxu0 0.0
    %1884 = vmatpush.msra.mxu0 0.0
    %1885 = vmatpush.msra.mxu0 %v1859
    %1886 = vmatmul.f32.gmra.mxu0 %v1868
    %v1887 = vpop.f32.mrf.mxu0
    %v1888 = vadd.f32 0.0, %v1887
    %1889 = vdwg.mxu0
    %1890 = vmatpush.msra.mxu0 0.0
    %1891 = vmatpush.msra.mxu0 0.0
    %1892 = vmatpush.msra.mxu0 0.0
    %1893 = vmatpush.msra.mxu0 0.0
    %1894 = vmatpush.msra.mxu0 0.0
    %1895 = vmatpush.msra.mxu0 0.0
    %1896 = vmatpush.msra.mxu0 0.0
    %1897 = vmatpush.msra.mxu0 0.0
    %1898 = vmatpush.msra.mxu0 0.0
    %1899 = vmatpush.msra.mxu0 0.0
    %1900 = vmatpush.msra.mxu0 0.0
    %1901 = vmatpush.msra.mxu0 0.0
    %1902 = vmatpush.msra.mxu0 0.0
    %1903 = vmatpush.msra.mxu0 0.0
    %1904 = vmatpush.msra.mxu0 0.0
    %1905 = vmatpush.msra.mxu0 %v1860
    %1906 = vmatmul.f32.gmra.mxu0 %v1868
    %v1907 = vpop.f32.mrf.mxu0
    %v1908 = vadd.f32 0.0, %v1907
    %1909 = vdwg.mxu0
    %1910 = vmatpush.msra.mxu0 0.0
    %1911 = vmatpush.msra.mxu0 0.0
    %1912 = vmatpush.msra.mxu0 0.0
    %1913 = vmatpush.msra.mxu0 0.0
    %1914 = vmatpush.msra.mxu0 0.0
    %1915 = vmatpush.msra.mxu0 0.0
    %1916 = vmatpush.msra.mxu0 0.0
    %1917 = vmatpush.msra.mxu0 0.0
    %1918 = vmatpush.msra.mxu0 0.0
    %1919 = vmatpush.msra.mxu0 0.0
    %1920 = vmatpush.msra.mxu0 0.0
    %1921 = vmatpush.msra.mxu0 0.0
    %1922 = vmatpush.msra.mxu0 0.0
    %1923 = vmatpush.msra.mxu0 0.0
    %1924 = vmatpush.msra.mxu0 0.0
    %1925 = vmatpush.msra.mxu0 %v1861
    %1926 = vmatmul.f32.gmra.mxu0 %v1868
    %v1927 = vpop.f32.mrf.mxu0
    %v1928 = vadd.f32 0.0, %v1927
    %1929 = vdwg.mxu0
    %1930 = vmatpush.msra.mxu0 0.0
    %1931 = vmatpush.msra.mxu0 0.0
    %1932 = vmatpush.msra.mxu0 0.0
    %1933 = vmatpush.msra.mxu0 0.0
    %1934 = vmatpush.msra.mxu0 0.0
    %1935 = vmatpush.msra.mxu0 0.0
    %1936 = vmatpush.msra.mxu0 0.0
    %1937 = vmatpush.msra.mxu0 0.0
    %1938 = vmatpush.msra.mxu0 0.0
    %1939 = vmatpush.msra.mxu0 0.0
    %1940 = vmatpush.msra.mxu0 0.0
    %1941 = vmatpush.msra.mxu0 0.0
    %1942 = vmatpush.msra.mxu0 0.0
    %1943 = vmatpush.msra.mxu0 0.0
    %1944 = vmatpush.msra.mxu0 0.0
    %1945 = vmatpush.msra.mxu0 %v1862
    %1946 = vmatmul.f32.gmra.mxu0 %v1868
    %v1947 = vpop.f32.mrf.mxu0
    %v1948 = vadd.f32 0.0, %v1947
    %1949 = vdwg.mxu0
    %v1950 = vadd.f32 %v1811, %v1888
    %v1951 = vadd.f32 %v1812, %v1908
    %v1952 = vadd.f32 %v1813, %v1928
    %v1953 = vadd.f32 %v1814, %v1948
    %v1954 = vld [vmem:[%s644] sm:$0xf]
    %v1956 = vperm.slane %v1954, 0
    %v1957 = vperm.slane %v1954, 1
    %v1958 = vperm.slane %v1954, 2
    %v1959 = vperm.slane %v1954, 3
    %v1964 = vmul.f32 %v1402, %v1956
    %v1965 = vmul.f32 %v1403, %v1957
    %v1966 = vmul.f32 %v1404, %v1958
    %v1967 = vmul.f32 %v1405, %v1959
    %s1968 = scalar_lea.vmem %s3, 32
    %v1969 = vld [vmem:[%s1968] sm:$0xff]
    %v1971 = vsel %vm1486, %v1969, 0
    %1973 = vmatpush.msra.mxu0 0.0
    %1974 = vmatpush.msra.mxu0 0.0
    %1975 = vmatpush.msra.mxu0 0.0
    %1976 = vmatpush.msra.mxu0 0.0
    %1977 = vmatpush.msra.mxu0 0.0
    %1978 = vmatpush.msra.mxu0 0.0
    %1979 = vmatpush.msra.mxu0 0.0
    %1980 = vmatpush.msra.mxu0 0.0
    %1981 = vmatpush.msra.mxu0 0.0
    %1982 = vmatpush.msra.mxu0 0.0
    %1983 = vmatpush.msra.mxu0 0.0
    %1984 = vmatpush.msra.mxu0 0.0
    %1985 = vmatpush.msra.mxu0 0.0
    %1986 = vmatpush.msra.mxu0 0.0
    %1987 = vmatpush.msra.mxu0 0.0
    %1988 = vmatpush.msra.mxu0 %v1964
    %1989 = vmatmul.f32.gmra.mxu0 %v1971
    %v1990 = vpop.f32.mrf.mxu0
    %v1991 = vadd.f32 0.0, %v1990
    %1992 = vdwg.mxu0
    %1993 = vmatpush.msra.mxu0 0.0
    %1994 = vmatpush.msra.mxu0 0.0
    %1995 = vmatpush.msra.mxu0 0.0
    %1996 = vmatpush.msra.mxu0 0.0
    %1997 = vmatpush.msra.mxu0 0.0
    %1998 = vmatpush.msra.mxu0 0.0
    %1999 = vmatpush.msra.mxu0 0.0
    %2000 = vmatpush.msra.mxu0 0.0
    %2001 = vmatpush.msra.mxu0 0.0
    %2002 = vmatpush.msra.mxu0 0.0
    %2003 = vmatpush.msra.mxu0 0.0
    %2004 = vmatpush.msra.mxu0 0.0
    %2005 = vmatpush.msra.mxu0 0.0
    %2006 = vmatpush.msra.mxu0 0.0
    %2007 = vmatpush.msra.mxu0 0.0
    %2008 = vmatpush.msra.mxu0 %v1965
    %2009 = vmatmul.f32.gmra.mxu0 %v1971
    %v2010 = vpop.f32.mrf.mxu0
    %v2011 = vadd.f32 0.0, %v2010
    %2012 = vdwg.mxu0
    %2013 = vmatpush.msra.mxu0 0.0
    %2014 = vmatpush.msra.mxu0 0.0
    %2015 = vmatpush.msra.mxu0 0.0
    %2016 = vmatpush.msra.mxu0 0.0
    %2017 = vmatpush.msra.mxu0 0.0
    %2018 = vmatpush.msra.mxu0 0.0
    %2019 = vmatpush.msra.mxu0 0.0
    %2020 = vmatpush.msra.mxu0 0.0
    %2021 = vmatpush.msra.mxu0 0.0
    %2022 = vmatpush.msra.mxu0 0.0
    %2023 = vmatpush.msra.mxu0 0.0
    %2024 = vmatpush.msra.mxu0 0.0
    %2025 = vmatpush.msra.mxu0 0.0
    %2026 = vmatpush.msra.mxu0 0.0
    %2027 = vmatpush.msra.mxu0 0.0
    %2028 = vmatpush.msra.mxu0 %v1966
    %2029 = vmatmul.f32.gmra.mxu0 %v1971
    %v2030 = vpop.f32.mrf.mxu0
    %v2031 = vadd.f32 0.0, %v2030
    %2032 = vdwg.mxu0
    %2033 = vmatpush.msra.mxu0 0.0
    %2034 = vmatpush.msra.mxu0 0.0
    %2035 = vmatpush.msra.mxu0 0.0
    %2036 = vmatpush.msra.mxu0 0.0
    %2037 = vmatpush.msra.mxu0 0.0
    %2038 = vmatpush.msra.mxu0 0.0
    %2039 = vmatpush.msra.mxu0 0.0
    %2040 = vmatpush.msra.mxu0 0.0
    %2041 = vmatpush.msra.mxu0 0.0
    %2042 = vmatpush.msra.mxu0 0.0
    %2043 = vmatpush.msra.mxu0 0.0
    %2044 = vmatpush.msra.mxu0 0.0
    %2045 = vmatpush.msra.mxu0 0.0
    %2046 = vmatpush.msra.mxu0 0.0
    %2047 = vmatpush.msra.mxu0 0.0
    %2048 = vmatpush.msra.mxu0 %v1967
    %2049 = vmatmul.f32.gmra.mxu0 %v1971
    %v2050 = vpop.f32.mrf.mxu0
    %v2051 = vadd.f32 0.0, %v2050
    %2052 = vdwg.mxu0
    %v2053 = vadd.f32 %v1950, %v1991
    %v2054 = vadd.f32 %v1951, %v2011
    %v2055 = vadd.f32 %v1952, %v2031
    %v2056 = vadd.f32 %v1953, %v2051
    %v2057 = vld [vmem:[#allocation2 + $0x8] sm:$0xff]
    %v2058 = vld [vmem:[#allocation2 + $0x10] sm:$0xff]
    %v2059 = vld [vmem:[#allocation2 + $0x18] sm:$0xff]
    %v2060 = vld [vmem:[#allocation2 + $0x20] sm:$0xff]
    %v2061 = vld [vmem:[#allocation2 + $0x28] sm:$0xff]
    %v2062 = vld [vmem:[%s768] sm:$0xf]
    %v2064 = vperm.slane %v2062, 0
    %v2065 = vperm.slane %v2062, 1
    %v2066 = vperm.slane %v2062, 2
    %v2067 = vperm.slane %v2062, 3
    %2068 = vrot.lane.b32.xlu0 %v2064, 1
    %v2069 = vpop.permute.xlu0 %2068
    %2070 = vrot.lane.b32.xlu0 %v2065, 1
    %v2071 = vpop.permute.xlu0 %2070
    %2072 = vrot.lane.b32.xlu0 %v2066, 1
    %v2073 = vpop.permute.xlu0 %2072
    %2074 = vrot.lane.b32.xlu0 %v2067, 1
    %v2075 = vpop.permute.xlu0 %2074
    %v2076 = vsel %vm542, %v2069, %v2071
    %v2077 = vsel %vm542, %v2071, %v2073
    %v2078 = vsel %vm542, %v2073, %v2075
    %v2084 = vmul.f32 %v2057, %v2069
    %v2085 = vmul.f32 %v2058, %v2076
    %v2086 = vmul.f32 %v2059, %v2077
    %v2087 = vmul.f32 %v2060, %v2078
    %v2088 = vmul.f32 %v2061, %v2075
    %s2089 = scalar_lea.vmem %s3, 40
    %v2090 = vld [vmem:[%s2089] sm:$0xff]
    %2096 = vrot.lane.b32.xlu0 %v2084, 127
    %v2097 = vpop.permute.xlu0 %2096
    %2098 = vrot.lane.b32.xlu0 %v2085, 127
    %v2099 = vpop.permute.xlu0 %2098
    %2100 = vrot.lane.b32.xlu0 %v2086, 127
    %v2101 = vpop.permute.xlu0 %2100
    %2102 = vrot.lane.b32.xlu0 %v2087, 127
    %v2103 = vpop.permute.xlu0 %2102
    %2104 = vrot.lane.b32.xlu0 %v2088, 127
    %v2105 = vpop.permute.xlu0 %2104
    %v2106 = vsel %vm507, %v2097, %v2099
    %v2107 = vsel %vm507, %v2099, %v2101
    %v2108 = vsel %vm507, %v2101, %v2103
    %v2109 = vsel %vm507, %v2103, %v2105
    %v2115 = vsel %vm1486, %v2090, 0
    %2117 = vmatpush.msra.mxu0 0.0
    %2118 = vmatpush.msra.mxu0 0.0
    %2119 = vmatpush.msra.mxu0 0.0
    %2120 = vmatpush.msra.mxu0 0.0
    %2121 = vmatpush.msra.mxu0 0.0
    %2122 = vmatpush.msra.mxu0 0.0
    %2123 = vmatpush.msra.mxu0 0.0
    %2124 = vmatpush.msra.mxu0 0.0
    %2125 = vmatpush.msra.mxu0 0.0
    %2126 = vmatpush.msra.mxu0 0.0
    %2127 = vmatpush.msra.mxu0 0.0
    %2128 = vmatpush.msra.mxu0 0.0
    %2129 = vmatpush.msra.mxu0 0.0
    %2130 = vmatpush.msra.mxu0 0.0
    %2131 = vmatpush.msra.mxu0 0.0
    %2132 = vmatpush.msra.mxu0 %v2106
    %2133 = vmatmul.f32.gmra.mxu0 %v2115
    %v2134 = vpop.f32.mrf.mxu0
    %v2135 = vadd.f32 0.0, %v2134
    %2136 = vdwg.mxu0
    %2137 = vmatpush.msra.mxu0 0.0
    %2138 = vmatpush.msra.mxu0 0.0
    %2139 = vmatpush.msra.mxu0 0.0
    %2140 = vmatpush.msra.mxu0 0.0
    %2141 = vmatpush.msra.mxu0 0.0
    %2142 = vmatpush.msra.mxu0 0.0
    %2143 = vmatpush.msra.mxu0 0.0
    %2144 = vmatpush.msra.mxu0 0.0
    %2145 = vmatpush.msra.mxu0 0.0
    %2146 = vmatpush.msra.mxu0 0.0
    %2147 = vmatpush.msra.mxu0 0.0
    %2148 = vmatpush.msra.mxu0 0.0
    %2149 = vmatpush.msra.mxu0 0.0
    %2150 = vmatpush.msra.mxu0 0.0
    %2151 = vmatpush.msra.mxu0 0.0
    %2152 = vmatpush.msra.mxu0 %v2107
    %2153 = vmatmul.f32.gmra.mxu0 %v2115
    %v2154 = vpop.f32.mrf.mxu0
    %v2155 = vadd.f32 0.0, %v2154
    %2156 = vdwg.mxu0
    %2157 = vmatpush.msra.mxu0 0.0
    %2158 = vmatpush.msra.mxu0 0.0
    %2159 = vmatpush.msra.mxu0 0.0
    %2160 = vmatpush.msra.mxu0 0.0
    %2161 = vmatpush.msra.mxu0 0.0
    %2162 = vmatpush.msra.mxu0 0.0
    %2163 = vmatpush.msra.mxu0 0.0
    %2164 = vmatpush.msra.mxu0 0.0
    %2165 = vmatpush.msra.mxu0 0.0
    %2166 = vmatpush.msra.mxu0 0.0
    %2167 = vmatpush.msra.mxu0 0.0
    %2168 = vmatpush.msra.mxu0 0.0
    %2169 = vmatpush.msra.mxu0 0.0
    %2170 = vmatpush.msra.mxu0 0.0
    %2171 = vmatpush.msra.mxu0 0.0
    %2172 = vmatpush.msra.mxu0 %v2108
    %2173 = vmatmul.f32.gmra.mxu0 %v2115
    %v2174 = vpop.f32.mrf.mxu0
    %v2175 = vadd.f32 0.0, %v2174
    %2176 = vdwg.mxu0
    %2177 = vmatpush.msra.mxu0 0.0
    %2178 = vmatpush.msra.mxu0 0.0
    %2179 = vmatpush.msra.mxu0 0.0
    %2180 = vmatpush.msra.mxu0 0.0
    %2181 = vmatpush.msra.mxu0 0.0
    %2182 = vmatpush.msra.mxu0 0.0
    %2183 = vmatpush.msra.mxu0 0.0
    %2184 = vmatpush.msra.mxu0 0.0
    %2185 = vmatpush.msra.mxu0 0.0
    %2186 = vmatpush.msra.mxu0 0.0
    %2187 = vmatpush.msra.mxu0 0.0
    %2188 = vmatpush.msra.mxu0 0.0
    %2189 = vmatpush.msra.mxu0 0.0
    %2190 = vmatpush.msra.mxu0 0.0
    %2191 = vmatpush.msra.mxu0 0.0
    %2192 = vmatpush.msra.mxu0 %v2109
    %2193 = vmatmul.f32.gmra.mxu0 %v2115
    %v2194 = vpop.f32.mrf.mxu0
    %v2195 = vadd.f32 0.0, %v2194
    %2196 = vdwg.mxu0
    %v2197 = vadd.f32 %v2053, %v2135
    %v2198 = vadd.f32 %v2054, %v2155
    %v2199 = vadd.f32 %v2055, %v2175
    %v2200 = vadd.f32 %v2056, %v2195
    %v2201 = vld [vmem:[%s921] sm:$0xf]
    %v2203 = vperm.slane %v2201, 0
    %v2204 = vperm.slane %v2201, 1
    %v2205 = vperm.slane %v2201, 2
    %v2206 = vperm.slane %v2201, 3
    %2207 = vrot.lane.b32.xlu0 %v2203, 15
    %v2208 = vpop.permute.xlu0 %2207
    %2209 = vrot.lane.b32.xlu0 %v2204, 15
    %v2210 = vpop.permute.xlu0 %2209
    %2211 = vrot.lane.b32.xlu0 %v2205, 15
    %v2212 = vpop.permute.xlu0 %2211
    %2213 = vrot.lane.b32.xlu0 %v2206, 15
    %v2214 = vpop.permute.xlu0 %2213
    %v2215 = vsel %vm387, %v2208, %v2210
    %v2216 = vsel %vm387, %v2210, %v2212
    %v2217 = vsel %vm387, %v2212, %v2214
    %v2223 = vmul.f32 %v2057, %v2208
    %v2224 = vmul.f32 %v2058, %v2215
    %v2225 = vmul.f32 %v2059, %v2216
    %v2226 = vmul.f32 %v2060, %v2217
    %v2227 = vmul.f32 %v2061, %v2214
    %s2228 = scalar_lea.vmem %s3, 48
    %v2229 = vld [vmem:[%s2228] sm:$0xff]
    %2235 = vrot.lane.b32.xlu0 %v2223, 113
    %v2236 = vpop.permute.xlu0 %2235
    %2237 = vrot.lane.b32.xlu0 %v2224, 113
    %v2238 = vpop.permute.xlu0 %2237
    %2239 = vrot.lane.b32.xlu0 %v2225, 113
    %v2240 = vpop.permute.xlu0 %2239
    %2241 = vrot.lane.b32.xlu0 %v2226, 113
    %v2242 = vpop.permute.xlu0 %2241
    %2243 = vrot.lane.b32.xlu0 %v2227, 113
    %v2244 = vpop.permute.xlu0 %2243
    %v2245 = vsel %vm352, %v2236, %v2238
    %v2246 = vsel %vm352, %v2238, %v2240
    %v2247 = vsel %vm352, %v2240, %v2242
    %v2248 = vsel %vm352, %v2242, %v2244
    %v2254 = vsel %vm1486, %v2229, 0
    %2256 = vmatpush.msra.mxu0 0.0
    %2257 = vmatpush.msra.mxu0 0.0
    %2258 = vmatpush.msra.mxu0 0.0
    %2259 = vmatpush.msra.mxu0 0.0
    %2260 = vmatpush.msra.mxu0 0.0
    %2261 = vmatpush.msra.mxu0 0.0
    %2262 = vmatpush.msra.mxu0 0.0
    %2263 = vmatpush.msra.mxu0 0.0
    %2264 = vmatpush.msra.mxu0 0.0
    %2265 = vmatpush.msra.mxu0 0.0
    %2266 = vmatpush.msra.mxu0 0.0
    %2267 = vmatpush.msra.mxu0 0.0
    %2268 = vmatpush.msra.mxu0 0.0
    %2269 = vmatpush.msra.mxu0 0.0
    %2270 = vmatpush.msra.mxu0 0.0
    %2271 = vmatpush.msra.mxu0 %v2245
    %2272 = vmatmul.f32.gmra.mxu0 %v2254
    %v2273 = vpop.f32.mrf.mxu0
    %v2274 = vadd.f32 0.0, %v2273
    %2275 = vdwg.mxu0
    %2276 = vmatpush.msra.mxu0 0.0
    %2277 = vmatpush.msra.mxu0 0.0
    %2278 = vmatpush.msra.mxu0 0.0
    %2279 = vmatpush.msra.mxu0 0.0
    %2280 = vmatpush.msra.mxu0 0.0
    %2281 = vmatpush.msra.mxu0 0.0
    %2282 = vmatpush.msra.mxu0 0.0
    %2283 = vmatpush.msra.mxu0 0.0
    %2284 = vmatpush.msra.mxu0 0.0
    %2285 = vmatpush.msra.mxu0 0.0
    %2286 = vmatpush.msra.mxu0 0.0
    %2287 = vmatpush.msra.mxu0 0.0
    %2288 = vmatpush.msra.mxu0 0.0
    %2289 = vmatpush.msra.mxu0 0.0
    %2290 = vmatpush.msra.mxu0 0.0
    %2291 = vmatpush.msra.mxu0 %v2246
    %2292 = vmatmul.f32.gmra.mxu0 %v2254
    %v2293 = vpop.f32.mrf.mxu0
    %v2294 = vadd.f32 0.0, %v2293
    %2295 = vdwg.mxu0
    %2296 = vmatpush.msra.mxu0 0.0
    %2297 = vmatpush.msra.mxu0 0.0
    %2298 = vmatpush.msra.mxu0 0.0
    %2299 = vmatpush.msra.mxu0 0.0
    %2300 = vmatpush.msra.mxu0 0.0
    %2301 = vmatpush.msra.mxu0 0.0
    %2302 = vmatpush.msra.mxu0 0.0
    %2303 = vmatpush.msra.mxu0 0.0
    %2304 = vmatpush.msra.mxu0 0.0
    %2305 = vmatpush.msra.mxu0 0.0
    %2306 = vmatpush.msra.mxu0 0.0
    %2307 = vmatpush.msra.mxu0 0.0
    %2308 = vmatpush.msra.mxu0 0.0
    %2309 = vmatpush.msra.mxu0 0.0
    %2310 = vmatpush.msra.mxu0 0.0
    %2311 = vmatpush.msra.mxu0 %v2247
    %2312 = vmatmul.f32.gmra.mxu0 %v2254
    %v2313 = vpop.f32.mrf.mxu0
    %v2314 = vadd.f32 0.0, %v2313
    %2315 = vdwg.mxu0
    %2316 = vmatpush.msra.mxu0 0.0
    %2317 = vmatpush.msra.mxu0 0.0
    %2318 = vmatpush.msra.mxu0 0.0
    %2319 = vmatpush.msra.mxu0 0.0
    %2320 = vmatpush.msra.mxu0 0.0
    %2321 = vmatpush.msra.mxu0 0.0
    %2322 = vmatpush.msra.mxu0 0.0
    %2323 = vmatpush.msra.mxu0 0.0
    %2324 = vmatpush.msra.mxu0 0.0
    %2325 = vmatpush.msra.mxu0 0.0
    %2326 = vmatpush.msra.mxu0 0.0
    %2327 = vmatpush.msra.mxu0 0.0
    %2328 = vmatpush.msra.mxu0 0.0
    %2329 = vmatpush.msra.mxu0 0.0
    %2330 = vmatpush.msra.mxu0 0.0
    %2331 = vmatpush.msra.mxu0 %v2248
    %2332 = vmatmul.f32.gmra.mxu0 %v2254
    %v2333 = vpop.f32.mrf.mxu0
    %v2334 = vadd.f32 0.0, %v2333
    %2335 = vdwg.mxu0
    %v2336 = vadd.f32 %v2197, %v2274
    %v2337 = vadd.f32 %v2198, %v2294
    %v2338 = vadd.f32 %v2199, %v2314
    %v2339 = vadd.f32 %v2200, %v2334
    %v2340 = vld [vmem:[%s1074] sm:$0xf]
    %v2342 = vperm.slane %v2340, 0
    %v2343 = vperm.slane %v2340, 1
    %v2344 = vperm.slane %v2340, 2
    %v2345 = vperm.slane %v2340, 3
    %2346 = vrot.lane.b32.xlu0 %v2342, 16
    %v2347 = vpop.permute.xlu0 %2346
    %2348 = vrot.lane.b32.xlu0 %v2343, 16
    %v2349 = vpop.permute.xlu0 %2348
    %2350 = vrot.lane.b32.xlu0 %v2344, 16
    %v2351 = vpop.permute.xlu0 %2350
    %2352 = vrot.lane.b32.xlu0 %v2345, 16
    %v2353 = vpop.permute.xlu0 %2352
    %v2354 = vsel %vm116, %v2347, %v2349
    %v2355 = vsel %vm116, %v2349, %v2351
    %v2356 = vsel %vm116, %v2351, %v2353
    %v2362 = vmul.f32 %v2057, %v2347
    %v2363 = vmul.f32 %v2058, %v2354
    %v2364 = vmul.f32 %v2059, %v2355
    %v2365 = vmul.f32 %v2060, %v2356
    %v2366 = vmul.f32 %v2061, %v2353
    %s2367 = scalar_lea.vmem %s3, 56
    %v2368 = vld [vmem:[%s2367] sm:$0xff]
    %2374 = vrot.lane.b32.xlu0 %v2362, 112
    %v2375 = vpop.permute.xlu0 %2374
    %2376 = vrot.lane.b32.xlu0 %v2363, 112
    %v2377 = vpop.permute.xlu0 %2376
    %2378 = vrot.lane.b32.xlu0 %v2364, 112
    %v2379 = vpop.permute.xlu0 %2378
    %2380 = vrot.lane.b32.xlu0 %v2365, 112
    %v2381 = vpop.permute.xlu0 %2380
    %2382 = vrot.lane.b32.xlu0 %v2366, 112
    %v2383 = vpop.permute.xlu0 %2382
    %v2384 = vsel %vm81, %v2375, %v2377
    %v2385 = vsel %vm81, %v2377, %v2379
    %v2386 = vsel %vm81, %v2379, %v2381
    %v2387 = vsel %vm81, %v2381, %v2383
    %v2393 = vsel %vm1486, %v2368, 0
    %2395 = vmatpush.msra.mxu0 0.0
    %2396 = vmatpush.msra.mxu0 0.0
    %2397 = vmatpush.msra.mxu0 0.0
    %2398 = vmatpush.msra.mxu0 0.0
    %2399 = vmatpush.msra.mxu0 0.0
    %2400 = vmatpush.msra.mxu0 0.0
    %2401 = vmatpush.msra.mxu0 0.0
    %2402 = vmatpush.msra.mxu0 0.0
    %2403 = vmatpush.msra.mxu0 0.0
    %2404 = vmatpush.msra.mxu0 0.0
    %2405 = vmatpush.msra.mxu0 0.0
    %2406 = vmatpush.msra.mxu0 0.0
    %2407 = vmatpush.msra.mxu0 0.0
    %2408 = vmatpush.msra.mxu0 0.0
    %2409 = vmatpush.msra.mxu0 0.0
    %2410 = vmatpush.msra.mxu0 %v2384
    %2411 = vmatmul.f32.gmra.mxu0 %v2393
    %v2412 = vpop.f32.mrf.mxu0
    %v2413 = vadd.f32 0.0, %v2412
    %2414 = vdwg.mxu0
    %2415 = vmatpush.msra.mxu0 0.0
    %2416 = vmatpush.msra.mxu0 0.0
    %2417 = vmatpush.msra.mxu0 0.0
    %2418 = vmatpush.msra.mxu0 0.0
    %2419 = vmatpush.msra.mxu0 0.0
    %2420 = vmatpush.msra.mxu0 0.0
    %2421 = vmatpush.msra.mxu0 0.0
    %2422 = vmatpush.msra.mxu0 0.0
    %2423 = vmatpush.msra.mxu0 0.0
    %2424 = vmatpush.msra.mxu0 0.0
    %2425 = vmatpush.msra.mxu0 0.0
    %2426 = vmatpush.msra.mxu0 0.0
    %2427 = vmatpush.msra.mxu0 0.0
    %2428 = vmatpush.msra.mxu0 0.0
    %2429 = vmatpush.msra.mxu0 0.0
    %2430 = vmatpush.msra.mxu0 %v2385
    %2431 = vmatmul.f32.gmra.mxu0 %v2393
    %v2432 = vpop.f32.mrf.mxu0
    %v2433 = vadd.f32 0.0, %v2432
    %2434 = vdwg.mxu0
    %2435 = vmatpush.msra.mxu0 0.0
    %2436 = vmatpush.msra.mxu0 0.0
    %2437 = vmatpush.msra.mxu0 0.0
    %2438 = vmatpush.msra.mxu0 0.0
    %2439 = vmatpush.msra.mxu0 0.0
    %2440 = vmatpush.msra.mxu0 0.0
    %2441 = vmatpush.msra.mxu0 0.0
    %2442 = vmatpush.msra.mxu0 0.0
    %2443 = vmatpush.msra.mxu0 0.0
    %2444 = vmatpush.msra.mxu0 0.0
    %2445 = vmatpush.msra.mxu0 0.0
    %2446 = vmatpush.msra.mxu0 0.0
    %2447 = vmatpush.msra.mxu0 0.0
    %2448 = vmatpush.msra.mxu0 0.0
    %2449 = vmatpush.msra.mxu0 0.0
    %2450 = vmatpush.msra.mxu0 %v2386
    %2451 = vmatmul.f32.gmra.mxu0 %v2393
    %v2452 = vpop.f32.mrf.mxu0
    %v2453 = vadd.f32 0.0, %v2452
    %2454 = vdwg.mxu0
    %2455 = vmatpush.msra.mxu0 0.0
    %2456 = vmatpush.msra.mxu0 0.0
    %2457 = vmatpush.msra.mxu0 0.0
    %2458 = vmatpush.msra.mxu0 0.0
    %2459 = vmatpush.msra.mxu0 0.0
    %2460 = vmatpush.msra.mxu0 0.0
    %2461 = vmatpush.msra.mxu0 0.0
    %2462 = vmatpush.msra.mxu0 0.0
    %2463 = vmatpush.msra.mxu0 0.0
    %2464 = vmatpush.msra.mxu0 0.0
    %2465 = vmatpush.msra.mxu0 0.0
    %2466 = vmatpush.msra.mxu0 0.0
    %2467 = vmatpush.msra.mxu0 0.0
    %2468 = vmatpush.msra.mxu0 0.0
    %2469 = vmatpush.msra.mxu0 0.0
    %2470 = vmatpush.msra.mxu0 %v2387
    %2471 = vmatmul.f32.gmra.mxu0 %v2393
    %v2472 = vpop.f32.mrf.mxu0
    %v2473 = vadd.f32 0.0, %v2472
    %2474 = vdwg.mxu0
    %v2475 = vadd.f32 %v2336, %v2413
    %v2476 = vadd.f32 %v2337, %v2433
    %v2477 = vadd.f32 %v2338, %v2453
    %v2478 = vadd.f32 %v2339, %v2473
    %v2479 = vld [vmem:[%s1227] sm:$0xf]
    %v2481 = vperm.slane %v2479, 0
    %v2482 = vperm.slane %v2479, 1
    %v2483 = vperm.slane %v2479, 2
    %v2484 = vperm.slane %v2479, 3
    %2485 = vrot.lane.b32.xlu0 %v2481, 17
    %v2486 = vpop.permute.xlu0 %2485
    %2487 = vrot.lane.b32.xlu0 %v2482, 17
    %v2488 = vpop.permute.xlu0 %2487
    %2489 = vrot.lane.b32.xlu0 %v2483, 17
    %v2490 = vpop.permute.xlu0 %2489
    %2491 = vrot.lane.b32.xlu0 %v2484, 17
    %v2492 = vpop.permute.xlu0 %2491
    %v2493 = vsel %vm236, %v2486, %v2488
    %v2494 = vsel %vm236, %v2488, %v2490
    %v2495 = vsel %vm236, %v2490, %v2492
    %v2501 = vmul.f32 %v2057, %v2486
    %v2502 = vmul.f32 %v2058, %v2493
    %v2503 = vmul.f32 %v2059, %v2494
    %v2504 = vmul.f32 %v2060, %v2495
    %v2505 = vmul.f32 %v2061, %v2492
    %s2506 = scalar_lea.vmem %s3, 64
    %v2507 = vld [vmem:[%s2506] sm:$0xff]
    %2513 = vrot.lane.b32.xlu0 %v2501, 111
    %v2514 = vpop.permute.xlu0 %2513
    %2515 = vrot.lane.b32.xlu0 %v2502, 111
    %v2516 = vpop.permute.xlu0 %2515
    %2517 = vrot.lane.b32.xlu0 %v2503, 111
    %v2518 = vpop.permute.xlu0 %2517
    %2519 = vrot.lane.b32.xlu0 %v2504, 111
    %v2520 = vpop.permute.xlu0 %2519
    %2521 = vrot.lane.b32.xlu0 %v2505, 111
    %v2522 = vpop.permute.xlu0 %2521
    %v2523 = vsel %vm53, %v2514, %v2516
    %v2524 = vsel %vm53, %v2516, %v2518
    %v2525 = vsel %vm53, %v2518, %v2520
    %v2526 = vsel %vm53, %v2520, %v2522
    %v2532 = vsel %vm1486, %v2507, 0
    %2534 = vmatpush.msra.mxu0 0.0
    %2535 = vmatpush.msra.mxu0 0.0
    %2536 = vmatpush.msra.mxu0 0.0
    %2537 = vmatpush.msra.mxu0 0.0
    %2538 = vmatpush.msra.mxu0 0.0
    %2539 = vmatpush.msra.mxu0 0.0
    %2540 = vmatpush.msra.mxu0 0.0
    %2541 = vmatpush.msra.mxu0 0.0
    %2542 = vmatpush.msra.mxu0 0.0
    %2543 = vmatpush.msra.mxu0 0.0
    %2544 = vmatpush.msra.mxu0 0.0
    %2545 = vmatpush.msra.mxu0 0.0
    %2546 = vmatpush.msra.mxu0 0.0
    %2547 = vmatpush.msra.mxu0 0.0
    %2548 = vmatpush.msra.mxu0 0.0
    %2549 = vmatpush.msra.mxu0 %v2523
    %2550 = vmatmul.f32.gmra.mxu0 %v2532
    %v2551 = vpop.f32.mrf.mxu0
    %v2552 = vadd.f32 0.0, %v2551
    %2553 = vdwg.mxu0
    %2554 = vmatpush.msra.mxu0 0.0
    %2555 = vmatpush.msra.mxu0 0.0
    %2556 = vmatpush.msra.mxu0 0.0
    %2557 = vmatpush.msra.mxu0 0.0
    %2558 = vmatpush.msra.mxu0 0.0
    %2559 = vmatpush.msra.mxu0 0.0
    %2560 = vmatpush.msra.mxu0 0.0
    %2561 = vmatpush.msra.mxu0 0.0
    %2562 = vmatpush.msra.mxu0 0.0
    %2563 = vmatpush.msra.mxu0 0.0
    %2564 = vmatpush.msra.mxu0 0.0
    %2565 = vmatpush.msra.mxu0 0.0
    %2566 = vmatpush.msra.mxu0 0.0
    %2567 = vmatpush.msra.mxu0 0.0
    %2568 = vmatpush.msra.mxu0 0.0
    %2569 = vmatpush.msra.mxu0 %v2524
    %2570 = vmatmul.f32.gmra.mxu0 %v2532
    %v2571 = vpop.f32.mrf.mxu0
    %v2572 = vadd.f32 0.0, %v2571
    %2573 = vdwg.mxu0
    %2574 = vmatpush.msra.mxu0 0.0
    %2575 = vmatpush.msra.mxu0 0.0
    %2576 = vmatpush.msra.mxu0 0.0
    %2577 = vmatpush.msra.mxu0 0.0
    %2578 = vmatpush.msra.mxu0 0.0
    %2579 = vmatpush.msra.mxu0 0.0
    %2580 = vmatpush.msra.mxu0 0.0
    %2581 = vmatpush.msra.mxu0 0.0
    %2582 = vmatpush.msra.mxu0 0.0
    %2583 = vmatpush.msra.mxu0 0.0
    %2584 = vmatpush.msra.mxu0 0.0
    %2585 = vmatpush.msra.mxu0 0.0
    %2586 = vmatpush.msra.mxu0 0.0
    %2587 = vmatpush.msra.mxu0 0.0
    %2588 = vmatpush.msra.mxu0 0.0
    %2589 = vmatpush.msra.mxu0 %v2525
    %2590 = vmatmul.f32.gmra.mxu0 %v2532
    %v2591 = vpop.f32.mrf.mxu0
    %v2592 = vadd.f32 0.0, %v2591
    %2593 = vdwg.mxu0
    %2594 = vmatpush.msra.mxu0 0.0
    %2595 = vmatpush.msra.mxu0 0.0
    %2596 = vmatpush.msra.mxu0 0.0
    %2597 = vmatpush.msra.mxu0 0.0
    %2598 = vmatpush.msra.mxu0 0.0
    %2599 = vmatpush.msra.mxu0 0.0
    %2600 = vmatpush.msra.mxu0 0.0
    %2601 = vmatpush.msra.mxu0 0.0
    %2602 = vmatpush.msra.mxu0 0.0
    %2603 = vmatpush.msra.mxu0 0.0
    %2604 = vmatpush.msra.mxu0 0.0
    %2605 = vmatpush.msra.mxu0 0.0
    %2606 = vmatpush.msra.mxu0 0.0
    %2607 = vmatpush.msra.mxu0 0.0
    %2608 = vmatpush.msra.mxu0 0.0
    %2609 = vmatpush.msra.mxu0 %v2526
    %2610 = vmatmul.f32.gmra.mxu0 %v2532
    %v2611 = vpop.f32.mrf.mxu0
    %v2612 = vadd.f32 0.0, %v2611
    %2613 = vdwg.mxu0
    %v2614 = vadd.f32 %v2475, %v2552
    %v2615 = vadd.f32 %v2476, %v2572
    %v2616 = vadd.f32 %v2477, %v2592
    %v2617 = vadd.f32 %v2478, %v2612
    %v2618 = vld [vmem:[%s4] sm:$0xff]
    %2620 = vset.pattern.permute.xlu0 0
    %2621 = vperm.xlu0 %2620, %v2618
    %v2622 = vpop.permute.xlu0 %2621
    %v2624 = vadd.f32 %v2614, %v2622
    %v2625 = vadd.f32 %v2615, %v2622
    %v2626 = vadd.f32 %v2616, %v2622
    %v2627 = vadd.f32 %v2617, %v2622
    %v2628 = vmul.f32 %v2624, 0.2
    %v2629 = vmul.f32 %v2625, 0.2
    %v2630 = vmul.f32 %v2626, 0.2
    %v2631 = vmul.f32 %v2627, 0.2
    %v2632 = vmax.f32 %v2624, %v2628
    %v2633 = vmax.f32 %v2625, %v2629
    %v2634 = vmax.f32 %v2626, %v2630
    %v2635 = vmax.f32 %v2627, %v2631
    %v2636 = vld [vmem:[%s0 + $0x4] sm:$0xff]
    %v2637 = vld [vmem:[%s0 + $0xc] sm:$0xff]
    %v2638 = vld [vmem:[%s5] sm:$0xff]
    %2641 = vst [vmem:[#allocation1] ss:$2 sm:$0xff] %v2636
    %s2642 = scalar_lea.vmem [#allocation1], 16
    %2643 = vst [vmem:[%s2642] ss:$2 sm:$0xff] %v2637
    %v2644 = vld.sshfl [vmem:[#allocation1] sm:$0xff pattern:$0x75316420]
    %v2645 = vld.sshfl [vmem:[#allocation1 + $0x8] sm:$0xff pattern:$0x75316420]
    %v2646 = vld.sshfl [vmem:[#allocation1 + $0x10] sm:$0xff pattern:$0x75316420]
    %v2647 = vld.sshfl [vmem:[#allocation1 + $0x18] sm:$0xff pattern:$0x75316420]
    %v2649 = vsel %vm121, %v2638, 0
    %v2651 = vsel %vm44, %v2644, 0
    %v2653 = vsel %vm44, %v2645, 0
    %v2655 = vsel %vm44, %v2646, 0
    %v2657 = vsel %vm44, %v2647, 0
    %2659 = vmatpush.msra.mxu0 0.0
    %2660 = vmatpush.msra.mxu0 0.0
    %2661 = vmatpush.msra.mxu0 0.0
    %2662 = vmatpush.msra.mxu0 0.0
    %2663 = vmatpush.msra.mxu0 0.0
    %2664 = vmatpush.msra.mxu0 0.0
    %2665 = vmatpush.msra.mxu0 0.0
    %2666 = vmatpush.msra.mxu0 0.0
    %2667 = vmatpush.msra.mxu0 0.0
    %2668 = vmatpush.msra.mxu0 0.0
    %2669 = vmatpush.msra.mxu0 0.0
    %2670 = vmatpush.msra.mxu0 0.0
    %2671 = vmatpush.msra.mxu0 0.0
    %2672 = vmatpush.msra.mxu0 0.0
    %2673 = vmatpush.msra.mxu0 0.0
    %2674 = vmatpush.msra.mxu0 %v2651
    %2675 = vmatmul.f32.gmra.mxu0 %v2649
    %v2676 = vpop.f32.mrf.mxu0
    %v2677 = vadd.f32 0.0, %v2676
    %2678 = vdwg.mxu0
    %2679 = vmatpush.msra.mxu0 0.0
    %2680 = vmatpush.msra.mxu0 0.0
    %2681 = vmatpush.msra.mxu0 0.0
    %2682 = vmatpush.msra.mxu0 0.0
    %2683 = vmatpush.msra.mxu0 0.0
    %2684 = vmatpush.msra.mxu0 0.0
    %2685 = vmatpush.msra.mxu0 0.0
    %2686 = vmatpush.msra.mxu0 0.0
    %2687 = vmatpush.msra.mxu0 0.0
    %2688 = vmatpush.msra.mxu0 0.0
    %2689 = vmatpush.msra.mxu0 0.0
    %2690 = vmatpush.msra.mxu0 0.0
    %2691 = vmatpush.msra.mxu0 0.0
    %2692 = vmatpush.msra.mxu0 0.0
    %2693 = vmatpush.msra.mxu0 0.0
    %2694 = vmatpush.msra.mxu0 %v2653
    %2695 = vmatmul.f32.gmra.mxu0 %v2649
    %v2696 = vpop.f32.mrf.mxu0
    %v2697 = vadd.f32 0.0, %v2696
    %2698 = vdwg.mxu0
    %2699 = vmatpush.msra.mxu0 0.0
    %2700 = vmatpush.msra.mxu0 0.0
    %2701 = vmatpush.msra.mxu0 0.0
    %2702 = vmatpush.msra.mxu0 0.0
    %2703 = vmatpush.msra.mxu0 0.0
    %2704 = vmatpush.msra.mxu0 0.0
    %2705 = vmatpush.msra.mxu0 0.0
    %2706 = vmatpush.msra.mxu0 0.0
    %2707 = vmatpush.msra.mxu0 0.0
    %2708 = vmatpush.msra.mxu0 0.0
    %2709 = vmatpush.msra.mxu0 0.0
    %2710 = vmatpush.msra.mxu0 0.0
    %2711 = vmatpush.msra.mxu0 0.0
    %2712 = vmatpush.msra.mxu0 0.0
    %2713 = vmatpush.msra.mxu0 0.0
    %2714 = vmatpush.msra.mxu0 %v2655
    %2715 = vmatmul.f32.gmra.mxu0 %v2649
    %v2716 = vpop.f32.mrf.mxu0
    %v2717 = vadd.f32 0.0, %v2716
    %2718 = vdwg.mxu0
    %2719 = vmatpush.msra.mxu0 0.0
    %2720 = vmatpush.msra.mxu0 0.0
    %2721 = vmatpush.msra.mxu0 0.0
    %2722 = vmatpush.msra.mxu0 0.0
    %2723 = vmatpush.msra.mxu0 0.0
    %2724 = vmatpush.msra.mxu0 0.0
    %2725 = vmatpush.msra.mxu0 0.0
    %2726 = vmatpush.msra.mxu0 0.0
    %2727 = vmatpush.msra.mxu0 0.0
    %2728 = vmatpush.msra.mxu0 0.0
    %2729 = vmatpush.msra.mxu0 0.0
    %2730 = vmatpush.msra.mxu0 0.0
    %2731 = vmatpush.msra.mxu0 0.0
    %2732 = vmatpush.msra.mxu0 0.0
    %2733 = vmatpush.msra.mxu0 0.0
    %2734 = vmatpush.msra.mxu0 %v2657
    %2735 = vmatmul.f32.gmra.mxu0 %v2649
    %v2736 = vpop.f32.mrf.mxu0
    %v2737 = vadd.f32 0.0, %v2736
    %2738 = vdwg.mxu0
    %v2739 = vadd.f32 %v2632, %v2677
    %v2740 = vadd.f32 %v2633, %v2697
    %v2741 = vadd.f32 %v2634, %v2717
    %v2742 = vadd.f32 %v2635, %v2737
    %v2743 = vld [vmem:[%s6] sm:$0xff]
    %2745 = vset.pattern.permute.xlu0 0
    %2746 = vperm.xlu0 %2745, %v2743
    %v2747 = vpop.permute.xlu0 %2746
    %v2749 = vadd.f32 %v2739, %v2747
    %v2750 = vadd.f32 %v2740, %v2747
    %v2751 = vadd.f32 %v2741, %v2747
    %v2752 = vadd.f32 %v2742, %v2747
    %v2753 = vld [vmem:[%s8] sm:$0xff]
    %v2754 = vld [vmem:[%s8 + $0x8] sm:$0xff]
    %v2755 = vld [vmem:[%s8 + $0x10] sm:$0xff]
    %v2756 = vld [vmem:[%s8 + $0x18] sm:$0xff]
    %v2757 = vld [vmem:[%s8 + $0x20] sm:$0xff]
    %v2758 = vld [vmem:[%s8 + $0x28] sm:$0xff]
    %v2759 = vld [vmem:[%s8 + $0x30] sm:$0xff]
    %v2760 = vld [vmem:[%s8 + $0x38] sm:$0xff]
    %v2761 = vld [vmem:[%s8 + $0x40] sm:$0xff]
    %v2762 = vld [vmem:[%s8 + $0x48] sm:$0xff]
    %v2763 = vld [vmem:[%s8 + $0x50] sm:$0xff]
    %v2764 = vld [vmem:[%s8 + $0x58] sm:$0xff]
    %v2765 = vld [vmem:[%s8 + $0x60] sm:$0xff]
    %v2766 = vld [vmem:[%s8 + $0x68] sm:$0xff]
    %v2767 = vld [vmem:[%s8 + $0x70] sm:$0xff]
    %v2768 = vld [vmem:[%s8 + $0x78] sm:$0xff]
    %v2769 = vld [vmem:[%s8 + $0x80] sm:$0xff]
    %v2770 = vld [vmem:[%s8 + $0x88] sm:$0xff]
    %v2771 = vld [vmem:[%s8 + $0x90] sm:$0xff]
    %v2772 = vld [vmem:[%s8 + $0x98] sm:$0xff]
    %v2773 = vld [vmem:[%s8 + $0xa0] sm:$0xff]
    %v2774 = vld [vmem:[%s8 + $0xa8] sm:$0xff]
    %v2775 = vld [vmem:[%s8 + $0xb0] sm:$0xff]
    %v2776 = vld [vmem:[%s8 + $0xb8] sm:$0xff]
    %v2777 = vld [vmem:[%s8 + $0xc0] sm:$0xff]
    %v2778 = vld [vmem:[%s8 + $0xc8] sm:$0xff]
    %v2779 = vld [vmem:[%s8 + $0xd0] sm:$0xff]
    %v2780 = vld [vmem:[%s8 + $0xd8] sm:$0xff]
    %v2781 = vld [vmem:[%s8 + $0xe0] sm:$0xff]
    %v2782 = vld [vmem:[%s8 + $0xe8] sm:$0xff]
    %v2783 = vld [vmem:[%s8 + $0xf0] sm:$0xff]
    %v2784 = vld [vmem:[%s8 + $0xf8] sm:$0xff]
    %2785 = vmatpush.msra.mxu0 %v2768
    %2786 = vmatpush.msra.mxu0 %v2767
    %2787 = vmatpush.msra.mxu0 %v2766
    %2788 = vmatpush.msra.mxu0 %v2765
    %2789 = vmatpush.msra.mxu0 %v2764
    %2790 = vmatpush.msra.mxu0 %v2763
    %2791 = vmatpush.msra.mxu0 %v2762
    %2792 = vmatpush.msra.mxu0 %v2761
    %2793 = vmatpush.msra.mxu0 %v2760
    %2794 = vmatpush.msra.mxu0 %v2759
    %2795 = vmatpush.msra.mxu0 %v2758
    %2796 = vmatpush.msra.mxu0 %v2757
    %2797 = vmatpush.msra.mxu0 %v2756
    %2798 = vmatpush.msra.mxu0 %v2755
    %2799 = vmatpush.msra.mxu0 %v2754
    %2800 = vmatpush.msra.mxu0 %v2753
    %2801 = vmatmul.f32.gmra.mxu0 %v2749
    %v2802 = vpop.f32.mrf.mxu0
    %v2803 = vadd.f32 0.0, %v2802
    %2804 = vdwg.mxu0
    %2805 = vmatpush.msra.mxu0 %v2784
    %2806 = vmatpush.msra.mxu0 %v2783
    %2807 = vmatpush.msra.mxu0 %v2782
    %2808 = vmatpush.msra.mxu0 %v2781
    %2809 = vmatpush.msra.mxu0 %v2780
    %2810 = vmatpush.msra.mxu0 %v2779
    %2811 = vmatpush.msra.mxu0 %v2778
    %2812 = vmatpush.msra.mxu0 %v2777
    %2813 = vmatpush.msra.mxu0 %v2776
    %2814 = vmatpush.msra.mxu0 %v2775
    %2815 = vmatpush.msra.mxu0 %v2774
    %2816 = vmatpush.msra.mxu0 %v2773
    %2817 = vmatpush.msra.mxu0 %v2772
    %2818 = vmatpush.msra.mxu0 %v2771
    %2819 = vmatpush.msra.mxu0 %v2770
    %2820 = vmatpush.msra.mxu0 %v2769
    %2821 = vmatmul.f32.gmra.mxu0 %v2750
    %v2822 = vpop.f32.mrf.mxu0
    %v2823 = vadd.f32 %v2803, %v2822
    %2824 = vdwg.mxu0
    %v2825 = vmul.f32 %v2823, 0.70710677
    %vm2826 = vcmask 523264
    %2827 = vst.msk [vmem:[#allocation3] sm:$0xff] %vm2826, %v2825
    %v2828 = vld [vmem:[%s8] sm:$0xff]
    %v2829 = vld [vmem:[%s8 + $0x8] sm:$0xff]
    %v2830 = vld [vmem:[%s8 + $0x10] sm:$0xff]
    %v2831 = vld [vmem:[%s8 + $0x18] sm:$0xff]
    %v2832 = vld [vmem:[%s8 + $0x20] sm:$0xff]
    %v2833 = vld [vmem:[%s8 + $0x28] sm:$0xff]
    %v2834 = vld [vmem:[%s8 + $0x30] sm:$0xff]
    %v2835 = vld [vmem:[%s8 + $0x38] sm:$0xff]
    %v2836 = vld [vmem:[%s8 + $0x40] sm:$0xff]
    %v2837 = vld [vmem:[%s8 + $0x48] sm:$0xff]
    %v2838 = vld [vmem:[%s8 + $0x50] sm:$0xff]
    %v2839 = vld [vmem:[%s8 + $0x58] sm:$0xff]
    %v2840 = vld [vmem:[%s8 + $0x60] sm:$0xff]
    %v2841 = vld [vmem:[%s8 + $0x68] sm:$0xff]
    %v2842 = vld [vmem:[%s8 + $0x70] sm:$0xff]
    %v2843 = vld [vmem:[%s8 + $0x78] sm:$0xff]
    %v2844 = vld [vmem:[%s8 + $0x80] sm:$0xff]
    %v2845 = vld [vmem:[%s8 + $0x88] sm:$0xff]
    %v2846 = vld [vmem:[%s8 + $0x90] sm:$0xff]
    %v2847 = vld [vmem:[%s8 + $0x98] sm:$0xff]
    %v2848 = vld [vmem:[%s8 + $0xa0] sm:$0xff]
    %v2849 = vld [vmem:[%s8 + $0xa8] sm:$0xff]
    %v2850 = vld [vmem:[%s8 + $0xb0] sm:$0xff]
    %v2851 = vld [vmem:[%s8 + $0xb8] sm:$0xff]
    %v2852 = vld [vmem:[%s8 + $0xc0] sm:$0xff]
    %v2853 = vld [vmem:[%s8 + $0xc8] sm:$0xff]
    %v2854 = vld [vmem:[%s8 + $0xd0] sm:$0xff]
    %v2855 = vld [vmem:[%s8 + $0xd8] sm:$0xff]
    %v2856 = vld [vmem:[%s8 + $0xe0] sm:$0xff]
    %v2857 = vld [vmem:[%s8 + $0xe8] sm:$0xff]
    %v2858 = vld [vmem:[%s8 + $0xf0] sm:$0xff]
    %v2859 = vld [vmem:[%s8 + $0xf8] sm:$0xff]
    %2860 = vmatpush.msra.mxu0 %v2843
    %2861 = vmatpush.msra.mxu0 %v2842
    %2862 = vmatpush.msra.mxu0 %v2841
    %2863 = vmatpush.msra.mxu0 %v2840
    %2864 = vmatpush.msra.mxu0 %v2839
    %2865 = vmatpush.msra.mxu0 %v2838
    %2866 = vmatpush.msra.mxu0 %v2837
    %2867 = vmatpush.msra.mxu0 %v2836
    %2868 = vmatpush.msra.mxu0 %v2835
    %2869 = vmatpush.msra.mxu0 %v2834
    %2870 = vmatpush.msra.mxu0 %v2833
    %2871 = vmatpush.msra.mxu0 %v2832
    %2872 = vmatpush.msra.mxu0 %v2831
    %2873 = vmatpush.msra.mxu0 %v2830
    %2874 = vmatpush.msra.mxu0 %v2829
    %2875 = vmatpush.msra.mxu0 %v2828
    %2876 = vmatmul.f32.gmra.mxu0 %v2751
    %v2877 = vpop.f32.mrf.mxu0
    %v2878 = vadd.f32 0.0, %v2877
    %2879 = vdwg.mxu0
    %2880 = vmatpush.msra.mxu0 %v2859
    %2881 = vmatpush.msra.mxu0 %v2858
    %2882 = vmatpush.msra.mxu0 %v2857
    %2883 = vmatpush.msra.mxu0 %v2856
    %2884 = vmatpush.msra.mxu0 %v2855
    %2885 = vmatpush.msra.mxu0 %v2854
    %2886 = vmatpush.msra.mxu0 %v2853
    %2887 = vmatpush.msra.mxu0 %v2852
    %2888 = vmatpush.msra.mxu0 %v2851
    %2889 = vmatpush.msra.mxu0 %v2850
    %2890 = vmatpush.msra.mxu0 %v2849
    %2891 = vmatpush.msra.mxu0 %v2848
    %2892 = vmatpush.msra.mxu0 %v2847
    %2893 = vmatpush.msra.mxu0 %v2846
    %2894 = vmatpush.msra.mxu0 %v2845
    %2895 = vmatpush.msra.mxu0 %v2844
    %2896 = vmatmul.f32.gmra.mxu0 %v2752
    %v2897 = vpop.f32.mrf.mxu0
    %v2898 = vadd.f32 %v2878, %v2897
    %2899 = vdwg.mxu0
    %v2900 = vmul.f32 %v2898, 0.70710677
    %s2901 = scalar_lea.vmem [#allocation3], 8
    %2902 = vst.msk [vmem:[%s2901] sm:$0xff] %vm2826, %v2900
    // Predicated region
    $region38: #{tpu_custom_call.1} parent=1 // pred_check
      _
    $region39: #{tpu_custom_call.1} parent=1 // pred_check_branch
      %2904 = sbr.rel (0) target = $region41
    $region40: #{tpu_custom_call.1} parent=1 // pred_region
      %2906 = vsyncadd [#allocation4], 0
      %s2907 = sshll.u32 [#allocation3], 4
      %s2908 = int_to_ptr.vmem [resolvable:$true] %s2907
      %s2909 = sshll.u32 %s9, 4
      %s2910 = int_to_ptr.hbm [resolvable:$true] %s2909
      %2915 = dma.vmem_to_hbm [thread:$0]  %s2908, 256, %s2910, [#allocation4], 128, 128, 8
    $region41: #{tpu_custom_call.1} parent=1 // pred_fallthru
      _
    // Predicated region
    $region42: #{tpu_custom_call.1} parent=1 // pred_check
      _
    $region43: #{tpu_custom_call.1} parent=1 // pred_check_branch
      %2917 = sbr.rel (0) target = $region45
    $region44: #{tpu_custom_call.1} parent=1 // pred_region
      %2919 = dma.done [#allocation4], 256
    $region45: #{tpu_custom_call.1} parent=1 // pred_fallthru
      _
    %2920 = vsyncpa [#allocation4], 1

</llo_original>
